<compile_context>
chip_gen: v7x
topology: tpu7x:2x2x1
jax: 0.10.0
libtpu: 0.0.40
codegen_flags: <defaults>
</compile_context>

<pallas_src>
import numpy as np
import jax
import jax.numpy as jnp
from jax.experimental import pallas as pl
from jax.experimental.pallas import tpu as pltpu


def _round_up(x, m):
    return ((x + m - 1) // m) * m


# ---------------------------------------------------------------------------
# Fused decode-step kernel. Grid axis 0 walks vocab tiles ("arbitrary": it carries
# the GRU prologue results and the running max / sum-exp of the online logsumexp).
# ---------------------------------------------------------------------------
def _decoder_step_kernel(ids_ref,                  # SMEM (Bp,) int32  (scalar prefetch)
                         emb_ref,                  # ANY/HBM (V, H) f32
                         h0_ref,                   # VMEM (Bp, H) f32   resident
                         wi_ref, wh_ref,           # VMEM (H, 3H) bf16  resident (r,z,n)
                         bi_ref, bh_ref,           # VMEM (1, 3H) f32   resident
                         w_ref,                    # VMEM (H, TV) bf16  V-tile stream
                         b_ref,                    # VMEM (1, TV) f32   V-tile stream
                         logits_ref,               # out  (Bp, TV) f32  V-tile (lane-dense)
                         lse_ref,                  # out  (Bp, 1) f32   resident
                         hnew_ref,                 # out  (Bp, H) f32   resident
                         x_buf,                    # scratch VMEM (Bp, H) f32
                         h_bf16,                   # scratch VMEM (Bp, H) bf16
                         m_sc, l_sc,               # scratch VMEM (Bp, 1) f32
                         row_sems):                # scratch DMA sems (Bp,)
    j = pl.program_id(0)
    H = h0_ref.shape[-1]
    Bp = h0_ref.shape[0]
    cdt = w_ref.dtype                              # weight/compute dtype (bf16)

    @pl.when(j == 0)
    def _prologue():
        # --- fused embedding gather: DMA the B token rows from the HBM table ---
        copies = [pltpu.make_async_copy(emb_ref.at[ids_ref[b]], x_buf.at[b],
                                        row_sems.at[b]) for b in range(Bp)]
        for c in copies:
            c.start()
        for c in copies:
            c.wait()

        # --- fused GRU cell (PyTorch gate order r, z, n; f32 gate math) ---
        # NOTE: H must be a multiple of 128 so the gate slices land on lane-tile
        # boundaries (asserted in prepare_params).
        x = jnp.maximum(x_buf[...], 0.0).astype(cdt)          # F.relu on embedding
        h = h0_ref[...]
        gi = jnp.dot(x, wi_ref[...], preferred_element_type=jnp.float32) + bi_ref[...]
        gh = jnp.dot(h.astype(cdt), wh_ref[...],
                     preferred_element_type=jnp.float32) + bh_ref[...]
        r = jax.nn.sigmoid(gi[:, :H] + gh[:, :H])
        z = jax.nn.sigmoid(gi[:, H:2 * H] + gh[:, H:2 * H])
        n = jnp.tanh(gi[:, 2 * H:] + r * gh[:, 2 * H:])
        h_new = (1.0 - z) * n + z * h
        hnew_ref[...] = h_new
        h_bf16[...] = h_new.astype(cdt)                       # hoisted cast (reused per tile)

        # Online-logsumexp state. -1e30 sentinel (not -inf): safe because every V-tile
        # has >= 1 real column (padding < v_tile, asserted) and real logits are O(10).
        m_sc[...] = jnp.full(m_sc.shape, -1e30, m_sc.dtype)
        l_sc[...] = jnp.zeros(l_sc.shape, l_sc.dtype)

    # --- streamed vocab projection tile + online logsumexp update ---
    logits = jnp.dot(h_bf16[...], w_ref[...], preferred_element_type=jnp.float32) + b_ref[...]
    logits_ref[...] = logits

    m_prev = m_sc[...]
    m_new = jnp.maximum(m_prev, jnp.max(logits, axis=-1, keepdims=True))
    l_sc[...] = l_sc[...] * jnp.exp(m_prev - m_new) + jnp.sum(
        jnp.exp(logits - m_new), axis=-1, keepdims=True)
    m_sc[...] = m_new

    @pl.when(j == pl.num_programs(0) - 1)
    def _epilogue():
        lse_ref[...] = m_sc[...] + jnp.log(l_sc[...])


# ---------------------------------------------------------------------------
# One-time parameter re-layout (hoisted out of the per-token decode step).
# ---------------------------------------------------------------------------
def prepare_params(raw, *, v_tile=2048, param_dtype=jnp.bfloat16):
    """raw uses PyTorch layouts: embedding [V,H], w_ih/w_hh [3H,H] (r,z,n),
    b_ih/b_hh [3H], w_out [V,H], b_out [V]."""
    H = raw["hidden_size"]
    V = raw["output_size"]
    assert H % 128 == 0, "hidden_size must be a multiple of 128 (lane-aligned gate slices)"
    assert v_tile % 128 == 0, "v_tile must be a multiple of the 128-lane width"
    v_tile = min(v_tile, _round_up(V, 128))
    Vp = _round_up(V, v_tile)
    # Every V-tile must contain >= 1 real column for the -1e30 logsumexp sentinel.
    assert Vp - V < v_tile

    wi_cat = raw["w_ih"].T.astype(param_dtype)             # [H, 3H]
    wh_cat = raw["w_hh"].T.astype(param_dtype)             # [H, 3H]
    bi_cat = raw["b_ih"].reshape(1, 3 * H).astype(jnp.float32)
    bh_cat = raw["b_hh"].reshape(1, 3 * H).astype(jnp.float32)

    w_out = jnp.pad(raw["w_out"].T.astype(param_dtype), ((0, 0), (0, Vp - V)))   # [H, Vp]
    # Padded vocab columns get a hugely negative bias so they never win the max and
    # their exp underflows to 0 in the online logsumexp.
    b_out = jnp.pad(raw["b_out"].astype(jnp.float32), (0, Vp - V),
                    constant_values=-1e30).reshape(1, Vp)

    return {
        "hidden_size": H, "output_size": V,
        "padded_output_size": Vp, "v_tile": v_tile,
        # Embedding kept f32 (word-aligned row DMA); only B rows are read per step.
        "embedding": raw["embedding"].astype(jnp.float32),
        "wi_cat": wi_cat, "wh_cat": wh_cat, "bi_cat": bi_cat, "bh_cat": bh_cat,
        "w_out": w_out, "b_out": b_out,
    }


# ---------------------------------------------------------------------------
# Forward: one decode step.  token_ids int32 [1, B]; hidden f32 [1, B, H].
# Returns (log_probs [B, V], new_hidden [1, B, H], None) like DecoderRNN.forward.
# ---------------------------------------------------------------------------
def decoder_rnn_forward(prep, token_ids, hidden):
    B = token_ids.shape[1]
    H = prep["hidden_size"]
    V = prep["output_size"]
    Vp = prep["padded_output_size"]
    TV = prep["v_tile"]
    n_vt = Vp // TV
    Bp = _round_up(max(B, 8), 8)                           # sublane-dense batch

    ids = token_ids[0].astype(jnp.int32)
    h0 = hidden[0].astype(jnp.float32)
    if Bp != B:
        ids = jnp.pad(ids, (0, Bp - B))                    # padded rows gather row 0 (discarded)
        h0 = jnp.pad(h0, ((0, Bp - B), (0, 0)))

    cdt = prep["wi_cat"].dtype

    logits, lse, h_new = pl.pallas_call(
        _decoder_step_kernel,
        out_shape=(jax.ShapeDtypeStruct((Bp, Vp), jnp.float32),   # raw logits
                   jax.ShapeDtypeStruct((Bp, 1), jnp.float32),    # logsumexp
                   jax.ShapeDtypeStruct((Bp, H), jnp.float32)),   # h_new
        grid_spec=pltpu.PrefetchScalarGridSpec(
            num_scalar_prefetch=1,                                # token ids -> SMEM
            grid=(n_vt,),
            in_specs=[
                pl.BlockSpec(memory_space=pl.ANY),                # embedding table (HBM)
                pl.BlockSpec((Bp, H), lambda j, ids: (0, 0)),     # h0 resident
                pl.BlockSpec((H, 3 * H), lambda j, ids: (0, 0)),  # wi_cat resident
                pl.BlockSpec((H, 3 * H), lambda j, ids: (0, 0)),  # wh_cat resident
                pl.BlockSpec((1, 3 * H), lambda j, ids: (0, 0)),  # bi
                pl.BlockSpec((1, 3 * H), lambda j, ids: (0, 0)),  # bh
                # TODO(synk): if DMA-exposed, add pipeline_mode=pl.Buffered(3) on w_out.
                pl.BlockSpec((H, TV), lambda j, ids: (0, j)),     # w_out V-tile stream
                pl.BlockSpec((1, TV), lambda j, ids: (0, j)),     # b_out V-tile
            ],
            out_specs=[
                pl.BlockSpec((Bp, TV), lambda j, ids: (0, j)),    # logits (lane-dense tiles)
                pl.BlockSpec((Bp, 1), lambda j, ids: (0, 0)),     # lse resident
                pl.BlockSpec((Bp, H), lambda j, ids: (0, 0)),     # h_new resident
            ],
            scratch_shapes=[
                pltpu.VMEM((Bp, H), jnp.float32),                 # gathered embedding rows
                pltpu.VMEM((Bp, H), cdt),                         # bf16 h_new (hoisted cast)
                pltpu.VMEM((Bp, 1), jnp.float32),                 # running max
                pltpu.VMEM((Bp, 1), jnp.float32),                 # running sum-exp
                pltpu.SemaphoreType.DMA((Bp,)),                   # per-row gather sems
            ]),
        compiler_params=pltpu.CompilerParams(
            dimension_semantics=("arbitrary",)),                  # V axis carries state
    )(ids, prep["embedding"], h0, prep["wi_cat"], prep["wh_cat"],
      prep["bi_cat"], prep["bh_cat"], prep["w_out"], prep["b_out"])

    # Log-softmax normalization: single XLA-fused broadcast subtract over the logits
    # (lse only known after the last tile; re-reading f32 logits once is far cheaper
    # than re-streaming the bf16 weights).
    logp = (logits - lse)[:B, :V]
    return logp, h_new[:B][None, :, :], None


# ---------------------------------------------------------------------------
# PyTorch-layout parameter init and pure-JAX reference (same bf16 casts).
# ---------------------------------------------------------------------------
def init_raw_params(key, hidden_size, output_size):
    ks = jax.random.split(key, 6)
    s = 1.0 / np.sqrt(hidden_size)
    return {
        "hidden_size": hidden_size,
        "output_size": output_size,
        "embedding": jax.random.normal(ks[0], (output_size, hidden_size), jnp.float32),
        "w_ih": jax.random.uniform(ks[1], (3 * hidden_size, hidden_size), jnp.float32, -s, s),
        "w_hh": jax.random.uniform(ks[2], (3 * hidden_size, hidden_size), jnp.float32, -s, s),
        "b_ih": jax.random.uniform(ks[3], (3 * hidden_size,), jnp.float32, -s, s),
        "b_hh": jax.random.uniform(ks[4], (3 * hidden_size,), jnp.float32, -s, s),
        "w_out": jax.random.uniform(ks[5], (output_size, hidden_size), jnp.float32, -s, s),
        "b_out": jnp.zeros((output_size,), jnp.float32),
    }


def _reference_forward(raw, token_ids, hidden, param_dtype=jnp.bfloat16):
    H = raw["hidden_size"]
    x = jnp.maximum(jnp.take(raw["embedding"], token_ids[0], axis=0), 0.0).astype(param_dtype)
    h = hidden[0].astype(jnp.float32)
    gi = jnp.dot(x, raw["w_ih"].astype(param_dtype).T,
                 preferred_element_type=jnp.float32) + raw["b_ih"]
    gh = jnp.dot(h.astype(param_dtype), raw["w_hh"].astype(param_dtype).T,
                 preferred_element_type=jnp.float32) + raw["b_hh"]
    r = jax.nn.sigmoid(gi[:, :H] + gh[:, :H])
    z = jax.nn.sigmoid(gi[:, H:2 * H] + gh[:, H:2 * H])
    n = jnp.tanh(gi[:, 2 * H:] + r * gh[:, 2 * H:])
    h_new = (1.0 - z) * n + z * h
    logits = jnp.dot(h_new.astype(param_dtype), raw["w_out"].astype(param_dtype).T,
                     preferred_element_type=jnp.float32) + raw["b_out"]
    return jax.nn.log_softmax(logits, axis=1), h_new[None]


if __name__ == "__main__":
    hidden_size = 128     # lane-width multiple (required for the gate slices)
    output_size = 4096    # vocab; two 2048-wide V tiles exercise the online logsumexp
    batch = 5             # non-multiple of 8 exercises the sublane batch padding

    key = jax.random.PRNGKey(0)
    kp, kt, kh = jax.random.split(key, 3)
    raw = init_raw_params(kp, hidden_size, output_size)
    prep = prepare_params(raw)                  # done ONCE; default v_tile=2048 per review

    token_ids = jax.random.randint(kt, (1, batch), 0, output_size, dtype=jnp.int32)
    hidden = jax.random.normal(kh, (1, batch, hidden_size), jnp.float32)

    @jax.jit
    def decode_step(tok, hid):
        return decoder_rnn_forward(prep, tok, hid)

    logp, h_new, _ = decode_step(token_ids, hidden)
    jax.block_until_ready((logp, h_new))

    ref_logp, ref_h = _reference_forward(raw, token_ids, hidden)
    np.testing.assert_allclose(np.asarray(logp), np.asarray(ref_logp), atol=5e-3, rtol=5e-3)
    np.testing.assert_allclose(np.asarray(h_new), np.asarray(ref_h), atol=5e-3, rtol=5e-3)

    print("KERNEL_OK")
</pallas_src>

<mosaic_0001>
module attributes {stable_mosaic.version = 11 : i64} {
  func.func @_decoder_step_kernel(%arg0: i32, %arg1: memref<8xi32, #tpu.memory_space<smem>>, %arg2: memref<4096x128xf32, #tpu.memory_space<any>>, %arg3: memref<8x128xf32, #tpu.memory_space<vmem>>, %arg4: memref<128x384xbf16, #tpu.memory_space<vmem>>, %arg5: memref<128x384xbf16, #tpu.memory_space<vmem>>, %arg6: memref<1x384xf32, #tpu.memory_space<vmem>>, %arg7: memref<1x384xf32, #tpu.memory_space<vmem>>, %arg8: memref<128x2048xbf16, #tpu.memory_space<vmem>>, %arg9: memref<1x2048xf32, #tpu.memory_space<vmem>>, %arg10: memref<8x2048xf32, #tpu.memory_space<vmem>>, %arg11: memref<8x1xf32, #tpu.memory_space<vmem>>, %arg12: memref<8x128xf32, #tpu.memory_space<vmem>>, %arg13: memref<8x128xf32, #tpu.memory_space<vmem>>, %arg14: memref<8x128xbf16, #tpu.memory_space<vmem>>, %arg15: memref<8x1xf32, #tpu.memory_space<vmem>>, %arg16: memref<8x1xf32, #tpu.memory_space<vmem>>, %arg17: memref<8x!tpu.dma_semaphore, #tpu.memory_space<semaphore_mem>>) attributes {dimension_semantics = [#tpu.dimension_semantics<arbitrary>], iteration_bounds = array<i64: 2>, scalar_prefetch = 1 : i64, scratch_operands = 5 : i64, tpu.core_type = #tpu.core_type<tc>, window_params = [{}, {pipeline_mode = #tpu.pipeline_mode<synchronous>, transform_indices = @transform_1, window_bounds = array<i64: 8, 128>}, {pipeline_mode = #tpu.pipeline_mode<synchronous>, transform_indices = @transform_2, window_bounds = array<i64: 128, 384>}, {pipeline_mode = #tpu.pipeline_mode<synchronous>, transform_indices = @transform_3, window_bounds = array<i64: 128, 384>}, {pipeline_mode = #tpu.pipeline_mode<synchronous>, transform_indices = @transform_4, window_bounds = array<i64: 1, 384>}, {pipeline_mode = #tpu.pipeline_mode<synchronous>, transform_indices = @transform_5, window_bounds = array<i64: 1, 384>}, {transform_indices = @transform_6, window_bounds = array<i64: 128, 2048>}, {transform_indices = @transform_7, window_bounds = array<i64: 1, 2048>}, {transform_indices = @transform_8, window_bounds = array<i64: 8, 2048>}, {pipeline_mode = #tpu.pipeline_mode<synchronous>, transform_indices = @transform_9, window_bounds = array<i64: 8, 1>}, {pipeline_mode = #tpu.pipeline_mode<synchronous>, transform_indices = @transform_10, window_bounds = array<i64: 8, 128>}]} {
    %c0_i32 = arith.constant 0 : i32
    %0 = arith.cmpi eq, %arg0, %c0_i32 : i32
    %1 = arith.extui %0 : i1 to i32
    %c0_i32_0 = arith.constant 0 : i32
    %2 = arith.cmpi ne, %1, %c0_i32_0 : i32
    scf.if %2 {
      %c0_19 = arith.constant 0 : index
      %29 = memref.load %arg1[%c0_19] : memref<8xi32, #tpu.memory_space<smem>>
      %c1 = arith.constant 1 : index
      %30 = memref.load %arg1[%c1] : memref<8xi32, #tpu.memory_space<smem>>
      %c2 = arith.constant 2 : index
      %31 = memref.load %arg1[%c2] : memref<8xi32, #tpu.memory_space<smem>>
      %c3 = arith.constant 3 : index
      %32 = memref.load %arg1[%c3] : memref<8xi32, #tpu.memory_space<smem>>
      %c4 = arith.constant 4 : index
      %33 = memref.load %arg1[%c4] : memref<8xi32, #tpu.memory_space<smem>>
      %c5 = arith.constant 5 : index
      %34 = memref.load %arg1[%c5] : memref<8xi32, #tpu.memory_space<smem>>
      %c6 = arith.constant 6 : index
      %35 = memref.load %arg1[%c6] : memref<8xi32, #tpu.memory_space<smem>>
      %c7 = arith.constant 7 : index
      %36 = memref.load %arg1[%c7] : memref<8xi32, #tpu.memory_space<smem>>
      %c0_i32_20 = arith.constant 0 : i32
      %c0_i32_21 = arith.constant 0 : i32
      %c0_i32_22 = arith.constant 0 : i32
      %37 = tpu.memref_slice %arg2[%29, %c0_i32_22] : memref<4096x128xf32, #tpu.memory_space<any>> -> memref<1x128xf32, #tpu.memory_space<any>>
      %38 = tpu.memref_squeeze %37 : memref<1x128xf32, #tpu.memory_space<any>> -> memref<128xf32, #tpu.memory_space<any>>
      %c0_i32_23 = arith.constant 0 : i32
      %39 = tpu.memref_slice %arg13[%c0_i32_20, %c0_i32_23] : memref<8x128xf32, #tpu.memory_space<vmem>> -> memref<1x128xf32, #tpu.memory_space<vmem>>
      %40 = tpu.memref_squeeze %39 : memref<1x128xf32, #tpu.memory_space<vmem>> -> memref<128xf32, #tpu.memory_space<vmem>>
      %41 = tpu.memref_slice %arg17[%c0_i32_21] : memref<8x!tpu.dma_semaphore, #tpu.memory_space<semaphore_mem>> -> memref<1x!tpu.dma_semaphore, #tpu.memory_space<semaphore_mem>>
      %42 = tpu.memref_squeeze %41 : memref<1x!tpu.dma_semaphore, #tpu.memory_space<semaphore_mem>> -> memref<!tpu.dma_semaphore, #tpu.memory_space<semaphore_mem>>
      tpu.enqueue_dma source(%38 : memref<128xf32, #tpu.memory_space<any>>) target(%40 : memref<128xf32, #tpu.memory_space<vmem>>) target_semaphore(%42 : memref<!tpu.dma_semaphore, #tpu.memory_space<semaphore_mem>>)
      %c1_i32_24 = arith.constant 1 : i32
      %c1_i32_25 = arith.constant 1 : i32
      %c0_i32_26 = arith.constant 0 : i32
      %43 = tpu.memref_slice %arg2[%30, %c0_i32_26] : memref<4096x128xf32, #tpu.memory_space<any>> -> memref<1x128xf32, #tpu.memory_space<any>>
      %44 = tpu.memref_squeeze %43 : memref<1x128xf32, #tpu.memory_space<any>> -> memref<128xf32, #tpu.memory_space<any>>
      %c0_i32_27 = arith.constant 0 : i32
      %45 = tpu.memref_slice %arg13[%c1_i32_24, %c0_i32_27] : memref<8x128xf32, #tpu.memory_space<vmem>> -> memref<1x128xf32, #tpu.memory_space<vmem>>
      %46 = tpu.memref_squeeze %45 : memref<1x128xf32, #tpu.memory_space<vmem>> -> memref<128xf32, #tpu.memory_space<vmem>>
      %47 = tpu.memref_slice %arg17[%c1_i32_25] : memref<8x!tpu.dma_semaphore, #tpu.memory_space<semaphore_mem>> -> memref<1x!tpu.dma_semaphore, #tpu.memory_space<semaphore_mem>>
      %48 = tpu.memref_squeeze %47 : memref<1x!tpu.dma_semaphore, #tpu.memory_space<semaphore_mem>> -> memref<!tpu.dma_semaphore, #tpu.memory_space<semaphore_mem>>
      tpu.enqueue_dma source(%44 : memref<128xf32, #tpu.memory_space<any>>) target(%46 : memref<128xf32, #tpu.memory_space<vmem>>) target_semaphore(%48 : memref<!tpu.dma_semaphore, #tpu.memory_space<semaphore_mem>>)
      %c2_i32 = arith.constant 2 : i32
      %c2_i32_28 = arith.constant 2 : i32
      %c0_i32_29 = arith.constant 0 : i32
      %49 = tpu.memref_slice %arg2[%31, %c0_i32_29] : memref<4096x128xf32, #tpu.memory_space<any>> -> memref<1x128xf32, #tpu.memory_space<any>>
      %50 = tpu.memref_squeeze %49 : memref<1x128xf32, #tpu.memory_space<any>> -> memref<128xf32, #tpu.memory_space<any>>
      %c0_i32_30 = arith.constant 0 : i32
      %51 = tpu.memref_slice %arg13[%c2_i32, %c0_i32_30] : memref<8x128xf32, #tpu.memory_space<vmem>> -> memref<1x128xf32, #tpu.memory_space<vmem>>
      %52 = tpu.memref_squeeze %51 : memref<1x128xf32, #tpu.memory_space<vmem>> -> memref<128xf32, #tpu.memory_space<vmem>>
      %53 = tpu.memref_slice %arg17[%c2_i32_28] : memref<8x!tpu.dma_semaphore, #tpu.memory_space<semaphore_mem>> -> memref<1x!tpu.dma_semaphore, #tpu.memory_space<semaphore_mem>>
      %54 = tpu.memref_squeeze %53 : memref<1x!tpu.dma_semaphore, #tpu.memory_space<semaphore_mem>> -> memref<!tpu.dma_semaphore, #tpu.memory_space<semaphore_mem>>
      tpu.enqueue_dma source(%50 : memref<128xf32, #tpu.memory_space<any>>) target(%52 : memref<128xf32, #tpu.memory_space<vmem>>) target_semaphore(%54 : memref<!tpu.dma_semaphore, #tpu.memory_space<semaphore_mem>>)
      %c3_i32 = arith.constant 3 : i32
      %c3_i32_31 = arith.constant 3 : i32
      %c0_i32_32 = arith.constant 0 : i32
      %55 = tpu.memref_slice %arg2[%32, %c0_i32_32] : memref<4096x128xf32, #tpu.memory_space<any>> -> memref<1x128xf32, #tpu.memory_space<any>>
      %56 = tpu.memref_squeeze %55 : memref<1x128xf32, #tpu.memory_space<any>> -> memref<128xf32, #tpu.memory_space<any>>
      %c0_i32_33 = arith.constant 0 : i32
      %57 = tpu.memref_slice %arg13[%c3_i32, %c0_i32_33] : memref<8x128xf32, #tpu.memory_space<vmem>> -> memref<1x128xf32, #tpu.memory_space<vmem>>
      %58 = tpu.memref_squeeze %57 : memref<1x128xf32, #tpu.memory_space<vmem>> -> memref<128xf32, #tpu.memory_space<vmem>>
      %59 = tpu.memref_slice %arg17[%c3_i32_31] : memref<8x!tpu.dma_semaphore, #tpu.memory_space<semaphore_mem>> -> memref<1x!tpu.dma_semaphore, #tpu.memory_space<semaphore_mem>>
      %60 = tpu.memref_squeeze %59 : memref<1x!tpu.dma_semaphore, #tpu.memory_space<semaphore_mem>> -> memref<!tpu.dma_semaphore, #tpu.memory_space<semaphore_mem>>
      tpu.enqueue_dma source(%56 : memref<128xf32, #tpu.memory_space<any>>) target(%58 : memref<128xf32, #tpu.memory_space<vmem>>) target_semaphore(%60 : memref<!tpu.dma_semaphore, #tpu.memory_space<semaphore_mem>>)
      %c4_i32 = arith.constant 4 : i32
      %c4_i32_34 = arith.constant 4 : i32
      %c0_i32_35 = arith.constant 0 : i32
      %61 = tpu.memref_slice %arg2[%33, %c0_i32_35] : memref<4096x128xf32, #tpu.memory_space<any>> -> memref<1x128xf32, #tpu.memory_space<any>>
      %62 = tpu.memref_squeeze %61 : memref<1x128xf32, #tpu.memory_space<any>> -> memref<128xf32, #tpu.memory_space<any>>
      %c0_i32_36 = arith.constant 0 : i32
      %63 = tpu.memref_slice %arg13[%c4_i32, %c0_i32_36] : memref<8x128xf32, #tpu.memory_space<vmem>> -> memref<1x128xf32, #tpu.memory_space<vmem>>
      %64 = tpu.memref_squeeze %63 : memref<1x128xf32, #tpu.memory_space<vmem>> -> memref<128xf32, #tpu.memory_space<vmem>>
      %65 = tpu.memref_slice %arg17[%c4_i32_34] : memref<8x!tpu.dma_semaphore, #tpu.memory_space<semaphore_mem>> -> memref<1x!tpu.dma_semaphore, #tpu.memory_space<semaphore_mem>>
      %66 = tpu.memref_squeeze %65 : memref<1x!tpu.dma_semaphore, #tpu.memory_space<semaphore_mem>> -> memref<!tpu.dma_semaphore, #tpu.memory_space<semaphore_mem>>
      tpu.enqueue_dma source(%62 : memref<128xf32, #tpu.memory_space<any>>) target(%64 : memref<128xf32, #tpu.memory_space<vmem>>) target_semaphore(%66 : memref<!tpu.dma_semaphore, #tpu.memory_space<semaphore_mem>>)
      %c5_i32 = arith.constant 5 : i32
      %c5_i32_37 = arith.constant 5 : i32
      %c0_i32_38 = arith.constant 0 : i32
      %67 = tpu.memref_slice %arg2[%34, %c0_i32_38] : memref<4096x128xf32, #tpu.memory_space<any>> -> memref<1x128xf32, #tpu.memory_space<any>>
      %68 = tpu.memref_squeeze %67 : memref<1x128xf32, #tpu.memory_space<any>> -> memref<128xf32, #tpu.memory_space<any>>
      %c0_i32_39 = arith.constant 0 : i32
      %69 = tpu.memref_slice %arg13[%c5_i32, %c0_i32_39] : memref<8x128xf32, #tpu.memory_space<vmem>> -> memref<1x128xf32, #tpu.memory_space<vmem>>
      %70 = tpu.memref_squeeze %69 : memref<1x128xf32, #tpu.memory_space<vmem>> -> memref<128xf32, #tpu.memory_space<vmem>>
      %71 = tpu.memref_slice %arg17[%c5_i32_37] : memref<8x!tpu.dma_semaphore, #tpu.memory_space<semaphore_mem>> -> memref<1x!tpu.dma_semaphore, #tpu.memory_space<semaphore_mem>>
      %72 = tpu.memref_squeeze %71 : memref<1x!tpu.dma_semaphore, #tpu.memory_space<semaphore_mem>> -> memref<!tpu.dma_semaphore, #tpu.memory_space<semaphore_mem>>
      tpu.enqueue_dma source(%68 : memref<128xf32, #tpu.memory_space<any>>) target(%70 : memref<128xf32, #tpu.memory_space<vmem>>) target_semaphore(%72 : memref<!tpu.dma_semaphore, #tpu.memory_space<semaphore_mem>>)
      %c6_i32 = arith.constant 6 : i32
      %c6_i32_40 = arith.constant 6 : i32
      %c0_i32_41 = arith.constant 0 : i32
      %73 = tpu.memref_slice %arg2[%35, %c0_i32_41] : memref<4096x128xf32, #tpu.memory_space<any>> -> memref<1x128xf32, #tpu.memory_space<any>>
      %74 = tpu.memref_squeeze %73 : memref<1x128xf32, #tpu.memory_space<any>> -> memref<128xf32, #tpu.memory_space<any>>
      %c0_i32_42 = arith.constant 0 : i32
      %75 = tpu.memref_slice %arg13[%c6_i32, %c0_i32_42] : memref<8x128xf32, #tpu.memory_space<vmem>> -> memref<1x128xf32, #tpu.memory_space<vmem>>
      %76 = tpu.memref_squeeze %75 : memref<1x128xf32, #tpu.memory_space<vmem>> -> memref<128xf32, #tpu.memory_space<vmem>>
      %77 = tpu.memref_slice %arg17[%c6_i32_40] : memref<8x!tpu.dma_semaphore, #tpu.memory_space<semaphore_mem>> -> memref<1x!tpu.dma_semaphore, #tpu.memory_space<semaphore_mem>>
      %78 = tpu.memref_squeeze %77 : memref<1x!tpu.dma_semaphore, #tpu.memory_space<semaphore_mem>> -> memref<!tpu.dma_semaphore, #tpu.memory_space<semaphore_mem>>
      tpu.enqueue_dma source(%74 : memref<128xf32, #tpu.memory_space<any>>) target(%76 : memref<128xf32, #tpu.memory_space<vmem>>) target_semaphore(%78 : memref<!tpu.dma_semaphore, #tpu.memory_space<semaphore_mem>>)
      %c7_i32 = arith.constant 7 : i32
      %c7_i32_43 = arith.constant 7 : i32
      %c0_i32_44 = arith.constant 0 : i32
      %79 = tpu.memref_slice %arg2[%36, %c0_i32_44] : memref<4096x128xf32, #tpu.memory_space<any>> -> memref<1x128xf32, #tpu.memory_space<any>>
      %80 = tpu.memref_squeeze %79 : memref<1x128xf32, #tpu.memory_space<any>> -> memref<128xf32, #tpu.memory_space<any>>
      %c0_i32_45 = arith.constant 0 : i32
      %81 = tpu.memref_slice %arg13[%c7_i32, %c0_i32_45] : memref<8x128xf32, #tpu.memory_space<vmem>> -> memref<1x128xf32, #tpu.memory_space<vmem>>
      %82 = tpu.memref_squeeze %81 : memref<1x128xf32, #tpu.memory_space<vmem>> -> memref<128xf32, #tpu.memory_space<vmem>>
      %83 = tpu.memref_slice %arg17[%c7_i32_43] : memref<8x!tpu.dma_semaphore, #tpu.memory_space<semaphore_mem>> -> memref<1x!tpu.dma_semaphore, #tpu.memory_space<semaphore_mem>>
      %84 = tpu.memref_squeeze %83 : memref<1x!tpu.dma_semaphore, #tpu.memory_space<semaphore_mem>> -> memref<!tpu.dma_semaphore, #tpu.memory_space<semaphore_mem>>
      tpu.enqueue_dma source(%80 : memref<128xf32, #tpu.memory_space<any>>) target(%82 : memref<128xf32, #tpu.memory_space<vmem>>) target_semaphore(%84 : memref<!tpu.dma_semaphore, #tpu.memory_space<semaphore_mem>>)
      %c0_i32_46 = arith.constant 0 : i32
      %c0_i32_47 = arith.constant 0 : i32
      %c0_i32_48 = arith.constant 0 : i32
      %85 = tpu.memref_slice %arg2[%29, %c0_i32_48] : memref<4096x128xf32, #tpu.memory_space<any>> -> memref<1x128xf32, #tpu.memory_space<any>>
      %86 = tpu.memref_squeeze %85 : memref<1x128xf32, #tpu.memory_space<any>> -> memref<128xf32, #tpu.memory_space<any>>
      %c0_i32_49 = arith.constant 0 : i32
      %87 = tpu.memref_slice %arg13[%c0_i32_46, %c0_i32_49] : memref<8x128xf32, #tpu.memory_space<vmem>> -> memref<1x128xf32, #tpu.memory_space<vmem>>
      %88 = tpu.memref_squeeze %87 : memref<1x128xf32, #tpu.memory_space<vmem>> -> memref<128xf32, #tpu.memory_space<vmem>>
      %89 = tpu.memref_slice %arg17[%c0_i32_47] : memref<8x!tpu.dma_semaphore, #tpu.memory_space<semaphore_mem>> -> memref<1x!tpu.dma_semaphore, #tpu.memory_space<semaphore_mem>>
      %90 = tpu.memref_squeeze %89 : memref<1x!tpu.dma_semaphore, #tpu.memory_space<semaphore_mem>> -> memref<!tpu.dma_semaphore, #tpu.memory_space<semaphore_mem>>
      tpu.wait_dma2 semaphore(%90 : memref<!tpu.dma_semaphore, #tpu.memory_space<semaphore_mem>>) src(%86 : memref<128xf32, #tpu.memory_space<any>>) dst(%88 : memref<128xf32, #tpu.memory_space<vmem>>)
      %c1_i32_50 = arith.constant 1 : i32
      %c1_i32_51 = arith.constant 1 : i32
      %c0_i32_52 = arith.constant 0 : i32
      %91 = tpu.memref_slice %arg2[%30, %c0_i32_52] : memref<4096x128xf32, #tpu.memory_space<any>> -> memref<1x128xf32, #tpu.memory_space<any>>
      %92 = tpu.memref_squeeze %91 : memref<1x128xf32, #tpu.memory_space<any>> -> memref<128xf32, #tpu.memory_space<any>>
      %c0_i32_53 = arith.constant 0 : i32
      %93 = tpu.memref_slice %arg13[%c1_i32_50, %c0_i32_53] : memref<8x128xf32, #tpu.memory_space<vmem>> -> memref<1x128xf32, #tpu.memory_space<vmem>>
      %94 = tpu.memref_squeeze %93 : memref<1x128xf32, #tpu.memory_space<vmem>> -> memref<128xf32, #tpu.memory_space<vmem>>
      %95 = tpu.memref_slice %arg17[%c1_i32_51] : memref<8x!tpu.dma_semaphore, #tpu.memory_space<semaphore_mem>> -> memref<1x!tpu.dma_semaphore, #tpu.memory_space<semaphore_mem>>
      %96 = tpu.memref_squeeze %95 : memref<1x!tpu.dma_semaphore, #tpu.memory_space<semaphore_mem>> -> memref<!tpu.dma_semaphore, #tpu.memory_space<semaphore_mem>>
      tpu.wait_dma2 semaphore(%96 : memref<!tpu.dma_semaphore, #tpu.memory_space<semaphore_mem>>) src(%92 : memref<128xf32, #tpu.memory_space<any>>) dst(%94 : memref<128xf32, #tpu.memory_space<vmem>>)
      %c2_i32_54 = arith.constant 2 : i32
      %c2_i32_55 = arith.constant 2 : i32
      %c0_i32_56 = arith.constant 0 : i32
      %97 = tpu.memref_slice %arg2[%31, %c0_i32_56] : memref<4096x128xf32, #tpu.memory_space<any>> -> memref<1x128xf32, #tpu.memory_space<any>>
      %98 = tpu.memref_squeeze %97 : memref<1x128xf32, #tpu.memory_space<any>> -> memref<128xf32, #tpu.memory_space<any>>
      %c0_i32_57 = arith.constant 0 : i32
      %99 = tpu.memref_slice %arg13[%c2_i32_54, %c0_i32_57] : memref<8x128xf32, #tpu.memory_space<vmem>> -> memref<1x128xf32, #tpu.memory_space<vmem>>
      %100 = tpu.memref_squeeze %99 : memref<1x128xf32, #tpu.memory_space<vmem>> -> memref<128xf32, #tpu.memory_space<vmem>>
      %101 = tpu.memref_slice %arg17[%c2_i32_55] : memref<8x!tpu.dma_semaphore, #tpu.memory_space<semaphore_mem>> -> memref<1x!tpu.dma_semaphore, #tpu.memory_space<semaphore_mem>>
      %102 = tpu.memref_squeeze %101 : memref<1x!tpu.dma_semaphore, #tpu.memory_space<semaphore_mem>> -> memref<!tpu.dma_semaphore, #tpu.memory_space<semaphore_mem>>
      tpu.wait_dma2 semaphore(%102 : memref<!tpu.dma_semaphore, #tpu.memory_space<semaphore_mem>>) src(%98 : memref<128xf32, #tpu.memory_space<any>>) dst(%100 : memref<128xf32, #tpu.memory_space<vmem>>)
      %c3_i32_58 = arith.constant 3 : i32
      %c3_i32_59 = arith.constant 3 : i32
      %c0_i32_60 = arith.constant 0 : i32
      %103 = tpu.memref_slice %arg2[%32, %c0_i32_60] : memref<4096x128xf32, #tpu.memory_space<any>> -> memref<1x128xf32, #tpu.memory_space<any>>
      %104 = tpu.memref_squeeze %103 : memref<1x128xf32, #tpu.memory_space<any>> -> memref<128xf32, #tpu.memory_space<any>>
      %c0_i32_61 = arith.constant 0 : i32
      %105 = tpu.memref_slice %arg13[%c3_i32_58, %c0_i32_61] : memref<8x128xf32, #tpu.memory_space<vmem>> -> memref<1x128xf32, #tpu.memory_space<vmem>>
      %106 = tpu.memref_squeeze %105 : memref<1x128xf32, #tpu.memory_space<vmem>> -> memref<128xf32, #tpu.memory_space<vmem>>
      %107 = tpu.memref_slice %arg17[%c3_i32_59] : memref<8x!tpu.dma_semaphore, #tpu.memory_space<semaphore_mem>> -> memref<1x!tpu.dma_semaphore, #tpu.memory_space<semaphore_mem>>
      %108 = tpu.memref_squeeze %107 : memref<1x!tpu.dma_semaphore, #tpu.memory_space<semaphore_mem>> -> memref<!tpu.dma_semaphore, #tpu.memory_space<semaphore_mem>>
      tpu.wait_dma2 semaphore(%108 : memref<!tpu.dma_semaphore, #tpu.memory_space<semaphore_mem>>) src(%104 : memref<128xf32, #tpu.memory_space<any>>) dst(%106 : memref<128xf32, #tpu.memory_space<vmem>>)
      %c4_i32_62 = arith.constant 4 : i32
      %c4_i32_63 = arith.constant 4 : i32
      %c0_i32_64 = arith.constant 0 : i32
      %109 = tpu.memref_slice %arg2[%33, %c0_i32_64] : memref<4096x128xf32, #tpu.memory_space<any>> -> memref<1x128xf32, #tpu.memory_space<any>>
      %110 = tpu.memref_squeeze %109 : memref<1x128xf32, #tpu.memory_space<any>> -> memref<128xf32, #tpu.memory_space<any>>
      %c0_i32_65 = arith.constant 0 : i32
      %111 = tpu.memref_slice %arg13[%c4_i32_62, %c0_i32_65] : memref<8x128xf32, #tpu.memory_space<vmem>> -> memref<1x128xf32, #tpu.memory_space<vmem>>
      %112 = tpu.memref_squeeze %111 : memref<1x128xf32, #tpu.memory_space<vmem>> -> memref<128xf32, #tpu.memory_space<vmem>>
      %113 = tpu.memref_slice %arg17[%c4_i32_63] : memref<8x!tpu.dma_semaphore, #tpu.memory_space<semaphore_mem>> -> memref<1x!tpu.dma_semaphore, #tpu.memory_space<semaphore_mem>>
      %114 = tpu.memref_squeeze %113 : memref<1x!tpu.dma_semaphore, #tpu.memory_space<semaphore_mem>> -> memref<!tpu.dma_semaphore, #tpu.memory_space<semaphore_mem>>
      tpu.wait_dma2 semaphore(%114 : memref<!tpu.dma_semaphore, #tpu.memory_space<semaphore_mem>>) src(%110 : memref<128xf32, #tpu.memory_space<any>>) dst(%112 : memref<128xf32, #tpu.memory_space<vmem>>)
      %c5_i32_66 = arith.constant 5 : i32
      %c5_i32_67 = arith.constant 5 : i32
      %c0_i32_68 = arith.constant 0 : i32
      %115 = tpu.memref_slice %arg2[%34, %c0_i32_68] : memref<4096x128xf32, #tpu.memory_space<any>> -> memref<1x128xf32, #tpu.memory_space<any>>
      %116 = tpu.memref_squeeze %115 : memref<1x128xf32, #tpu.memory_space<any>> -> memref<128xf32, #tpu.memory_space<any>>
      %c0_i32_69 = arith.constant 0 : i32
      %117 = tpu.memref_slice %arg13[%c5_i32_66, %c0_i32_69] : memref<8x128xf32, #tpu.memory_space<vmem>> -> memref<1x128xf32, #tpu.memory_space<vmem>>
      %118 = tpu.memref_squeeze %117 : memref<1x128xf32, #tpu.memory_space<vmem>> -> memref<128xf32, #tpu.memory_space<vmem>>
      %119 = tpu.memref_slice %arg17[%c5_i32_67] : memref<8x!tpu.dma_semaphore, #tpu.memory_space<semaphore_mem>> -> memref<1x!tpu.dma_semaphore, #tpu.memory_space<semaphore_mem>>
      %120 = tpu.memref_squeeze %119 : memref<1x!tpu.dma_semaphore, #tpu.memory_space<semaphore_mem>> -> memref<!tpu.dma_semaphore, #tpu.memory_space<semaphore_mem>>
      tpu.wait_dma2 semaphore(%120 : memref<!tpu.dma_semaphore, #tpu.memory_space<semaphore_mem>>) src(%116 : memref<128xf32, #tpu.memory_space<any>>) dst(%118 : memref<128xf32, #tpu.memory_space<vmem>>)
      %c6_i32_70 = arith.constant 6 : i32
      %c6_i32_71 = arith.constant 6 : i32
      %c0_i32_72 = arith.constant 0 : i32
      %121 = tpu.memref_slice %arg2[%35, %c0_i32_72] : memref<4096x128xf32, #tpu.memory_space<any>> -> memref<1x128xf32, #tpu.memory_space<any>>
      %122 = tpu.memref_squeeze %121 : memref<1x128xf32, #tpu.memory_space<any>> -> memref<128xf32, #tpu.memory_space<any>>
      %c0_i32_73 = arith.constant 0 : i32
      %123 = tpu.memref_slice %arg13[%c6_i32_70, %c0_i32_73] : memref<8x128xf32, #tpu.memory_space<vmem>> -> memref<1x128xf32, #tpu.memory_space<vmem>>
      %124 = tpu.memref_squeeze %123 : memref<1x128xf32, #tpu.memory_space<vmem>> -> memref<128xf32, #tpu.memory_space<vmem>>
      %125 = tpu.memref_slice %arg17[%c6_i32_71] : memref<8x!tpu.dma_semaphore, #tpu.memory_space<semaphore_mem>> -> memref<1x!tpu.dma_semaphore, #tpu.memory_space<semaphore_mem>>
      %126 = tpu.memref_squeeze %125 : memref<1x!tpu.dma_semaphore, #tpu.memory_space<semaphore_mem>> -> memref<!tpu.dma_semaphore, #tpu.memory_space<semaphore_mem>>
      tpu.wait_dma2 semaphore(%126 : memref<!tpu.dma_semaphore, #tpu.memory_space<semaphore_mem>>) src(%122 : memref<128xf32, #tpu.memory_space<any>>) dst(%124 : memref<128xf32, #tpu.memory_space<vmem>>)
      %c7_i32_74 = arith.constant 7 : i32
      %c7_i32_75 = arith.constant 7 : i32
      %c0_i32_76 = arith.constant 0 : i32
      %127 = tpu.memref_slice %arg2[%36, %c0_i32_76] : memref<4096x128xf32, #tpu.memory_space<any>> -> memref<1x128xf32, #tpu.memory_space<any>>
      %128 = tpu.memref_squeeze %127 : memref<1x128xf32, #tpu.memory_space<any>> -> memref<128xf32, #tpu.memory_space<any>>
      %c0_i32_77 = arith.constant 0 : i32
      %129 = tpu.memref_slice %arg13[%c7_i32_74, %c0_i32_77] : memref<8x128xf32, #tpu.memory_space<vmem>> -> memref<1x128xf32, #tpu.memory_space<vmem>>
      %130 = tpu.memref_squeeze %129 : memref<1x128xf32, #tpu.memory_space<vmem>> -> memref<128xf32, #tpu.memory_space<vmem>>
      %131 = tpu.memref_slice %arg17[%c7_i32_75] : memref<8x!tpu.dma_semaphore, #tpu.memory_space<semaphore_mem>> -> memref<1x!tpu.dma_semaphore, #tpu.memory_space<semaphore_mem>>
      %132 = tpu.memref_squeeze %131 : memref<1x!tpu.dma_semaphore, #tpu.memory_space<semaphore_mem>> -> memref<!tpu.dma_semaphore, #tpu.memory_space<semaphore_mem>>
      tpu.wait_dma2 semaphore(%132 : memref<!tpu.dma_semaphore, #tpu.memory_space<semaphore_mem>>) src(%128 : memref<128xf32, #tpu.memory_space<any>>) dst(%130 : memref<128xf32, #tpu.memory_space<vmem>>)
      %c0_78 = arith.constant 0 : index
      %c0_79 = arith.constant 0 : index
      %133 = vector.load %arg13[%c0_78, %c0_79] : memref<8x128xf32, #tpu.memory_space<vmem>>, vector<8x128xf32>
      %cst_80 = arith.constant 0.000000e+00 : f32
      %134 = vector.broadcast %cst_80 : f32 to vector<8x128xf32>
      %135 = arith.maximumf %133, %134 : vector<8x128xf32>
      %136 = arith.truncf %135 : vector<8x128xf32> to vector<8x128xbf16>
      %c0_81 = arith.constant 0 : index
      %c0_82 = arith.constant 0 : index
      %137 = vector.load %arg3[%c0_81, %c0_82] : memref<8x128xf32, #tpu.memory_space<vmem>>, vector<8x128xf32>
      %c0_83 = arith.constant 0 : index
      %c0_84 = arith.constant 0 : index
      %138 = vector.load %arg4[%c0_83, %c0_84] : memref<128x384xbf16, #tpu.memory_space<vmem>>, vector<128x384xbf16>
      %cst_85 = arith.constant dense<0.000000e+00> : vector<8x384xf32>
      %139 = tpu.matmul %136, %138, %cst_85 {dimension_numbers = #tpu.dot_dimension_numbers<[1], [0], [0], [1], [0, 0, 1, 1], [], []>} : vector<8x128xbf16>, vector<128x384xbf16>, vector<8x384xf32> -> vector<8x384xf32>
      %c0_86 = arith.constant 0 : index
      %c0_87 = arith.constant 0 : index
      %140 = vector.load %arg6[%c0_86, %c0_87] : memref<1x384xf32, #tpu.memory_space<vmem>>, vector<1x384xf32>
      %141 = vector.broadcast %140 : vector<1x384xf32> to vector<8x384xf32>
      %142 = arith.addf %139, %141 : vector<8x384xf32>
      %143 = arith.truncf %137 : vector<8x128xf32> to vector<8x128xbf16>
      %c0_88 = arith.constant 0 : index
      %c0_89 = arith.constant 0 : index
      %144 = vector.load %arg5[%c0_88, %c0_89] : memref<128x384xbf16, #tpu.memory_space<vmem>>, vector<128x384xbf16>
      %cst_90 = arith.constant dense<0.000000e+00> : vector<8x384xf32>
      %145 = tpu.matmul %143, %144, %cst_90 {dimension_numbers = #tpu.dot_dimension_numbers<[1], [0], [0], [1], [0, 0, 1, 1], [], []>} : vector<8x128xbf16>, vector<128x384xbf16>, vector<8x384xf32> -> vector<8x384xf32>
      %c0_91 = arith.constant 0 : index
      %c0_92 = arith.constant 0 : index
      %146 = vector.load %arg7[%c0_91, %c0_92] : memref<1x384xf32, #tpu.memory_space<vmem>>, vector<1x384xf32>
      %147 = vector.broadcast %146 : vector<1x384xf32> to vector<8x384xf32>
      %148 = arith.addf %145, %147 : vector<8x384xf32>
      %149 = vector.extract_strided_slice %142 {offsets = [0, 0], sizes = [8, 128], strides = [1, 1]} : vector<8x384xf32> to vector<8x128xf32>
      %150 = vector.extract_strided_slice %148 {offsets = [0, 0], sizes = [8, 128], strides = [1, 1]} : vector<8x384xf32> to vector<8x128xf32>
      %151 = arith.addf %149, %150 : vector<8x128xf32>
      %152 = arith.negf %151 : vector<8x128xf32>
      %153 = math.exp %152 : vector<8x128xf32>
      %cst_93 = arith.constant 1.000000e+00 : f32
      %154 = vector.broadcast %cst_93 : f32 to vector<8x128xf32>
      %155 = arith.addf %154, %153 : vector<8x128xf32>
      %156 = arith.divf %154, %155 : vector<8x128xf32>
      %157 = vector.extract_strided_slice %142 {offsets = [0, 128], sizes = [8, 128], strides = [1, 1]} : vector<8x384xf32> to vector<8x128xf32>
      %158 = vector.extract_strided_slice %148 {offsets = [0, 128], sizes = [8, 128], strides = [1, 1]} : vector<8x384xf32> to vector<8x128xf32>
      %159 = arith.addf %157, %158 : vector<8x128xf32>
      %160 = arith.negf %159 : vector<8x128xf32>
      %161 = math.exp %160 : vector<8x128xf32>
      %cst_94 = arith.constant 1.000000e+00 : f32
      %162 = vector.broadcast %cst_94 : f32 to vector<8x128xf32>
      %163 = arith.addf %162, %161 : vector<8x128xf32>
      %164 = arith.divf %162, %163 : vector<8x128xf32>
      %165 = vector.extract_strided_slice %142 {offsets = [0, 256], sizes = [8, 128], strides = [1, 1]} : vector<8x384xf32> to vector<8x128xf32>
      %166 = vector.extract_strided_slice %148 {offsets = [0, 256], sizes = [8, 128], strides = [1, 1]} : vector<8x384xf32> to vector<8x128xf32>
      %167 = arith.mulf %156, %166 : vector<8x128xf32>
      %168 = arith.addf %165, %167 : vector<8x128xf32>
      %169 = math.tanh %168 : vector<8x128xf32>
      %cst_95 = arith.constant 1.000000e+00 : f32
      %170 = vector.broadcast %cst_95 : f32 to vector<8x128xf32>
      %171 = arith.subf %170, %164 : vector<8x128xf32>
      %172 = arith.mulf %171, %169 : vector<8x128xf32>
      %173 = arith.mulf %164, %137 : vector<8x128xf32>
      %174 = arith.addf %172, %173 : vector<8x128xf32>
      %c0_96 = arith.constant 0 : index
      %c0_97 = arith.constant 0 : index
      %175 = vector.load %arg12[%c0_96, %c0_97] : memref<8x128xf32, #tpu.memory_space<vmem>>, vector<8x128xf32>
      tpu.vector_store %arg12[%c0_96, %c0_97], %174 {strides = array<i32>} : memref<8x128xf32, #tpu.memory_space<vmem>>, vector<8x128xf32>,
      %176 = arith.truncf %174 : vector<8x128xf32> to vector<8x128xbf16>
      %c0_98 = arith.constant 0 : index
      %c0_99 = arith.constant 0 : index
      %177 = vector.load %arg14[%c0_98, %c0_99] : memref<8x128xbf16, #tpu.memory_space<vmem>>, vector<8x128xbf16>
      tpu.vector_store %arg14[%c0_98, %c0_99], %176 {strides = array<i32>} : memref<8x128xbf16, #tpu.memory_space<vmem>>, vector<8x128xbf16>,
      %cst_100 = arith.constant -1.000000e+30 : f32
      %178 = vector.broadcast %cst_100 : f32 to vector<8x1xf32>
      %c0_101 = arith.constant 0 : index
      %c0_102 = arith.constant 0 : index
      %179 = vector.load %arg15[%c0_101, %c0_102] : memref<8x1xf32, #tpu.memory_space<vmem>>, vector<8x1xf32>
      tpu.vector_store %arg15[%c0_101, %c0_102], %178 {strides = array<i32>} : memref<8x1xf32, #tpu.memory_space<vmem>>, vector<8x1xf32>,
      %cst_103 = arith.constant 0.000000e+00 : f32
      %180 = vector.broadcast %cst_103 : f32 to vector<8x1xf32>
      %c0_104 = arith.constant 0 : index
      %c0_105 = arith.constant 0 : index
      %181 = vector.load %arg16[%c0_104, %c0_105] : memref<8x1xf32, #tpu.memory_space<vmem>>, vector<8x1xf32>
      tpu.vector_store %arg16[%c0_104, %c0_105], %180 {strides = array<i32>} : memref<8x1xf32, #tpu.memory_space<vmem>>, vector<8x1xf32>,
    } else {
    }
    %c0 = arith.constant 0 : index
    %c0_1 = arith.constant 0 : index
    %3 = vector.load %arg14[%c0, %c0_1] : memref<8x128xbf16, #tpu.memory_space<vmem>>, vector<8x128xbf16>
    %c0_2 = arith.constant 0 : index
    %c0_3 = arith.constant 0 : index
    %4 = vector.load %arg8[%c0_2, %c0_3] : memref<128x2048xbf16, #tpu.memory_space<vmem>>, vector<128x2048xbf16>
    %cst = arith.constant dense<0.000000e+00> : vector<8x2048xf32>
    %5 = tpu.matmul %3, %4, %cst {dimension_numbers = #tpu.dot_dimension_numbers<[1], [0], [0], [1], [0, 0, 1, 1], [], []>} : vector<8x128xbf16>, vector<128x2048xbf16>, vector<8x2048xf32> -> vector<8x2048xf32>
    %c0_4 = arith.constant 0 : index
    %c0_5 = arith.constant 0 : index
    %6 = vector.load %arg9[%c0_4, %c0_5] : memref<1x2048xf32, #tpu.memory_space<vmem>>, vector<1x2048xf32>
    %7 = vector.broadcast %6 : vector<1x2048xf32> to vector<8x2048xf32>
    %8 = arith.addf %5, %7 : vector<8x2048xf32>
    %c0_6 = arith.constant 0 : index
    %c0_7 = arith.constant 0 : index
    %9 = vector.load %arg10[%c0_6, %c0_7] : memref<8x2048xf32, #tpu.memory_space<vmem>>, vector<8x2048xf32>
    tpu.vector_store %arg10[%c0_6, %c0_7], %8 {strides = array<i32>} : memref<8x2048xf32, #tpu.memory_space<vmem>>, vector<8x2048xf32>,
    %c0_8 = arith.constant 0 : index
    %c0_9 = arith.constant 0 : index
    %10 = vector.load %arg15[%c0_8, %c0_9] : memref<8x1xf32, #tpu.memory_space<vmem>>, vector<8x1xf32>
    %cst_10 = arith.constant dense<0xFF800000> : vector<8xf32>
    %11 = vector.multi_reduction <maximumf>, %8, %cst_10 [1] : vector<8x2048xf32> to vector<8xf32>
    %12 = vector.shape_cast %11 : vector<8xf32> to vector<8x1xf32>
    %13 = arith.maximumf %10, %12 : vector<8x1xf32>
    %c0_11 = arith.constant 0 : index
    %c0_12 = arith.constant 0 : index
    %14 = vector.load %arg16[%c0_11, %c0_12] : memref<8x1xf32, #tpu.memory_space<vmem>>, vector<8x1xf32>
    %15 = arith.subf %10, %13 : vector<8x1xf32>
    %16 = math.exp %15 : vector<8x1xf32>
    %17 = arith.mulf %14, %16 : vector<8x1xf32>
    %18 = vector.broadcast %13 : vector<8x1xf32> to vector<8x2048xf32>
    %19 = arith.subf %8, %18 : vector<8x2048xf32>
    %20 = math.exp %19 : vector<8x2048xf32>
    %cst_13 = arith.constant dense<0.000000e+00> : vector<8xf32>
    %21 = vector.multi_reduction <add>, %20, %cst_13 [1] : vector<8x2048xf32> to vector<8xf32>
    %22 = vector.shape_cast %21 : vector<8xf32> to vector<8x1xf32>
    %23 = arith.addf %17, %22 : vector<8x1xf32>
    %c0_14 = arith.constant 0 : index
    %c0_15 = arith.constant 0 : index
    %24 = vector.load %arg16[%c0_14, %c0_15] : memref<8x1xf32, #tpu.memory_space<vmem>>, vector<8x1xf32>
    tpu.vector_store %arg16[%c0_14, %c0_15], %23 {strides = array<i32>} : memref<8x1xf32, #tpu.memory_space<vmem>>, vector<8x1xf32>,
    %c0_16 = arith.constant 0 : index
    %c0_17 = arith.constant 0 : index
    %25 = vector.load %arg15[%c0_16, %c0_17] : memref<8x1xf32, #tpu.memory_space<vmem>>, vector<8x1xf32>
    tpu.vector_store %arg15[%c0_16, %c0_17], %13 {strides = array<i32>} : memref<8x1xf32, #tpu.memory_space<vmem>>, vector<8x1xf32>,
    %c1_i32 = arith.constant 1 : i32
    %26 = arith.cmpi eq, %arg0, %c1_i32 : i32
    %27 = arith.extui %26 : i1 to i32
    %c0_i32_18 = arith.constant 0 : i32
    %28 = arith.cmpi ne, %27, %c0_i32_18 : i32
    scf.if %28 {
      %c0_19 = arith.constant 0 : index
      %c0_20 = arith.constant 0 : index
      %29 = vector.load %arg15[%c0_19, %c0_20] : memref<8x1xf32, #tpu.memory_space<vmem>>, vector<8x1xf32>
      %c0_21 = arith.constant 0 : index
      %c0_22 = arith.constant 0 : index
      %30 = vector.load %arg16[%c0_21, %c0_22] : memref<8x1xf32, #tpu.memory_space<vmem>>, vector<8x1xf32>
      %31 = math.log %30 : vector<8x1xf32>
      %32 = arith.addf %29, %31 : vector<8x1xf32>
      %c0_23 = arith.constant 0 : index
      %c0_24 = arith.constant 0 : index
      %33 = vector.load %arg11[%c0_23, %c0_24] : memref<8x1xf32, #tpu.memory_space<vmem>>, vector<8x1xf32>
      tpu.vector_store %arg11[%c0_23, %c0_24], %32 {strides = array<i32>} : memref<8x1xf32, #tpu.memory_space<vmem>>, vector<8x1xf32>,
    } else {
    }
    return
  }
  func.func @transform_1(%arg0: i32, %arg1: memref<8xi32, #tpu.memory_space<smem>>) -> (i32, i32) {
    %c0_i32 = arith.constant 0 : i32
    %c0_i32_0 = arith.constant 0 : i32
    %c0_i32_1 = arith.constant 0 : i32
    return %c0_i32, %c0_i32_0 : i32, i32
  }
  func.func @transform_2(%arg0: i32, %arg1: memref<8xi32, #tpu.memory_space<smem>>) -> (i32, i32) {
    %c0_i32 = arith.constant 0 : i32
    %c0_i32_0 = arith.constant 0 : i32
    %c0_i32_1 = arith.constant 0 : i32
    return %c0_i32, %c0_i32_0 : i32, i32
  }
  func.func @transform_3(%arg0: i32, %arg1: memref<8xi32, #tpu.memory_space<smem>>) -> (i32, i32) {
    %c0_i32 = arith.constant 0 : i32
    %c0_i32_0 = arith.constant 0 : i32
    %c0_i32_1 = arith.constant 0 : i32
    return %c0_i32, %c0_i32_0 : i32, i32
  }
  func.func @transform_4(%arg0: i32, %arg1: memref<8xi32, #tpu.memory_space<smem>>) -> (i32, i32) {
    %c0_i32 = arith.constant 0 : i32
    %c0_i32_0 = arith.constant 0 : i32
    %c0_i32_1 = arith.constant 0 : i32
    return %c0_i32, %c0_i32_0 : i32, i32
  }
  func.func @transform_5(%arg0: i32, %arg1: memref<8xi32, #tpu.memory_space<smem>>) -> (i32, i32) {
    %c0_i32 = arith.constant 0 : i32
    %c0_i32_0 = arith.constant 0 : i32
    %c0_i32_1 = arith.constant 0 : i32
    return %c0_i32, %c0_i32_0 : i32, i32
  }
  func.func @transform_6(%arg0: i32, %arg1: memref<8xi32, #tpu.memory_space<smem>>) -> (i32, i32) {
    %c0_i32 = arith.constant 0 : i32
    %c0_i32_0 = arith.constant 0 : i32
    return %c0_i32, %arg0 : i32, i32
  }
  func.func @transform_7(%arg0: i32, %arg1: memref<8xi32, #tpu.memory_space<smem>>) -> (i32, i32) {
    %c0_i32 = arith.constant 0 : i32
    %c0_i32_0 = arith.constant 0 : i32
    return %c0_i32, %arg0 : i32, i32
  }
  func.func @transform_8(%arg0: i32, %arg1: memref<8xi32, #tpu.memory_space<smem>>) -> (i32, i32) {
    %c0_i32 = arith.constant 0 : i32
    %c0_i32_0 = arith.constant 0 : i32
    return %c0_i32, %arg0 : i32, i32
  }
  func.func @transform_9(%arg0: i32, %arg1: memref<8xi32, #tpu.memory_space<smem>>) -> (i32, i32) {
    %c0_i32 = arith.constant 0 : i32
    %c0_i32_0 = arith.constant 0 : i32
    %c0_i32_1 = arith.constant 0 : i32
    return %c0_i32, %c0_i32_0 : i32, i32
  }
  func.func @transform_10(%arg0: i32, %arg1: memref<8xi32, #tpu.memory_space<smem>>) -> (i32, i32) {
    %c0_i32 = arith.constant 0 : i32
    %c0_i32_0 = arith.constant 0 : i32
    %c0_i32_1 = arith.constant 0 : i32
    return %c0_i32, %c0_i32_0 : i32, i32
  }
}

</mosaic_0001>

<llo_original>
// kernel: decode_step.1
$region0: #{decode_step.1}
  #allocation0 [shape = 'u32[]', space=smem, size = 0x4, offset = 0x4, fixed_abs, tag = 'smem constant byte address 0x4 - core index']
  #allocation1 [shape = 'u32[144,128]{1,0:T(1,128)}', space=vmem, size = 0x12000, scoped, tag = 'internal scratch']
  #allocation2 [shape = 'f32[8,128]{1,0:T(8,128)}', space=vmem, size = 0x1000, scoped, tag = 'scratch operand']
  #allocation3 [shape = 'bf16[8,128]{1,0:T(8,128)(2,1)}', space=vmem, size = 0x800, scoped, tag = 'scratch operand']
  #allocation4 [shape = 'f32[8,1]{1,0:T(8,128)}', space=vmem, size = 0x1000, scoped, tag = 'scratch operand']
  #allocation5 [shape = 'f32[8,1]{1,0:T(8,128)}', space=vmem, size = 0x1000, scoped, tag = 'scratch operand']
  #allocation6 [shape = 's32[8]{0}', space=sflag, size = 0x20, scoped, tag = 'scratch operand']
  #allocation7 [shape = 's32[1]{0}', space=sflag, size = 0x4, scoped, tag = 'scoped memory for decode_step.1']
  #allocation8 [shape = 'u8[512]{0}', space=smem, size = 0x200, scoped, tag = 'prefetched SMEM operand 0']
  #allocation10 [shape = 's32[]', space=sflag, size = 0x4, offset = 0, fixed_abs, tag = 'sflag constant byte address 0x0 - dummy sync flag']
  #allocation11 [shape = 's32[]', space=sflag, size = 0x4, offset = 0, fixed_abs, tag = 'sflag constant byte address 0x0 - dummy sync flag']
  #allocation12 [shape = 's32[]', space=sflag, size = 0x4, offset = 0, fixed_abs, tag = 'sflag constant byte address 0x0 - dummy sync flag']
  #allocation13 [shape = 's32[]', space=sflag, size = 0x4, offset = 0, fixed_abs, tag = 'sflag constant byte address 0x0 - dummy sync flag']
  #allocation14 [shape = 's32[]', space=sflag, size = 0x4, offset = 0, fixed_abs, tag = 'sflag constant byte address 0x0 - dummy sync flag']
  #allocation15 [shape = 's32[]', space=sflag, size = 0x4, offset = 0, fixed_abs, tag = 'sflag constant byte address 0x0 - dummy sync flag']
  #allocation16 [shape = 's32[]', space=sflag, size = 0x4, offset = 0, fixed_abs, tag = 'sflag constant byte address 0x0 - dummy sync flag']
  #allocation17 [shape = 's32[]', space=sflag, size = 0x4, offset = 0, fixed_abs, tag = 'sflag constant byte address 0x0 - dummy sync flag']
  %s0 = inlined_call_operand.vmem [shape: s32[8], index: 0, kind: input, shape index: {}]
  %s1 = inlined_call_operand.vmem [shape: f32[4096,128], index: 1, kind: input, shape index: {}]
  %s2 = inlined_call_operand.vmem [shape: f32[8,128], index: 2, kind: input, shape index: {}]
  %s3 = inlined_call_operand.vmem [shape: bf16[128,384], index: 3, kind: input, shape index: {}]
  %s4 = inlined_call_operand.vmem [shape: bf16[128,384], index: 4, kind: input, shape index: {}]
  %s5 = inlined_call_operand.vmem [shape: f32[1,384], index: 5, kind: input, shape index: {}]
  %s6 = inlined_call_operand.vmem [shape: f32[1,384], index: 6, kind: input, shape index: {}]
  %s7 = inlined_call_operand.vmem [shape: bf16[128,4096], index: 7, kind: input, shape index: {}]
  %s8 = inlined_call_operand.vmem [shape: f32[1,4096], index: 8, kind: input, shape index: {}]
  %s9 = inlined_call_operand.vmem [shape: f32[8,4096], index: 9, kind: output, shape index: {0}]
  %s10 = inlined_call_operand.vmem [shape: f32[8,1], index: 10, kind: output, shape index: {1}]
  %s11 = inlined_call_operand.vmem [shape: f32[8,128], index: 11, kind: output, shape index: {2}]
  %12 = xla_tuple %s9, %s10, %s11
  %s13 = sld [smem:[#allocation0]]
  $region348: #{decode_step.1} parent=0
    _
  %s15 = ssub.s32 1, %s13
  %s16 = scalar_select 0, %s15, %s13
  %s17 = sshll.u32 %s0, 4
  %s18 = int_to_ptr.vmem [resolvable:$true] %s17
  %20 = dma.vmem_to_smem %s18, 16, [#allocation8], [#allocation7]
  %21 = dma.done [#allocation7], 16
  %22 = sfence
  $region1: #{decode_step.1} parent=0
    #allocation9 [shape = 'u8[1048576]{0}', space=vmem, size = 0x100000, scoped, tag = 'input window, operand 7']
    loop: start=0, step=1, limit=4
    $region2: #{decode_step.1} parent=1 // loop_pre_header
      _
    $region3: #{decode_step.1} parent=1 // loop_header
      %s24 = sphi 0, %s28
      %p25 = scmp.ge.s32.totalorder %s24, 4
      %s32 = sphi 0, %s32
      %s34 = sphi 0, %s32
      %s35 = sphi 0, %s34
      %s49 = sphi 0, %s35
      %s53 = sphi 0, %s53
      %s55 = sphi 0, %s53
      %s56 = sphi 0, %s55
      %s70 = sphi 0, %s56
      %s74 = sphi 0, %s74
      %s76 = sphi 0, %s74
      %s77 = sphi 0, %s76
      %s91 = sphi 0, %s77
      %s95 = sphi 0, %s95
      %s97 = sphi 0, %s95
      %s98 = sphi 0, %s97
      %s112 = sphi 0, %s98
      %s116 = sphi 0, %s116
      %s118 = sphi 0, %s116
      %s119 = sphi 0, %s118
      %s133 = sphi 0, %s119
      %s139 = sphi 0, %s141
      %s142 = sphi 0, %s139
      %s143 = sphi 0, %s142
      %s159 = sphi 0, %s143
      %s165 = sphi 0, %s167
      %s168 = sphi 0, %s165
      %s169 = sphi 0, %s168
      %s185 = sphi 0, %s169
      %s191 = sphi 0, %s193
      %s194 = sphi 0, %s191
      %s195 = sphi 0, %s194
      %s211 = sphi 0, %s195
      %s215 = sphi 0, %s215
      %s217 = sphi 0, %s215
      %s218 = sphi 0, %s217
      %s232 = sphi 0, %s218
      %s236 = sphi 0, %s236
      %s238 = sphi 0, %s236
      %s239 = sphi 0, %s238
      %s253 = sphi 0, %s239
    $region4: #{decode_step.1} parent=1 // loop_header_branch
      %27 = sbr.rel (%p25) target = $region8
    $region5: #{decode_step.1} parent=1 // loop_body
      %s29 = ssub.s32 %s24, 1
      %s30 = ssub.s32 %s24, 2
      %s31 = sadd.s32 %s24, 1
      %s33 = sadd.s32 %s32, 1
      %p36 = scmp.eq.s32.totalorder %s24, 1
      %p37 = scmp.ne.s32.totalorder %s32, %s34
      %p38 = scmp.eq.s32.totalorder %s24, 0
      %p39 = por %p37, %p38
      %p40 = scmp.ne.s32.totalorder %s32, %s34
      %p41 = scmp.eq.s32.totalorder %s29, 1
      %p42 = por %p40, %p41
      %p43 = scmp.ne.s32.totalorder %s34, %s35
      %p44 = scmp.eq.s32.totalorder %s29, 0
      %p45 = por %p43, %p44
      %p46 = scmp.ne.s32.totalorder %s34, %s35
      %p47 = scmp.eq.s32.totalorder %s30, 1
      %p48 = por %p46, %p47
      %p50 = scmp.ne.s32.totalorder %s35, %s49
      %p51 = scmp.eq.s32.totalorder %s30, 0
      %p52 = por %p50, %p51
      %s54 = sadd.s32 %s53, 1
      %p57 = scmp.eq.s32.totalorder %s24, 1
      %p58 = scmp.ne.s32.totalorder %s53, %s55
      %p59 = scmp.eq.s32.totalorder %s24, 0
      %p60 = por %p58, %p59
      %p61 = scmp.ne.s32.totalorder %s53, %s55
      %p62 = scmp.eq.s32.totalorder %s29, 1
      %p63 = por %p61, %p62
      %p64 = scmp.ne.s32.totalorder %s55, %s56
      %p65 = scmp.eq.s32.totalorder %s29, 0
      %p66 = por %p64, %p65
      %p67 = scmp.ne.s32.totalorder %s55, %s56
      %p68 = scmp.eq.s32.totalorder %s30, 1
      %p69 = por %p67, %p68
      %p71 = scmp.ne.s32.totalorder %s56, %s70
      %p72 = scmp.eq.s32.totalorder %s30, 0
      %p73 = por %p71, %p72
      %s75 = sadd.s32 %s74, 1
      %p78 = scmp.eq.s32.totalorder %s24, 1
      %p79 = scmp.ne.s32.totalorder %s74, %s76
      %p80 = scmp.eq.s32.totalorder %s24, 0
      %p81 = por %p79, %p80
      %p82 = scmp.ne.s32.totalorder %s74, %s76
      %p83 = scmp.eq.s32.totalorder %s29, 1
      %p84 = por %p82, %p83
      %p85 = scmp.ne.s32.totalorder %s76, %s77
      %p86 = scmp.eq.s32.totalorder %s29, 0
      %p87 = por %p85, %p86
      %p88 = scmp.ne.s32.totalorder %s76, %s77
      %p89 = scmp.eq.s32.totalorder %s30, 1
      %p90 = por %p88, %p89
      %p92 = scmp.ne.s32.totalorder %s77, %s91
      %p93 = scmp.eq.s32.totalorder %s30, 0
      %p94 = por %p92, %p93
      %s96 = sadd.s32 %s95, 1
      %p99 = scmp.eq.s32.totalorder %s24, 1
      %p100 = scmp.ne.s32.totalorder %s95, %s97
      %p101 = scmp.eq.s32.totalorder %s24, 0
      %p102 = por %p100, %p101
      %p103 = scmp.ne.s32.totalorder %s95, %s97
      %p104 = scmp.eq.s32.totalorder %s29, 1
      %p105 = por %p103, %p104
      %p106 = scmp.ne.s32.totalorder %s97, %s98
      %p107 = scmp.eq.s32.totalorder %s29, 0
      %p108 = por %p106, %p107
      %p109 = scmp.ne.s32.totalorder %s97, %s98
      %p110 = scmp.eq.s32.totalorder %s30, 1
      %p111 = por %p109, %p110
      %p113 = scmp.ne.s32.totalorder %s98, %s112
      %p114 = scmp.eq.s32.totalorder %s30, 0
      %p115 = por %p113, %p114
      %s117 = sadd.s32 %s116, 1
      %p120 = scmp.eq.s32.totalorder %s24, 1
      %p121 = scmp.ne.s32.totalorder %s116, %s118
      %p122 = scmp.eq.s32.totalorder %s24, 0
      %p123 = por %p121, %p122
      %p124 = scmp.ne.s32.totalorder %s116, %s118
      %p125 = scmp.eq.s32.totalorder %s29, 1
      %p126 = por %p124, %p125
      %p127 = scmp.ne.s32.totalorder %s118, %s119
      %p128 = scmp.eq.s32.totalorder %s29, 0
      %p129 = por %p127, %p128
      %p130 = scmp.ne.s32.totalorder %s118, %s119
      %p131 = scmp.eq.s32.totalorder %s30, 1
      %p132 = por %p130, %p131
      %p134 = scmp.ne.s32.totalorder %s119, %s133
      %p135 = scmp.eq.s32.totalorder %s30, 0
      %p136 = por %p134, %p135
      %s137 = ssub.s32 %s24, %s31
      %p138 = scmp.eq.s32.totalorder %s137, 0
      %s140 = sadd.s32 %s139, 1
      %s141 = scalar_select %p138, %s139, %s140
      %p144 = pneg %p138
      %p145 = scmp.eq.s32.totalorder %s24, 1
      %p146 = por %p144, %p145
      %p147 = scmp.ne.s32.totalorder %s139, %s142
      %p148 = scmp.eq.s32.totalorder %s24, 0
      %p149 = por %p147, %p148
      %p150 = scmp.ne.s32.totalorder %s139, %s142
      %p151 = scmp.eq.s32.totalorder %s29, 1
      %p152 = por %p150, %p151
      %p153 = scmp.ne.s32.totalorder %s142, %s143
      %p154 = scmp.eq.s32.totalorder %s29, 0
      %p155 = por %p153, %p154
      %p156 = scmp.ne.s32.totalorder %s142, %s143
      %p157 = scmp.eq.s32.totalorder %s30, 1
      %p158 = por %p156, %p157
      %p160 = scmp.ne.s32.totalorder %s143, %s159
      %p161 = scmp.eq.s32.totalorder %s30, 0
      %p162 = por %p160, %p161
      %s163 = ssub.s32 %s24, %s31
      %p164 = scmp.eq.s32.totalorder %s163, 0
      %s166 = sadd.s32 %s165, 1
      %s167 = scalar_select %p164, %s165, %s166
      %p170 = pneg %p164
      %p171 = scmp.eq.s32.totalorder %s24, 1
      %p172 = por %p170, %p171
      %p173 = scmp.ne.s32.totalorder %s165, %s168
      %p174 = scmp.eq.s32.totalorder %s24, 0
      %p175 = por %p173, %p174
      %p176 = scmp.ne.s32.totalorder %s165, %s168
      %p177 = scmp.eq.s32.totalorder %s29, 1
      %p178 = por %p176, %p177
      %p179 = scmp.ne.s32.totalorder %s168, %s169
      %p180 = scmp.eq.s32.totalorder %s29, 0
      %p181 = por %p179, %p180
      %p182 = scmp.ne.s32.totalorder %s168, %s169
      %p183 = scmp.eq.s32.totalorder %s30, 1
      %p184 = por %p182, %p183
      %p186 = scmp.ne.s32.totalorder %s169, %s185
      %p187 = scmp.eq.s32.totalorder %s30, 0
      %p188 = por %p186, %p187
      %s189 = ssub.s32 %s24, %s31
      %p190 = scmp.eq.s32.totalorder %s189, 0
      %s192 = sadd.s32 %s191, 1
      %s193 = scalar_select %p190, %s191, %s192
      %p196 = pneg %p190
      %p197 = scmp.eq.s32.totalorder %s24, 1
      %p198 = por %p196, %p197
      %p199 = scmp.ne.s32.totalorder %s191, %s194
      %p200 = scmp.eq.s32.totalorder %s24, 0
      %p201 = por %p199, %p200
      %p202 = scmp.ne.s32.totalorder %s191, %s194
      %p203 = scmp.eq.s32.totalorder %s29, 1
      %p204 = por %p202, %p203
      %p205 = scmp.ne.s32.totalorder %s194, %s195
      %p206 = scmp.eq.s32.totalorder %s29, 0
      %p207 = por %p205, %p206
      %p208 = scmp.ne.s32.totalorder %s194, %s195
      %p209 = scmp.eq.s32.totalorder %s30, 1
      %p210 = por %p208, %p209
      %p212 = scmp.ne.s32.totalorder %s195, %s211
      %p213 = scmp.eq.s32.totalorder %s30, 0
      %p214 = por %p212, %p213
      %s216 = sadd.s32 %s215, 1
      %p219 = scmp.eq.s32.totalorder %s24, 1
      %p220 = scmp.ne.s32.totalorder %s215, %s217
      %p221 = scmp.eq.s32.totalorder %s24, 0
      %p222 = por %p220, %p221
      %p223 = scmp.ne.s32.totalorder %s215, %s217
      %p224 = scmp.eq.s32.totalorder %s29, 1
      %p225 = por %p223, %p224
      %p226 = scmp.ne.s32.totalorder %s217, %s218
      %p227 = scmp.eq.s32.totalorder %s29, 0
      %p228 = por %p226, %p227
      %p229 = scmp.ne.s32.totalorder %s217, %s218
      %p230 = scmp.eq.s32.totalorder %s30, 1
      %p231 = por %p229, %p230
      %p233 = scmp.ne.s32.totalorder %s218, %s232
      %p234 = scmp.eq.s32.totalorder %s30, 0
      %p235 = por %p233, %p234
      %s237 = sadd.s32 %s236, 1
      %p240 = scmp.eq.s32.totalorder %s24, 1
      %p241 = scmp.ne.s32.totalorder %s236, %s238
      %p242 = scmp.eq.s32.totalorder %s24, 0
      %p243 = por %p241, %p242
      %p244 = scmp.ne.s32.totalorder %s236, %s238
      %p245 = scmp.eq.s32.totalorder %s29, 1
      %p246 = por %p244, %p245
      %p247 = scmp.ne.s32.totalorder %s238, %s239
      %p248 = scmp.eq.s32.totalorder %s29, 0
      %p249 = por %p247, %p248
      %p250 = scmp.ne.s32.totalorder %s238, %s239
      %p251 = scmp.eq.s32.totalorder %s30, 1
      %p252 = por %p250, %p251
      %p254 = scmp.ne.s32.totalorder %s239, %s253
      %p255 = scmp.eq.s32.totalorder %s30, 0
      %p256 = por %p254, %p255
      %p257 = scmp.le.s32.totalorder 1, %s24
      %p258 = scmp.lt.s32.totalorder %s24, 3
      %p259 = pnand %p257, %p258
      %p260 = pneg %p259
      // Predicated region
      $region9: #{decode_step.1} parent=5 // pred_check
        _
      $region10: #{decode_step.1} parent=5 // pred_check_branch
        %262 = sbr.rel (%p259) target = $region12
      $region11: #{decode_step.1} parent=5 // pred_region
        %s263 = ssub.s32 %s24, 1
        // Predicated region
        $region13: #{decode_step.1} parent=11 // pred_check
          %p264 = pneg %p45
        $region14: #{decode_step.1} parent=11 // pred_check_branch
          %266 = sbr.rel (%p264) target = $region16
        $region15: #{decode_step.1} parent=11 // pred_region
          _
        $region16: #{decode_step.1} parent=11 // pred_fallthru
          _
        // Predicated region
        $region17: #{decode_step.1} parent=11 // pred_check
          %p267 = pneg %p66
        $region18: #{decode_step.1} parent=11 // pred_check_branch
          %269 = sbr.rel (%p267) target = $region20
        $region19: #{decode_step.1} parent=11 // pred_region
          _
        $region20: #{decode_step.1} parent=11 // pred_fallthru
          _
        // Predicated region
        $region21: #{decode_step.1} parent=11 // pred_check
          %p270 = pneg %p87
        $region22: #{decode_step.1} parent=11 // pred_check_branch
          %272 = sbr.rel (%p270) target = $region24
        $region23: #{decode_step.1} parent=11 // pred_region
          _
        $region24: #{decode_step.1} parent=11 // pred_fallthru
          _
        // Predicated region
        $region25: #{decode_step.1} parent=11 // pred_check
          %p273 = pneg %p108
        $region26: #{decode_step.1} parent=11 // pred_check_branch
          %275 = sbr.rel (%p273) target = $region28
        $region27: #{decode_step.1} parent=11 // pred_region
          _
        $region28: #{decode_step.1} parent=11 // pred_fallthru
          _
        // Predicated region
        $region29: #{decode_step.1} parent=11 // pred_check
          %p276 = pneg %p129
        $region30: #{decode_step.1} parent=11 // pred_check_branch
          %278 = sbr.rel (%p276) target = $region32
        $region31: #{decode_step.1} parent=11 // pred_region
          _
        $region32: #{decode_step.1} parent=11 // pred_fallthru
          _
      $region12: #{decode_step.1} parent=5 // pred_fallthru
        _
      %p279 = scmp.lt.s32.totalorder %s24, 2
      // Predicated region
      $region33: #{decode_step.1} parent=5 // pred_check
        %p280 = pneg %p279
      $region34: #{decode_step.1} parent=5 // pred_check_branch
        %282 = sbr.rel (%p280) target = $region36
      $region35: #{decode_step.1} parent=5 // pred_region
        // Predicated region
        $region37: #{decode_step.1} parent=35 // pred_check
          %p283 = pneg %p149
        $region38: #{decode_step.1} parent=35 // pred_check_branch
          %285 = sbr.rel (%p283) target = $region40
        $region39: #{decode_step.1} parent=35 // pred_region
          %s286 = sand.u32 %s139, 1
          %s287 = sand.u32 %s139, 1
          %s288 = smul.addr %s287, 1024
          %s289 = scalar_lea.vmem [#allocation9], %s288
          %s290 = smul.u32 16, %s24
          %s291 = smul.addr %s290, 4
          %s292 = scalar_lea.vmem %s7, %s291
          // Predicated region
          $region41: #{decode_step.1} parent=39 // pred_check
            _
          $region42: #{decode_step.1} parent=39 // pred_check_branch
            %294 = sbr.rel (0) target = $region44
          $region43: #{decode_step.1} parent=39 // pred_region
            // Predicated region
            $region45: #{decode_step.1} parent=43 // pred_check
              _
            $region46: #{decode_step.1} parent=43 // pred_check_branch
              %296 = sbr.rel (0) target = $region48
            $region47: #{decode_step.1} parent=43 // pred_region
              loop: start=0, step=1, limit=1
              $region49: #{decode_step.1} parent=47 // loop_pre_header
                _
              $region50: #{decode_step.1} parent=47 // loop_header
                %s298 = sphi 0, %s302
                %p299 = scmp.ge.s32.totalorder %s298, 1
                %s303 = sphi %s292, %s292
                %s304 = sphi %s289, %s289
              $region51: #{decode_step.1} parent=47 // loop_header_branch
                %301 = sbr.rel (%p299) target = $region55
              $region52: #{decode_step.1} parent=47 // loop_body
                %v305 = vld [vmem:[%s303] sm:$0xff]
                %306 = vst [vmem:[%s304] sm:$0xff] %v305
                %v307 = vld [vmem:[%s303 + $0x8] sm:$0xff]
                %308 = vst [vmem:[%s304 + $0x8] sm:$0xff] %v307
                %v309 = vld [vmem:[%s303 + $0x10] sm:$0xff]
                %310 = vst [vmem:[%s304 + $0x10] sm:$0xff] %v309
                %v311 = vld [vmem:[%s303 + $0x18] sm:$0xff]
                %312 = vst [vmem:[%s304 + $0x18] sm:$0xff] %v311
                %v313 = vld [vmem:[%s303 + $0x20] sm:$0xff]
                %314 = vst [vmem:[%s304 + $0x20] sm:$0xff] %v313
                %v315 = vld [vmem:[%s303 + $0x28] sm:$0xff]
                %316 = vst [vmem:[%s304 + $0x28] sm:$0xff] %v315
                %v317 = vld [vmem:[%s303 + $0x30] sm:$0xff]
                %318 = vst [vmem:[%s304 + $0x30] sm:$0xff] %v317
                %v319 = vld [vmem:[%s303 + $0x38] sm:$0xff]
                %320 = vst [vmem:[%s304 + $0x38] sm:$0xff] %v319
                %v321 = vld [vmem:[%s303 + $0x80] sm:$0xff]
                %322 = vst [vmem:[%s304 + $0x40] sm:$0xff] %v321
                %v323 = vld [vmem:[%s303 + $0x88] sm:$0xff]
                %324 = vst [vmem:[%s304 + $0x48] sm:$0xff] %v323
                %v325 = vld [vmem:[%s303 + $0x90] sm:$0xff]
                %326 = vst [vmem:[%s304 + $0x50] sm:$0xff] %v325
                %v327 = vld [vmem:[%s303 + $0x98] sm:$0xff]
                %328 = vst [vmem:[%s304 + $0x58] sm:$0xff] %v327
                %v329 = vld [vmem:[%s303 + $0xa0] sm:$0xff]
                %330 = vst [vmem:[%s304 + $0x60] sm:$0xff] %v329
                %v331 = vld [vmem:[%s303 + $0xa8] sm:$0xff]
                %332 = vst [vmem:[%s304 + $0x68] sm:$0xff] %v331
                %v333 = vld [vmem:[%s303 + $0xb0] sm:$0xff]
                %334 = vst [vmem:[%s304 + $0x70] sm:$0xff] %v333
                %v335 = vld [vmem:[%s303 + $0xb8] sm:$0xff]
                %336 = vst [vmem:[%s304 + $0x78] sm:$0xff] %v335
                %v337 = vld [vmem:[%s303 + $0x100] sm:$0xff]
                %338 = vst [vmem:[%s304 + $0x80] sm:$0xff] %v337
                %v339 = vld [vmem:[%s303 + $0x108] sm:$0xff]
                %340 = vst [vmem:[%s304 + $0x88] sm:$0xff] %v339
                %v341 = vld [vmem:[%s303 + $0x110] sm:$0xff]
                %342 = vst [vmem:[%s304 + $0x90] sm:$0xff] %v341
                %v343 = vld [vmem:[%s303 + $0x118] sm:$0xff]
                %344 = vst [vmem:[%s304 + $0x98] sm:$0xff] %v343
                %v345 = vld [vmem:[%s303 + $0x120] sm:$0xff]
                %346 = vst [vmem:[%s304 + $0xa0] sm:$0xff] %v345
                %v347 = vld [vmem:[%s303 + $0x128] sm:$0xff]
                %348 = vst [vmem:[%s304 + $0xa8] sm:$0xff] %v347
                %v349 = vld [vmem:[%s303 + $0x130] sm:$0xff]
                %350 = vst [vmem:[%s304 + $0xb0] sm:$0xff] %v349
                %v351 = vld [vmem:[%s303 + $0x138] sm:$0xff]
                %352 = vst [vmem:[%s304 + $0xb8] sm:$0xff] %v351
                %v353 = vld [vmem:[%s303 + $0x180] sm:$0xff]
                %354 = vst [vmem:[%s304 + $0xc0] sm:$0xff] %v353
                %v355 = vld [vmem:[%s303 + $0x188] sm:$0xff]
                %356 = vst [vmem:[%s304 + $0xc8] sm:$0xff] %v355
                %v357 = vld [vmem:[%s303 + $0x190] sm:$0xff]
                %358 = vst [vmem:[%s304 + $0xd0] sm:$0xff] %v357
                %v359 = vld [vmem:[%s303 + $0x198] sm:$0xff]
                %360 = vst [vmem:[%s304 + $0xd8] sm:$0xff] %v359
                %v361 = vld [vmem:[%s303 + $0x1a0] sm:$0xff]
                %362 = vst [vmem:[%s304 + $0xe0] sm:$0xff] %v361
                %v363 = vld [vmem:[%s303 + $0x1a8] sm:$0xff]
                %364 = vst [vmem:[%s304 + $0xe8] sm:$0xff] %v363
                %v365 = vld [vmem:[%s303 + $0x1b0] sm:$0xff]
                %366 = vst [vmem:[%s304 + $0xf0] sm:$0xff] %v365
                %v367 = vld [vmem:[%s303 + $0x1b8] sm:$0xff]
                %368 = vst [vmem:[%s304 + $0xf8] sm:$0xff] %v367
                %v369 = vld [vmem:[%s303 + $0x200] sm:$0xff]
                %370 = vst [vmem:[%s304 + $0x100] sm:$0xff] %v369
                %v371 = vld [vmem:[%s303 + $0x208] sm:$0xff]
                %372 = vst [vmem:[%s304 + $0x108] sm:$0xff] %v371
                %v373 = vld [vmem:[%s303 + $0x210] sm:$0xff]
                %374 = vst [vmem:[%s304 + $0x110] sm:$0xff] %v373
                %v375 = vld [vmem:[%s303 + $0x218] sm:$0xff]
                %376 = vst [vmem:[%s304 + $0x118] sm:$0xff] %v375
                %v377 = vld [vmem:[%s303 + $0x220] sm:$0xff]
                %378 = vst [vmem:[%s304 + $0x120] sm:$0xff] %v377
                %v379 = vld [vmem:[%s303 + $0x228] sm:$0xff]
                %380 = vst [vmem:[%s304 + $0x128] sm:$0xff] %v379
                %v381 = vld [vmem:[%s303 + $0x230] sm:$0xff]
                %382 = vst [vmem:[%s304 + $0x130] sm:$0xff] %v381
                %v383 = vld [vmem:[%s303 + $0x238] sm:$0xff]
                %384 = vst [vmem:[%s304 + $0x138] sm:$0xff] %v383
                %v385 = vld [vmem:[%s303 + $0x280] sm:$0xff]
                %386 = vst [vmem:[%s304 + $0x140] sm:$0xff] %v385
                %v387 = vld [vmem:[%s303 + $0x288] sm:$0xff]
                %388 = vst [vmem:[%s304 + $0x148] sm:$0xff] %v387
                %v389 = vld [vmem:[%s303 + $0x290] sm:$0xff]
                %390 = vst [vmem:[%s304 + $0x150] sm:$0xff] %v389
                %v391 = vld [vmem:[%s303 + $0x298] sm:$0xff]
                %392 = vst [vmem:[%s304 + $0x158] sm:$0xff] %v391
                %v393 = vld [vmem:[%s303 + $0x2a0] sm:$0xff]
                %394 = vst [vmem:[%s304 + $0x160] sm:$0xff] %v393
                %v395 = vld [vmem:[%s303 + $0x2a8] sm:$0xff]
                %396 = vst [vmem:[%s304 + $0x168] sm:$0xff] %v395
                %v397 = vld [vmem:[%s303 + $0x2b0] sm:$0xff]
                %398 = vst [vmem:[%s304 + $0x170] sm:$0xff] %v397
                %v399 = vld [vmem:[%s303 + $0x2b8] sm:$0xff]
                %400 = vst [vmem:[%s304 + $0x178] sm:$0xff] %v399
                %v401 = vld [vmem:[%s303 + $0x300] sm:$0xff]
                %402 = vst [vmem:[%s304 + $0x180] sm:$0xff] %v401
                %v403 = vld [vmem:[%s303 + $0x308] sm:$0xff]
                %404 = vst [vmem:[%s304 + $0x188] sm:$0xff] %v403
                %v405 = vld [vmem:[%s303 + $0x310] sm:$0xff]
                %406 = vst [vmem:[%s304 + $0x190] sm:$0xff] %v405
                %v407 = vld [vmem:[%s303 + $0x318] sm:$0xff]
                %408 = vst [vmem:[%s304 + $0x198] sm:$0xff] %v407
                %v409 = vld [vmem:[%s303 + $0x320] sm:$0xff]
                %410 = vst [vmem:[%s304 + $0x1a0] sm:$0xff] %v409
                %v411 = vld [vmem:[%s303 + $0x328] sm:$0xff]
                %412 = vst [vmem:[%s304 + $0x1a8] sm:$0xff] %v411
                %v413 = vld [vmem:[%s303 + $0x330] sm:$0xff]
                %414 = vst [vmem:[%s304 + $0x1b0] sm:$0xff] %v413
                %v415 = vld [vmem:[%s303 + $0x338] sm:$0xff]
                %416 = vst [vmem:[%s304 + $0x1b8] sm:$0xff] %v415
                %v417 = vld [vmem:[%s303 + $0x380] sm:$0xff]
                %418 = vst [vmem:[%s304 + $0x1c0] sm:$0xff] %v417
                %v419 = vld [vmem:[%s303 + $0x388] sm:$0xff]
                %420 = vst [vmem:[%s304 + $0x1c8] sm:$0xff] %v419
                %v421 = vld [vmem:[%s303 + $0x390] sm:$0xff]
                %422 = vst [vmem:[%s304 + $0x1d0] sm:$0xff] %v421
                %v423 = vld [vmem:[%s303 + $0x398] sm:$0xff]
                %424 = vst [vmem:[%s304 + $0x1d8] sm:$0xff] %v423
                %v425 = vld [vmem:[%s303 + $0x3a0] sm:$0xff]
                %426 = vst [vmem:[%s304 + $0x1e0] sm:$0xff] %v425
                %v427 = vld [vmem:[%s303 + $0x3a8] sm:$0xff]
                %428 = vst [vmem:[%s304 + $0x1e8] sm:$0xff] %v427
                %v429 = vld [vmem:[%s303 + $0x3b0] sm:$0xff]
                %430 = vst [vmem:[%s304 + $0x1f0] sm:$0xff] %v429
                %v431 = vld [vmem:[%s303 + $0x3b8] sm:$0xff]
                %432 = vst [vmem:[%s304 + $0x1f8] sm:$0xff] %v431
                %v433 = vld [vmem:[%s303 + $0x400] sm:$0xff]
                %434 = vst [vmem:[%s304 + $0x200] sm:$0xff] %v433
                %v435 = vld [vmem:[%s303 + $0x408] sm:$0xff]
                %436 = vst [vmem:[%s304 + $0x208] sm:$0xff] %v435
                %v437 = vld [vmem:[%s303 + $0x410] sm:$0xff]
                %438 = vst [vmem:[%s304 + $0x210] sm:$0xff] %v437
                %v439 = vld [vmem:[%s303 + $0x418] sm:$0xff]
                %440 = vst [vmem:[%s304 + $0x218] sm:$0xff] %v439
                %v441 = vld [vmem:[%s303 + $0x420] sm:$0xff]
                %442 = vst [vmem:[%s304 + $0x220] sm:$0xff] %v441
                %v443 = vld [vmem:[%s303 + $0x428] sm:$0xff]
                %444 = vst [vmem:[%s304 + $0x228] sm:$0xff] %v443
                %v445 = vld [vmem:[%s303 + $0x430] sm:$0xff]
                %446 = vst [vmem:[%s304 + $0x230] sm:$0xff] %v445
                %v447 = vld [vmem:[%s303 + $0x438] sm:$0xff]
                %448 = vst [vmem:[%s304 + $0x238] sm:$0xff] %v447
                %v449 = vld [vmem:[%s303 + $0x480] sm:$0xff]
                %450 = vst [vmem:[%s304 + $0x240] sm:$0xff] %v449
                %v451 = vld [vmem:[%s303 + $0x488] sm:$0xff]
                %452 = vst [vmem:[%s304 + $0x248] sm:$0xff] %v451
                %v453 = vld [vmem:[%s303 + $0x490] sm:$0xff]
                %454 = vst [vmem:[%s304 + $0x250] sm:$0xff] %v453
                %v455 = vld [vmem:[%s303 + $0x498] sm:$0xff]
                %456 = vst [vmem:[%s304 + $0x258] sm:$0xff] %v455
                %v457 = vld [vmem:[%s303 + $0x4a0] sm:$0xff]
                %458 = vst [vmem:[%s304 + $0x260] sm:$0xff] %v457
                %v459 = vld [vmem:[%s303 + $0x4a8] sm:$0xff]
                %460 = vst [vmem:[%s304 + $0x268] sm:$0xff] %v459
                %v461 = vld [vmem:[%s303 + $0x4b0] sm:$0xff]
                %462 = vst [vmem:[%s304 + $0x270] sm:$0xff] %v461
                %v463 = vld [vmem:[%s303 + $0x4b8] sm:$0xff]
                %464 = vst [vmem:[%s304 + $0x278] sm:$0xff] %v463
                %v465 = vld [vmem:[%s303 + $0x500] sm:$0xff]
                %466 = vst [vmem:[%s304 + $0x280] sm:$0xff] %v465
                %v467 = vld [vmem:[%s303 + $0x508] sm:$0xff]
                %468 = vst [vmem:[%s304 + $0x288] sm:$0xff] %v467
                %v469 = vld [vmem:[%s303 + $0x510] sm:$0xff]
                %470 = vst [vmem:[%s304 + $0x290] sm:$0xff] %v469
                %v471 = vld [vmem:[%s303 + $0x518] sm:$0xff]
                %472 = vst [vmem:[%s304 + $0x298] sm:$0xff] %v471
                %v473 = vld [vmem:[%s303 + $0x520] sm:$0xff]
                %474 = vst [vmem:[%s304 + $0x2a0] sm:$0xff] %v473
                %v475 = vld [vmem:[%s303 + $0x528] sm:$0xff]
                %476 = vst [vmem:[%s304 + $0x2a8] sm:$0xff] %v475
                %v477 = vld [vmem:[%s303 + $0x530] sm:$0xff]
                %478 = vst [vmem:[%s304 + $0x2b0] sm:$0xff] %v477
                %v479 = vld [vmem:[%s303 + $0x538] sm:$0xff]
                %480 = vst [vmem:[%s304 + $0x2b8] sm:$0xff] %v479
                %v481 = vld [vmem:[%s303 + $0x580] sm:$0xff]
                %482 = vst [vmem:[%s304 + $0x2c0] sm:$0xff] %v481
                %v483 = vld [vmem:[%s303 + $0x588] sm:$0xff]
                %484 = vst [vmem:[%s304 + $0x2c8] sm:$0xff] %v483
                %v485 = vld [vmem:[%s303 + $0x590] sm:$0xff]
                %486 = vst [vmem:[%s304 + $0x2d0] sm:$0xff] %v485
                %v487 = vld [vmem:[%s303 + $0x598] sm:$0xff]
                %488 = vst [vmem:[%s304 + $0x2d8] sm:$0xff] %v487
                %v489 = vld [vmem:[%s303 + $0x5a0] sm:$0xff]
                %490 = vst [vmem:[%s304 + $0x2e0] sm:$0xff] %v489
                %v491 = vld [vmem:[%s303 + $0x5a8] sm:$0xff]
                %492 = vst [vmem:[%s304 + $0x2e8] sm:$0xff] %v491
                %v493 = vld [vmem:[%s303 + $0x5b0] sm:$0xff]
                %494 = vst [vmem:[%s304 + $0x2f0] sm:$0xff] %v493
                %v495 = vld [vmem:[%s303 + $0x5b8] sm:$0xff]
                %496 = vst [vmem:[%s304 + $0x2f8] sm:$0xff] %v495
                %v497 = vld [vmem:[%s303 + $0x600] sm:$0xff]
                %498 = vst [vmem:[%s304 + $0x300] sm:$0xff] %v497
                %v499 = vld [vmem:[%s303 + $0x608] sm:$0xff]
                %500 = vst [vmem:[%s304 + $0x308] sm:$0xff] %v499
                %v501 = vld [vmem:[%s303 + $0x610] sm:$0xff]
                %502 = vst [vmem:[%s304 + $0x310] sm:$0xff] %v501
                %v503 = vld [vmem:[%s303 + $0x618] sm:$0xff]
                %504 = vst [vmem:[%s304 + $0x318] sm:$0xff] %v503
                %v505 = vld [vmem:[%s303 + $0x620] sm:$0xff]
                %506 = vst [vmem:[%s304 + $0x320] sm:$0xff] %v505
                %v507 = vld [vmem:[%s303 + $0x628] sm:$0xff]
                %508 = vst [vmem:[%s304 + $0x328] sm:$0xff] %v507
                %v509 = vld [vmem:[%s303 + $0x630] sm:$0xff]
                %510 = vst [vmem:[%s304 + $0x330] sm:$0xff] %v509
                %v511 = vld [vmem:[%s303 + $0x638] sm:$0xff]
                %512 = vst [vmem:[%s304 + $0x338] sm:$0xff] %v511
                %v513 = vld [vmem:[%s303 + $0x680] sm:$0xff]
                %514 = vst [vmem:[%s304 + $0x340] sm:$0xff] %v513
                %v515 = vld [vmem:[%s303 + $0x688] sm:$0xff]
                %516 = vst [vmem:[%s304 + $0x348] sm:$0xff] %v515
                %v517 = vld [vmem:[%s303 + $0x690] sm:$0xff]
                %518 = vst [vmem:[%s304 + $0x350] sm:$0xff] %v517
                %v519 = vld [vmem:[%s303 + $0x698] sm:$0xff]
                %520 = vst [vmem:[%s304 + $0x358] sm:$0xff] %v519
                %v521 = vld [vmem:[%s303 + $0x6a0] sm:$0xff]
                %522 = vst [vmem:[%s304 + $0x360] sm:$0xff] %v521
                %v523 = vld [vmem:[%s303 + $0x6a8] sm:$0xff]
                %524 = vst [vmem:[%s304 + $0x368] sm:$0xff] %v523
                %v525 = vld [vmem:[%s303 + $0x6b0] sm:$0xff]
                %526 = vst [vmem:[%s304 + $0x370] sm:$0xff] %v525
                %v527 = vld [vmem:[%s303 + $0x6b8] sm:$0xff]
                %528 = vst [vmem:[%s304 + $0x378] sm:$0xff] %v527
                %v529 = vld [vmem:[%s303 + $0x700] sm:$0xff]
                %530 = vst [vmem:[%s304 + $0x380] sm:$0xff] %v529
                %v531 = vld [vmem:[%s303 + $0x708] sm:$0xff]
                %532 = vst [vmem:[%s304 + $0x388] sm:$0xff] %v531
                %v533 = vld [vmem:[%s303 + $0x710] sm:$0xff]
                %534 = vst [vmem:[%s304 + $0x390] sm:$0xff] %v533
                %v535 = vld [vmem:[%s303 + $0x718] sm:$0xff]
                %536 = vst [vmem:[%s304 + $0x398] sm:$0xff] %v535
                %v537 = vld [vmem:[%s303 + $0x720] sm:$0xff]
                %538 = vst [vmem:[%s304 + $0x3a0] sm:$0xff] %v537
                %v539 = vld [vmem:[%s303 + $0x728] sm:$0xff]
                %540 = vst [vmem:[%s304 + $0x3a8] sm:$0xff] %v539
                %v541 = vld [vmem:[%s303 + $0x730] sm:$0xff]
                %542 = vst [vmem:[%s304 + $0x3b0] sm:$0xff] %v541
                %v543 = vld [vmem:[%s303 + $0x738] sm:$0xff]
                %544 = vst [vmem:[%s304 + $0x3b8] sm:$0xff] %v543
                %v545 = vld [vmem:[%s303 + $0x780] sm:$0xff]
                %546 = vst [vmem:[%s304 + $0x3c0] sm:$0xff] %v545
                %v547 = vld [vmem:[%s303 + $0x788] sm:$0xff]
                %548 = vst [vmem:[%s304 + $0x3c8] sm:$0xff] %v547
                %v549 = vld [vmem:[%s303 + $0x790] sm:$0xff]
                %550 = vst [vmem:[%s304 + $0x3d0] sm:$0xff] %v549
                %v551 = vld [vmem:[%s303 + $0x798] sm:$0xff]
                %552 = vst [vmem:[%s304 + $0x3d8] sm:$0xff] %v551
                %v553 = vld [vmem:[%s303 + $0x7a0] sm:$0xff]
                %554 = vst [vmem:[%s304 + $0x3e0] sm:$0xff] %v553
                %v555 = vld [vmem:[%s303 + $0x7a8] sm:$0xff]
                %556 = vst [vmem:[%s304 + $0x3e8] sm:$0xff] %v555
                %v557 = vld [vmem:[%s303 + $0x7b0] sm:$0xff]
                %558 = vst [vmem:[%s304 + $0x3f0] sm:$0xff] %v557
                %v559 = vld [vmem:[%s303 + $0x7b8] sm:$0xff]
                %560 = vst [vmem:[%s304 + $0x3f8] sm:$0xff] %v559
              $region53: #{decode_step.1} parent=47 // loop_footer
                %s302 = sadd.s32 1, %s298
              $region54: #{decode_step.1} parent=47 // loop_footer_branch
                %297 = sbr.rel target = $region50
              $region55: #{decode_step.1} parent=47 // loop_exit
                _
            $region48: #{decode_step.1} parent=43 // pred_fallthru
              _
            // Predicated region
            $region56: #{decode_step.1} parent=43 // pred_check
              _
            $region57: #{decode_step.1} parent=43 // pred_check_branch
              %562 = sbr.rel target = $region59
            $region58: #{decode_step.1} parent=43 // pred_region
              _
            $region59: #{decode_step.1} parent=43 // pred_fallthru
              _
          $region44: #{decode_step.1} parent=39 // pred_fallthru
            _
          %563 = vnop
        $region40: #{decode_step.1} parent=35 // pred_fallthru
          _
        // Predicated region
        $region60: #{decode_step.1} parent=35 // pred_check
          %p564 = pneg %p175
        $region61: #{decode_step.1} parent=35 // pred_check_branch
          %566 = sbr.rel (%p564) target = $region63
        $region62: #{decode_step.1} parent=35 // pred_region
          %s567 = smul.u32 16, %s24
          %p568 = scmp.lt.s32.totalorder %s567, 31
          %s569 = scalar_select %p568, %s567, 31
          %s570 = scalar_lea.vmem %s8, %s569
          %s571 = smul.u32 16, %s24
        $region63: #{decode_step.1} parent=35 // pred_fallthru
          _
      $region36: #{decode_step.1} parent=5 // pred_fallthru
        _
      %p572 = scmp.le.s32.totalorder 1, %s24
      %p573 = scmp.lt.s32.totalorder %s24, 3
      %p574 = pnand %p572, %p573
      %p575 = pneg %p574
      // Predicated region
      $region64: #{decode_step.1} parent=5 // pred_check
        _
      $region65: #{decode_step.1} parent=5 // pred_check_branch
        %577 = sbr.rel (%p574) target = $region67
      $region66: #{decode_step.1} parent=5 // pred_region
        %s578 = ssub.s32 %s24, 1
        %s579 = sand.u32 %s142, 1
        %s580 = sand.u32 %s142, 1
        %s581 = smul.addr %s580, 1024
        %s582 = scalar_lea.vmem [#allocation9], %s581
        // Predicated region
        $region68: #{decode_step.1} parent=66 // pred_check
          %p583 = pneg %p155
        $region69: #{decode_step.1} parent=66 // pred_check_branch
          %585 = sbr.rel (%p583) target = $region71
        $region70: #{decode_step.1} parent=66 // pred_region
          _
        $region71: #{decode_step.1} parent=66 // pred_fallthru
          _
        %p586 = pneg %p45
        %p587 = pneg %p42
        %p588 = pneg %p66
        %p589 = pneg %p63
        %p590 = pneg %p87
        %p591 = pneg %p84
        %p592 = pneg %p108
        %p593 = pneg %p105
        %p594 = pneg %p129
        %p595 = pneg %p126
        %s596 = sand.u32 %s142, 1
        %s597 = sand.u32 %s142, 1
        %s598 = smul.addr %s597, 1024
        %s599 = scalar_lea.vmem [#allocation9], %s598
        %p600 = pneg %p155
        %p601 = pneg %p152
        %s602 = smul.u32 16, %s29
        %p603 = scmp.lt.s32.totalorder %s602, 31
        %s604 = scalar_select %p603, %s602, 31
        %s605 = scalar_lea.vmem %s8, %s604
        %p606 = pneg %p181
        %p607 = pneg %p178
        %p608 = pneg %p207
        %p609 = pneg %p204
        %s610 = smul.u32 16, %s29
        %p611 = scmp.lt.s32.totalorder %s610, 31
        %s612 = scalar_select %p611, %s610, 31
        %s613 = smul.addr %s612, 8
        %s614 = scalar_lea.vmem %s9, %s613
        %p615 = pneg %p228
        %p616 = pneg %p225
        %p617 = pneg %p249
        %p618 = pneg %p246
        %s619 = smul.u32 16, %s29
        %s620 = smul.u32 16, %s29
        %p621 = scmp.lt.s32.totalorder %s620, 31
        %s622 = scalar_select %p621, %s620, 31
        %s623 = scalar_lea.vmem %s8, %s622
        %s624 = smul.u32 16, %s29
        %s625 = smul.u32 16, %s29
        %p626 = scmp.lt.s32.totalorder %s625, 31
        %s627 = scalar_select %p626, %s625, 31
        %s628 = smul.addr %s627, 8
        %s629 = scalar_lea.vmem %s9, %s628
        %s630 = smul.u32 16, %s29
        %p632 = scmp.eq.s32.totalorder %s29, 0
        // Predicated region
        $region72: #{decode_step.1} parent=66 // pred_check
          %p633 = pneg %p632
        $region73: #{decode_step.1} parent=66 // pred_check_branch
          %635 = sbr.rel (%p633) target = $region75
        $region74: #{decode_step.1} parent=66 // pred_region
          %s636 = sld [smem:[#allocation8]]
          %s637 = sld [smem:[#allocation8 + $0x1]]
          %s638 = sld [smem:[#allocation8 + $0x2]]
          %s639 = sld [smem:[#allocation8 + $0x3]]
          %s640 = sld [smem:[#allocation8 + $0x4]]
          %s641 = sld [smem:[#allocation8 + $0x5]]
          %s642 = sld [smem:[#allocation8 + $0x6]]
          %s643 = sld [smem:[#allocation8 + $0x7]]
          %s644 = scalar_lea.vmem %s1, %s636
          %p646 = scmp.lt.u32.totalorder 1, 8
          %p647 = pneg %p646
          // Predicated region
          $region76: #{decode_step.1} parent=74 // pred_check
            _
          $region77: #{decode_step.1} parent=74 // pred_check_branch
            %649 = sbr.rel (%p646) target = $region79
          $region78: #{decode_step.1} parent=74 // pred_region
            %s664 = sand.u32 1, 7
            %p665 = scmp.eq.s32.totalorder %s664, 0
            %p666 = pneg %p665
            // Predicated region
            $region91: #{decode_step.1} parent=78 // pred_check
              _
            $region92: #{decode_step.1} parent=78 // pred_check_branch
              %668 = sbr.rel (%p665) target = $region94
            $region93: #{decode_step.1} parent=78 // pred_region
              %s669 = sand.u32 1, 7
              %s670 = ssub.s32 1, %s669
              %s671 = scalar_lea.vmem %s644, %s670
              %s672 = ssub.s32 1, %s669
              %s673 = scalar_lea.vmem [#allocation2], %s672
              %s674 = sshllo.u32 0, %s669
              loop: start=0, step=1, limit=1
              $region95: #{decode_step.1} parent=93 // loop_pre_header
                _
              $region96: #{decode_step.1} parent=93 // loop_header
                %s676 = sphi 0, %s680
                %p677 = scmp.ge.s32.totalorder %s676, 1
                %s681 = sphi %s671, %s671
                %s682 = sphi %s673, %s673
              $region97: #{decode_step.1} parent=93 // loop_header_branch
                %679 = sbr.rel (%p677) target = $region101
              $region98: #{decode_step.1} parent=93 // loop_body
                %v683 = vld [vmem:[%s681] sm:%s674]
                %684 = vst [vmem:[%s682] sm:%s674] %v683
              $region99: #{decode_step.1} parent=93 // loop_footer
                %s680 = sadd.s32 1, %s676
              $region100: #{decode_step.1} parent=93 // loop_footer_branch
                %675 = sbr.rel target = $region96
              $region101: #{decode_step.1} parent=93 // loop_exit
                _
            $region94: #{decode_step.1} parent=78 // pred_fallthru
              _
          $region79: #{decode_step.1} parent=74 // pred_fallthru
            _
          // Predicated region
          $region80: #{decode_step.1} parent=74 // pred_check
            %p650 = pneg %p646
          $region81: #{decode_step.1} parent=74 // pred_check_branch
            %652 = sbr.rel (%p650) target = $region83
          $region82: #{decode_step.1} parent=74 // pred_region
            %s653 = sshllo.u32 0, 1
            loop: start=0, step=1, limit=1
            $region84: #{decode_step.1} parent=82 // loop_pre_header
              _
            $region85: #{decode_step.1} parent=82 // loop_header
              %s655 = sphi 0, %s659
              %p656 = scmp.ge.s32.totalorder %s655, 1
              %s660 = sphi %s644, %s644
              %s661 = sphi [#allocation2], [#allocation2]
            $region86: #{decode_step.1} parent=82 // loop_header_branch
              %658 = sbr.rel (%p656) target = $region90
            $region87: #{decode_step.1} parent=82 // loop_body
              %v662 = vld [vmem:[%s660] sm:%s653]
              %663 = vst [vmem:[%s661] sm:%s653] %v662
            $region88: #{decode_step.1} parent=82 // loop_footer
              %s659 = sadd.s32 1, %s655
            $region89: #{decode_step.1} parent=82 // loop_footer_branch
              %654 = sbr.rel target = $region85
            $region90: #{decode_step.1} parent=82 // loop_exit
              _
          $region83: #{decode_step.1} parent=74 // pred_fallthru
            _
          // Predicated region
          $region102: #{decode_step.1} parent=74 // pred_check
            _
          $region103: #{decode_step.1} parent=74 // pred_check_branch
            %687 = sbr.rel (0) target = $region105
          $region104: #{decode_step.1} parent=74 // pred_region
            %688 = vsyncadd [#allocation6], 16
          $region105: #{decode_step.1} parent=74 // pred_fallthru
            _
          %s689 = scalar_lea.vmem %s1, %s637
          %s690 = scalar_lea.vmem [#allocation2], 1
          %s691 = scalar_lea.sflag [#allocation6], 1
          %p693 = scmp.lt.u32.totalorder 1, 8
          %p694 = pneg %p693
          // Predicated region
          $region106: #{decode_step.1} parent=74 // pred_check
            _
          $region107: #{decode_step.1} parent=74 // pred_check_branch
            %696 = sbr.rel (%p693) target = $region109
          $region108: #{decode_step.1} parent=74 // pred_region
            %s711 = sand.u32 1, 7
            %p712 = scmp.eq.s32.totalorder %s711, 0
            %p713 = pneg %p712
            // Predicated region
            $region121: #{decode_step.1} parent=108 // pred_check
              _
            $region122: #{decode_step.1} parent=108 // pred_check_branch
              %715 = sbr.rel (%p712) target = $region124
            $region123: #{decode_step.1} parent=108 // pred_region
              %s716 = sand.u32 1, 7
              %s717 = ssub.s32 1, %s716
              %s718 = scalar_lea.vmem %s689, %s717
              %s719 = ssub.s32 1, %s716
              %s720 = scalar_lea.vmem %s690, %s719 [#allocation2]
              %s721 = sshllo.u32 0, %s716
              loop: start=0, step=1, limit=1
              $region125: #{decode_step.1} parent=123 // loop_pre_header
                _
              $region126: #{decode_step.1} parent=123 // loop_header
                %s723 = sphi 0, %s727
                %p724 = scmp.ge.s32.totalorder %s723, 1
                %s728 = sphi %s718, %s718
                %s729 = sphi %s720, %s720
              $region127: #{decode_step.1} parent=123 // loop_header_branch
                %726 = sbr.rel (%p724) target = $region131
              $region128: #{decode_step.1} parent=123 // loop_body
                %v730 = vld [vmem:[%s728] sm:%s721]
                %731 = vst [vmem:[%s729] sm:%s721] %v730
              $region129: #{decode_step.1} parent=123 // loop_footer
                %s727 = sadd.s32 1, %s723
              $region130: #{decode_step.1} parent=123 // loop_footer_branch
                %722 = sbr.rel target = $region126
              $region131: #{decode_step.1} parent=123 // loop_exit
                _
            $region124: #{decode_step.1} parent=108 // pred_fallthru
              _
          $region109: #{decode_step.1} parent=74 // pred_fallthru
            _
          // Predicated region
          $region110: #{decode_step.1} parent=74 // pred_check
            %p697 = pneg %p693
          $region111: #{decode_step.1} parent=74 // pred_check_branch
            %699 = sbr.rel (%p697) target = $region113
          $region112: #{decode_step.1} parent=74 // pred_region
            %s700 = sshllo.u32 0, 1
            loop: start=0, step=1, limit=1
            $region114: #{decode_step.1} parent=112 // loop_pre_header
              _
            $region115: #{decode_step.1} parent=112 // loop_header
              %s702 = sphi 0, %s706
              %p703 = scmp.ge.s32.totalorder %s702, 1
              %s707 = sphi %s689, %s689
              %s708 = sphi %s690, %s690
            $region116: #{decode_step.1} parent=112 // loop_header_branch
              %705 = sbr.rel (%p703) target = $region120
            $region117: #{decode_step.1} parent=112 // loop_body
              %v709 = vld [vmem:[%s707] sm:%s700]
              %710 = vst [vmem:[%s708] sm:%s700] %v709
            $region118: #{decode_step.1} parent=112 // loop_footer
              %s706 = sadd.s32 1, %s702
            $region119: #{decode_step.1} parent=112 // loop_footer_branch
              %701 = sbr.rel target = $region115
            $region120: #{decode_step.1} parent=112 // loop_exit
              _
          $region113: #{decode_step.1} parent=74 // pred_fallthru
            _
          // Predicated region
          $region132: #{decode_step.1} parent=74 // pred_check
            _
          $region133: #{decode_step.1} parent=74 // pred_check_branch
            %734 = sbr.rel (0) target = $region135
          $region134: #{decode_step.1} parent=74 // pred_region
            %735 = vsyncadd %s691, 16
          $region135: #{decode_step.1} parent=74 // pred_fallthru
            _
          %s736 = scalar_lea.vmem %s1, %s638
          %s737 = scalar_lea.vmem [#allocation2], 2
          %s738 = scalar_lea.sflag [#allocation6], 2
          %p740 = scmp.lt.u32.totalorder 1, 8
          %p741 = pneg %p740
          // Predicated region
          $region136: #{decode_step.1} parent=74 // pred_check
            _
          $region137: #{decode_step.1} parent=74 // pred_check_branch
            %743 = sbr.rel (%p740) target = $region139
          $region138: #{decode_step.1} parent=74 // pred_region
            %s758 = sand.u32 1, 7
            %p759 = scmp.eq.s32.totalorder %s758, 0
            %p760 = pneg %p759
            // Predicated region
            $region151: #{decode_step.1} parent=138 // pred_check
              _
            $region152: #{decode_step.1} parent=138 // pred_check_branch
              %762 = sbr.rel (%p759) target = $region154
            $region153: #{decode_step.1} parent=138 // pred_region
              %s763 = sand.u32 1, 7
              %s764 = ssub.s32 1, %s763
              %s765 = scalar_lea.vmem %s736, %s764
              %s766 = ssub.s32 1, %s763
              %s767 = scalar_lea.vmem %s737, %s766 [#allocation2]
              %s768 = sshllo.u32 0, %s763
              loop: start=0, step=1, limit=1
              $region155: #{decode_step.1} parent=153 // loop_pre_header
                _
              $region156: #{decode_step.1} parent=153 // loop_header
                %s770 = sphi 0, %s774
                %p771 = scmp.ge.s32.totalorder %s770, 1
                %s775 = sphi %s765, %s765
                %s776 = sphi %s767, %s767
              $region157: #{decode_step.1} parent=153 // loop_header_branch
                %773 = sbr.rel (%p771) target = $region161
              $region158: #{decode_step.1} parent=153 // loop_body
                %v777 = vld [vmem:[%s775] sm:%s768]
                %778 = vst [vmem:[%s776] sm:%s768] %v777
              $region159: #{decode_step.1} parent=153 // loop_footer
                %s774 = sadd.s32 1, %s770
              $region160: #{decode_step.1} parent=153 // loop_footer_branch
                %769 = sbr.rel target = $region156
              $region161: #{decode_step.1} parent=153 // loop_exit
                _
            $region154: #{decode_step.1} parent=138 // pred_fallthru
              _
          $region139: #{decode_step.1} parent=74 // pred_fallthru
            _
          // Predicated region
          $region140: #{decode_step.1} parent=74 // pred_check
            %p744 = pneg %p740
          $region141: #{decode_step.1} parent=74 // pred_check_branch
            %746 = sbr.rel (%p744) target = $region143
          $region142: #{decode_step.1} parent=74 // pred_region
            %s747 = sshllo.u32 0, 1
            loop: start=0, step=1, limit=1
            $region144: #{decode_step.1} parent=142 // loop_pre_header
              _
            $region145: #{decode_step.1} parent=142 // loop_header
              %s749 = sphi 0, %s753
              %p750 = scmp.ge.s32.totalorder %s749, 1
              %s754 = sphi %s736, %s736
              %s755 = sphi %s737, %s737
            $region146: #{decode_step.1} parent=142 // loop_header_branch
              %752 = sbr.rel (%p750) target = $region150
            $region147: #{decode_step.1} parent=142 // loop_body
              %v756 = vld [vmem:[%s754] sm:%s747]
              %757 = vst [vmem:[%s755] sm:%s747] %v756
            $region148: #{decode_step.1} parent=142 // loop_footer
              %s753 = sadd.s32 1, %s749
            $region149: #{decode_step.1} parent=142 // loop_footer_branch
              %748 = sbr.rel target = $region145
            $region150: #{decode_step.1} parent=142 // loop_exit
              _
          $region143: #{decode_step.1} parent=74 // pred_fallthru
            _
          // Predicated region
          $region162: #{decode_step.1} parent=74 // pred_check
            _
          $region163: #{decode_step.1} parent=74 // pred_check_branch
            %781 = sbr.rel (0) target = $region165
          $region164: #{decode_step.1} parent=74 // pred_region
            %782 = vsyncadd %s738, 16
          $region165: #{decode_step.1} parent=74 // pred_fallthru
            _
          %s783 = scalar_lea.vmem %s1, %s639
          %s784 = scalar_lea.vmem [#allocation2], 3
          %s785 = scalar_lea.sflag [#allocation6], 3
          %p787 = scmp.lt.u32.totalorder 1, 8
          %p788 = pneg %p787
          // Predicated region
          $region166: #{decode_step.1} parent=74 // pred_check
            _
          $region167: #{decode_step.1} parent=74 // pred_check_branch
            %790 = sbr.rel (%p787) target = $region169
          $region168: #{decode_step.1} parent=74 // pred_region
            %s805 = sand.u32 1, 7
            %p806 = scmp.eq.s32.totalorder %s805, 0
            %p807 = pneg %p806
            // Predicated region
            $region181: #{decode_step.1} parent=168 // pred_check
              _
            $region182: #{decode_step.1} parent=168 // pred_check_branch
              %809 = sbr.rel (%p806) target = $region184
            $region183: #{decode_step.1} parent=168 // pred_region
              %s810 = sand.u32 1, 7
              %s811 = ssub.s32 1, %s810
              %s812 = scalar_lea.vmem %s783, %s811
              %s813 = ssub.s32 1, %s810
              %s814 = scalar_lea.vmem %s784, %s813 [#allocation2]
              %s815 = sshllo.u32 0, %s810
              loop: start=0, step=1, limit=1
              $region185: #{decode_step.1} parent=183 // loop_pre_header
                _
              $region186: #{decode_step.1} parent=183 // loop_header
                %s817 = sphi 0, %s821
                %p818 = scmp.ge.s32.totalorder %s817, 1
                %s822 = sphi %s812, %s812
                %s823 = sphi %s814, %s814
              $region187: #{decode_step.1} parent=183 // loop_header_branch
                %820 = sbr.rel (%p818) target = $region191
              $region188: #{decode_step.1} parent=183 // loop_body
                %v824 = vld [vmem:[%s822] sm:%s815]
                %825 = vst [vmem:[%s823] sm:%s815] %v824
              $region189: #{decode_step.1} parent=183 // loop_footer
                %s821 = sadd.s32 1, %s817
              $region190: #{decode_step.1} parent=183 // loop_footer_branch
                %816 = sbr.rel target = $region186
              $region191: #{decode_step.1} parent=183 // loop_exit
                _
            $region184: #{decode_step.1} parent=168 // pred_fallthru
              _
          $region169: #{decode_step.1} parent=74 // pred_fallthru
            _
          // Predicated region
          $region170: #{decode_step.1} parent=74 // pred_check
            %p791 = pneg %p787
          $region171: #{decode_step.1} parent=74 // pred_check_branch
            %793 = sbr.rel (%p791) target = $region173
          $region172: #{decode_step.1} parent=74 // pred_region
            %s794 = sshllo.u32 0, 1
            loop: start=0, step=1, limit=1
            $region174: #{decode_step.1} parent=172 // loop_pre_header
              _
            $region175: #{decode_step.1} parent=172 // loop_header
              %s796 = sphi 0, %s800
              %p797 = scmp.ge.s32.totalorder %s796, 1
              %s801 = sphi %s783, %s783
              %s802 = sphi %s784, %s784
            $region176: #{decode_step.1} parent=172 // loop_header_branch
              %799 = sbr.rel (%p797) target = $region180
            $region177: #{decode_step.1} parent=172 // loop_body
              %v803 = vld [vmem:[%s801] sm:%s794]
              %804 = vst [vmem:[%s802] sm:%s794] %v803
            $region178: #{decode_step.1} parent=172 // loop_footer
              %s800 = sadd.s32 1, %s796
            $region179: #{decode_step.1} parent=172 // loop_footer_branch
              %795 = sbr.rel target = $region175
            $region180: #{decode_step.1} parent=172 // loop_exit
              _
          $region173: #{decode_step.1} parent=74 // pred_fallthru
            _
          // Predicated region
          $region192: #{decode_step.1} parent=74 // pred_check
            _
          $region193: #{decode_step.1} parent=74 // pred_check_branch
            %828 = sbr.rel (0) target = $region195
          $region194: #{decode_step.1} parent=74 // pred_region
            %829 = vsyncadd %s785, 16
          $region195: #{decode_step.1} parent=74 // pred_fallthru
            _
          %s830 = scalar_lea.vmem %s1, %s640
          %s831 = scalar_lea.vmem [#allocation2], 4
          %s832 = scalar_lea.sflag [#allocation6], 4
          %p834 = scmp.lt.u32.totalorder 1, 8
          %p835 = pneg %p834
          // Predicated region
          $region196: #{decode_step.1} parent=74 // pred_check
            _
          $region197: #{decode_step.1} parent=74 // pred_check_branch
            %837 = sbr.rel (%p834) target = $region199
          $region198: #{decode_step.1} parent=74 // pred_region
            %s852 = sand.u32 1, 7
            %p853 = scmp.eq.s32.totalorder %s852, 0
            %p854 = pneg %p853
            // Predicated region
            $region211: #{decode_step.1} parent=198 // pred_check
              _
            $region212: #{decode_step.1} parent=198 // pred_check_branch
              %856 = sbr.rel (%p853) target = $region214
            $region213: #{decode_step.1} parent=198 // pred_region
              %s857 = sand.u32 1, 7
              %s858 = ssub.s32 1, %s857
              %s859 = scalar_lea.vmem %s830, %s858
              %s860 = ssub.s32 1, %s857
              %s861 = scalar_lea.vmem %s831, %s860 [#allocation2]
              %s862 = sshllo.u32 0, %s857
              loop: start=0, step=1, limit=1
              $region215: #{decode_step.1} parent=213 // loop_pre_header
                _
              $region216: #{decode_step.1} parent=213 // loop_header
                %s864 = sphi 0, %s868
                %p865 = scmp.ge.s32.totalorder %s864, 1
                %s869 = sphi %s859, %s859
                %s870 = sphi %s861, %s861
              $region217: #{decode_step.1} parent=213 // loop_header_branch
                %867 = sbr.rel (%p865) target = $region221
              $region218: #{decode_step.1} parent=213 // loop_body
                %v871 = vld [vmem:[%s869] sm:%s862]
                %872 = vst [vmem:[%s870] sm:%s862] %v871
              $region219: #{decode_step.1} parent=213 // loop_footer
                %s868 = sadd.s32 1, %s864
              $region220: #{decode_step.1} parent=213 // loop_footer_branch
                %863 = sbr.rel target = $region216
              $region221: #{decode_step.1} parent=213 // loop_exit
                _
            $region214: #{decode_step.1} parent=198 // pred_fallthru
              _
          $region199: #{decode_step.1} parent=74 // pred_fallthru
            _
          // Predicated region
          $region200: #{decode_step.1} parent=74 // pred_check
            %p838 = pneg %p834
          $region201: #{decode_step.1} parent=74 // pred_check_branch
            %840 = sbr.rel (%p838) target = $region203
          $region202: #{decode_step.1} parent=74 // pred_region
            %s841 = sshllo.u32 0, 1
            loop: start=0, step=1, limit=1
            $region204: #{decode_step.1} parent=202 // loop_pre_header
              _
            $region205: #{decode_step.1} parent=202 // loop_header
              %s843 = sphi 0, %s847
              %p844 = scmp.ge.s32.totalorder %s843, 1
              %s848 = sphi %s830, %s830
              %s849 = sphi %s831, %s831
            $region206: #{decode_step.1} parent=202 // loop_header_branch
              %846 = sbr.rel (%p844) target = $region210
            $region207: #{decode_step.1} parent=202 // loop_body
              %v850 = vld [vmem:[%s848] sm:%s841]
              %851 = vst [vmem:[%s849] sm:%s841] %v850
            $region208: #{decode_step.1} parent=202 // loop_footer
              %s847 = sadd.s32 1, %s843
            $region209: #{decode_step.1} parent=202 // loop_footer_branch
              %842 = sbr.rel target = $region205
            $region210: #{decode_step.1} parent=202 // loop_exit
              _
          $region203: #{decode_step.1} parent=74 // pred_fallthru
            _
          // Predicated region
          $region222: #{decode_step.1} parent=74 // pred_check
            _
          $region223: #{decode_step.1} parent=74 // pred_check_branch
            %875 = sbr.rel (0) target = $region225
          $region224: #{decode_step.1} parent=74 // pred_region
            %876 = vsyncadd %s832, 16
          $region225: #{decode_step.1} parent=74 // pred_fallthru
            _
          %s877 = scalar_lea.vmem %s1, %s641
          %s878 = scalar_lea.vmem [#allocation2], 5
          %s879 = scalar_lea.sflag [#allocation6], 5
          %p881 = scmp.lt.u32.totalorder 1, 8
          %p882 = pneg %p881
          // Predicated region
          $region226: #{decode_step.1} parent=74 // pred_check
            _
          $region227: #{decode_step.1} parent=74 // pred_check_branch
            %884 = sbr.rel (%p881) target = $region229
          $region228: #{decode_step.1} parent=74 // pred_region
            %s899 = sand.u32 1, 7
            %p900 = scmp.eq.s32.totalorder %s899, 0
            %p901 = pneg %p900
            // Predicated region
            $region241: #{decode_step.1} parent=228 // pred_check
              _
            $region242: #{decode_step.1} parent=228 // pred_check_branch
              %903 = sbr.rel (%p900) target = $region244
            $region243: #{decode_step.1} parent=228 // pred_region
              %s904 = sand.u32 1, 7
              %s905 = ssub.s32 1, %s904
              %s906 = scalar_lea.vmem %s877, %s905
              %s907 = ssub.s32 1, %s904
              %s908 = scalar_lea.vmem %s878, %s907 [#allocation2]
              %s909 = sshllo.u32 0, %s904
              loop: start=0, step=1, limit=1
              $region245: #{decode_step.1} parent=243 // loop_pre_header
                _
              $region246: #{decode_step.1} parent=243 // loop_header
                %s911 = sphi 0, %s915
                %p912 = scmp.ge.s32.totalorder %s911, 1
                %s916 = sphi %s906, %s906
                %s917 = sphi %s908, %s908
              $region247: #{decode_step.1} parent=243 // loop_header_branch
                %914 = sbr.rel (%p912) target = $region251
              $region248: #{decode_step.1} parent=243 // loop_body
                %v918 = vld [vmem:[%s916] sm:%s909]
                %919 = vst [vmem:[%s917] sm:%s909] %v918
              $region249: #{decode_step.1} parent=243 // loop_footer
                %s915 = sadd.s32 1, %s911
              $region250: #{decode_step.1} parent=243 // loop_footer_branch
                %910 = sbr.rel target = $region246
              $region251: #{decode_step.1} parent=243 // loop_exit
                _
            $region244: #{decode_step.1} parent=228 // pred_fallthru
              _
          $region229: #{decode_step.1} parent=74 // pred_fallthru
            _
          // Predicated region
          $region230: #{decode_step.1} parent=74 // pred_check
            %p885 = pneg %p881
          $region231: #{decode_step.1} parent=74 // pred_check_branch
            %887 = sbr.rel (%p885) target = $region233
          $region232: #{decode_step.1} parent=74 // pred_region
            %s888 = sshllo.u32 0, 1
            loop: start=0, step=1, limit=1
            $region234: #{decode_step.1} parent=232 // loop_pre_header
              _
            $region235: #{decode_step.1} parent=232 // loop_header
              %s890 = sphi 0, %s894
              %p891 = scmp.ge.s32.totalorder %s890, 1
              %s895 = sphi %s877, %s877
              %s896 = sphi %s878, %s878
            $region236: #{decode_step.1} parent=232 // loop_header_branch
              %893 = sbr.rel (%p891) target = $region240
            $region237: #{decode_step.1} parent=232 // loop_body
              %v897 = vld [vmem:[%s895] sm:%s888]
              %898 = vst [vmem:[%s896] sm:%s888] %v897
            $region238: #{decode_step.1} parent=232 // loop_footer
              %s894 = sadd.s32 1, %s890
            $region239: #{decode_step.1} parent=232 // loop_footer_branch
              %889 = sbr.rel target = $region235
            $region240: #{decode_step.1} parent=232 // loop_exit
              _
          $region233: #{decode_step.1} parent=74 // pred_fallthru
            _
          // Predicated region
          $region252: #{decode_step.1} parent=74 // pred_check
            _
          $region253: #{decode_step.1} parent=74 // pred_check_branch
            %922 = sbr.rel (0) target = $region255
          $region254: #{decode_step.1} parent=74 // pred_region
            %923 = vsyncadd %s879, 16
          $region255: #{decode_step.1} parent=74 // pred_fallthru
            _
          %s924 = scalar_lea.vmem %s1, %s642
          %s925 = scalar_lea.vmem [#allocation2], 6
          %s926 = scalar_lea.sflag [#allocation6], 6
          %p928 = scmp.lt.u32.totalorder 1, 8
          %p929 = pneg %p928
          // Predicated region
          $region256: #{decode_step.1} parent=74 // pred_check
            _
          $region257: #{decode_step.1} parent=74 // pred_check_branch
            %931 = sbr.rel (%p928) target = $region259
          $region258: #{decode_step.1} parent=74 // pred_region
            %s946 = sand.u32 1, 7
            %p947 = scmp.eq.s32.totalorder %s946, 0
            %p948 = pneg %p947
            // Predicated region
            $region271: #{decode_step.1} parent=258 // pred_check
              _
            $region272: #{decode_step.1} parent=258 // pred_check_branch
              %950 = sbr.rel (%p947) target = $region274
            $region273: #{decode_step.1} parent=258 // pred_region
              %s951 = sand.u32 1, 7
              %s952 = ssub.s32 1, %s951
              %s953 = scalar_lea.vmem %s924, %s952
              %s954 = ssub.s32 1, %s951
              %s955 = scalar_lea.vmem %s925, %s954 [#allocation2]
              %s956 = sshllo.u32 0, %s951
              loop: start=0, step=1, limit=1
              $region275: #{decode_step.1} parent=273 // loop_pre_header
                _
              $region276: #{decode_step.1} parent=273 // loop_header
                %s958 = sphi 0, %s962
                %p959 = scmp.ge.s32.totalorder %s958, 1
                %s963 = sphi %s953, %s953
                %s964 = sphi %s955, %s955
              $region277: #{decode_step.1} parent=273 // loop_header_branch
                %961 = sbr.rel (%p959) target = $region281
              $region278: #{decode_step.1} parent=273 // loop_body
                %v965 = vld [vmem:[%s963] sm:%s956]
                %966 = vst [vmem:[%s964] sm:%s956] %v965
              $region279: #{decode_step.1} parent=273 // loop_footer
                %s962 = sadd.s32 1, %s958
              $region280: #{decode_step.1} parent=273 // loop_footer_branch
                %957 = sbr.rel target = $region276
              $region281: #{decode_step.1} parent=273 // loop_exit
                _
            $region274: #{decode_step.1} parent=258 // pred_fallthru
              _
          $region259: #{decode_step.1} parent=74 // pred_fallthru
            _
          // Predicated region
          $region260: #{decode_step.1} parent=74 // pred_check
            %p932 = pneg %p928
          $region261: #{decode_step.1} parent=74 // pred_check_branch
            %934 = sbr.rel (%p932) target = $region263
          $region262: #{decode_step.1} parent=74 // pred_region
            %s935 = sshllo.u32 0, 1
            loop: start=0, step=1, limit=1
            $region264: #{decode_step.1} parent=262 // loop_pre_header
              _
            $region265: #{decode_step.1} parent=262 // loop_header
              %s937 = sphi 0, %s941
              %p938 = scmp.ge.s32.totalorder %s937, 1
              %s942 = sphi %s924, %s924
              %s943 = sphi %s925, %s925
            $region266: #{decode_step.1} parent=262 // loop_header_branch
              %940 = sbr.rel (%p938) target = $region270
            $region267: #{decode_step.1} parent=262 // loop_body
              %v944 = vld [vmem:[%s942] sm:%s935]
              %945 = vst [vmem:[%s943] sm:%s935] %v944
            $region268: #{decode_step.1} parent=262 // loop_footer
              %s941 = sadd.s32 1, %s937
            $region269: #{decode_step.1} parent=262 // loop_footer_branch
              %936 = sbr.rel target = $region265
            $region270: #{decode_step.1} parent=262 // loop_exit
              _
          $region263: #{decode_step.1} parent=74 // pred_fallthru
            _
          // Predicated region
          $region282: #{decode_step.1} parent=74 // pred_check
            _
          $region283: #{decode_step.1} parent=74 // pred_check_branch
            %969 = sbr.rel (0) target = $region285
          $region284: #{decode_step.1} parent=74 // pred_region
            %970 = vsyncadd %s926, 16
          $region285: #{decode_step.1} parent=74 // pred_fallthru
            _
          %s971 = scalar_lea.vmem %s1, %s643
          %s972 = scalar_lea.vmem [#allocation2], 7
          %s973 = scalar_lea.sflag [#allocation6], 7
          %p975 = scmp.lt.u32.totalorder 1, 8
          %p976 = pneg %p975
          // Predicated region
          $region286: #{decode_step.1} parent=74 // pred_check
            _
          $region287: #{decode_step.1} parent=74 // pred_check_branch
            %978 = sbr.rel (%p975) target = $region289
          $region288: #{decode_step.1} parent=74 // pred_region
            %s993 = sand.u32 1, 7
            %p994 = scmp.eq.s32.totalorder %s993, 0
            %p995 = pneg %p994
            // Predicated region
            $region301: #{decode_step.1} parent=288 // pred_check
              _
            $region302: #{decode_step.1} parent=288 // pred_check_branch
              %997 = sbr.rel (%p994) target = $region304
            $region303: #{decode_step.1} parent=288 // pred_region
              %s998 = sand.u32 1, 7
              %s999 = ssub.s32 1, %s998
              %s1000 = scalar_lea.vmem %s971, %s999
              %s1001 = ssub.s32 1, %s998
              %s1002 = scalar_lea.vmem %s972, %s1001 [#allocation2]
              %s1003 = sshllo.u32 0, %s998
              loop: start=0, step=1, limit=1
              $region305: #{decode_step.1} parent=303 // loop_pre_header
                _
              $region306: #{decode_step.1} parent=303 // loop_header
                %s1005 = sphi 0, %s1009
                %p1006 = scmp.ge.s32.totalorder %s1005, 1
                %s1010 = sphi %s1000, %s1000
                %s1011 = sphi %s1002, %s1002
              $region307: #{decode_step.1} parent=303 // loop_header_branch
                %1008 = sbr.rel (%p1006) target = $region311
              $region308: #{decode_step.1} parent=303 // loop_body
                %v1012 = vld [vmem:[%s1010] sm:%s1003]
                %1013 = vst [vmem:[%s1011] sm:%s1003] %v1012
              $region309: #{decode_step.1} parent=303 // loop_footer
                %s1009 = sadd.s32 1, %s1005
              $region310: #{decode_step.1} parent=303 // loop_footer_branch
                %1004 = sbr.rel target = $region306
              $region311: #{decode_step.1} parent=303 // loop_exit
                _
            $region304: #{decode_step.1} parent=288 // pred_fallthru
              _
          $region289: #{decode_step.1} parent=74 // pred_fallthru
            _
          // Predicated region
          $region290: #{decode_step.1} parent=74 // pred_check
            %p979 = pneg %p975
          $region291: #{decode_step.1} parent=74 // pred_check_branch
            %981 = sbr.rel (%p979) target = $region293
          $region292: #{decode_step.1} parent=74 // pred_region
            %s982 = sshllo.u32 0, 1
            loop: start=0, step=1, limit=1
            $region294: #{decode_step.1} parent=292 // loop_pre_header
              _
            $region295: #{decode_step.1} parent=292 // loop_header
              %s984 = sphi 0, %s988
              %p985 = scmp.ge.s32.totalorder %s984, 1
              %s989 = sphi %s971, %s971
              %s990 = sphi %s972, %s972
            $region296: #{decode_step.1} parent=292 // loop_header_branch
              %987 = sbr.rel (%p985) target = $region300
            $region297: #{decode_step.1} parent=292 // loop_body
              %v991 = vld [vmem:[%s989] sm:%s982]
              %992 = vst [vmem:[%s990] sm:%s982] %v991
            $region298: #{decode_step.1} parent=292 // loop_footer
              %s988 = sadd.s32 1, %s984
            $region299: #{decode_step.1} parent=292 // loop_footer_branch
              %983 = sbr.rel target = $region295
            $region300: #{decode_step.1} parent=292 // loop_exit
              _
          $region293: #{decode_step.1} parent=74 // pred_fallthru
            _
          // Predicated region
          $region312: #{decode_step.1} parent=74 // pred_check
            _
          $region313: #{decode_step.1} parent=74 // pred_check_branch
            %1016 = sbr.rel (0) target = $region315
          $region314: #{decode_step.1} parent=74 // pred_region
            %1017 = vsyncadd %s973, 16
          $region315: #{decode_step.1} parent=74 // pred_fallthru
            _
          %1019 = dma.done [#allocation6], 16
          %1021 = dma.done %s691, 16
          %1023 = dma.done %s738, 16
          %1025 = dma.done %s785, 16
          %1027 = dma.done %s832, 16
          %1029 = dma.done %s879, 16
          %1031 = dma.done %s926, 16
          %1033 = dma.done %s973, 16
          %v1034 = vld [vmem:[#allocation2] sm:$0xff]
          %v1035 = vmax.f32 %v1034, 0.0
          %v1036 = vpack.c.bf16 %v1035, %v1035
          %v1037 = vld [vmem:[%s2] sm:$0xff]
          %v1038 = vld [vmem:[%s3] sm:$0xff]
          %v1039 = vld [vmem:[%s3 + $0x8] sm:$0xf]
          %v1040 = vld [vmem:[%s3 + $0xc] sm:$0xff]
          %v1041 = vld [vmem:[%s3 + $0x14] sm:$0xf]
          %v1042 = vld [vmem:[%s3 + $0x18] sm:$0xff]
          %v1043 = vld [vmem:[%s3 + $0x20] sm:$0xf]
          %v1044 = vld [vmem:[%s3 + $0x24] sm:$0xff]
          %v1045 = vld [vmem:[%s3 + $0x2c] sm:$0xf]
          %v1046 = vld [vmem:[%s3 + $0x30] sm:$0xff]
          %v1047 = vld [vmem:[%s3 + $0x38] sm:$0xf]
          %v1048 = vld [vmem:[%s3 + $0x3c] sm:$0xff]
          %v1049 = vld [vmem:[%s3 + $0x44] sm:$0xf]
          %v1050 = vld [vmem:[%s3 + $0x48] sm:$0xff]
          %v1051 = vld [vmem:[%s3 + $0x50] sm:$0xf]
          %v1052 = vld [vmem:[%s3 + $0x54] sm:$0xff]
          %v1053 = vld [vmem:[%s3 + $0x5c] sm:$0xf]
          %v1054 = vld [vmem:[%s3 + $0x60] sm:$0xff]
          %v1055 = vld [vmem:[%s3 + $0x68] sm:$0xf]
          %v1056 = vld [vmem:[%s3 + $0x6c] sm:$0xff]
          %v1057 = vld [vmem:[%s3 + $0x74] sm:$0xf]
          %v1058 = vld [vmem:[%s3 + $0x78] sm:$0xff]
          %v1059 = vld [vmem:[%s3 + $0x80] sm:$0xf]
          %v1060 = vld [vmem:[%s3 + $0x84] sm:$0xff]
          %v1061 = vld [vmem:[%s3 + $0x8c] sm:$0xf]
          %v1062 = vld [vmem:[%s3 + $0x90] sm:$0xff]
          %v1063 = vld [vmem:[%s3 + $0x98] sm:$0xf]
          %v1064 = vld [vmem:[%s3 + $0x9c] sm:$0xff]
          %v1065 = vld [vmem:[%s3 + $0xa4] sm:$0xf]
          %v1066 = vld [vmem:[%s3 + $0xa8] sm:$0xff]
          %v1067 = vld [vmem:[%s3 + $0xb0] sm:$0xf]
          %v1068 = vld [vmem:[%s3 + $0xb4] sm:$0xff]
          %v1069 = vld [vmem:[%s3 + $0xbc] sm:$0xf]
          %v1070 = vld [vmem:[%s5] sm:$0x7]
          %v1072 = vlaneseq
          %v1073 = vshrl.u32 %v1072, 7
          %v1074 = vsub.s32 0, %v1073
          %v1075 = vrot.slane %v1070, %v1074
          %v1076 = vlaneseq
          %v1077 = vshrl.u32 %v1076, 7
          %v1078 = vsub.s32 1, %v1077
          %v1079 = vrot.slane %v1070, %v1078
          %v1080 = vlaneseq
          %v1081 = vshrl.u32 %v1080, 7
          %v1082 = vsub.s32 2, %v1081
          %v1083 = vrot.slane %v1070, %v1082
          %v1119 = vunpack.c.l.b16 %v1038
          %v1120 = vunpack.c.h.b16 %v1038
          %v1121 = vunpack.c.l.b16 %v1039
          %v1122 = vunpack.c.l.b16 %v1040
          %v1123 = vunpack.c.h.b16 %v1040
          %v1124 = vunpack.c.l.b16 %v1041
          %v1125 = vunpack.c.l.b16 %v1042
          %v1126 = vunpack.c.h.b16 %v1042
          %v1127 = vunpack.c.l.b16 %v1043
          %v1128 = vunpack.c.l.b16 %v1044
          %v1129 = vunpack.c.h.b16 %v1044
          %v1130 = vunpack.c.l.b16 %v1045
          %v1131 = vunpack.c.l.b16 %v1046
          %v1132 = vunpack.c.h.b16 %v1046
          %v1133 = vunpack.c.l.b16 %v1047
          %v1134 = vunpack.c.l.b16 %v1048
          %v1135 = vunpack.c.h.b16 %v1048
          %v1136 = vunpack.c.l.b16 %v1049
          %v1137 = vunpack.c.l.b16 %v1050
          %v1138 = vunpack.c.h.b16 %v1050
          %v1139 = vunpack.c.l.b16 %v1051
          %v1140 = vunpack.c.l.b16 %v1052
          %v1141 = vunpack.c.h.b16 %v1052
          %v1142 = vunpack.c.l.b16 %v1053
          %v1143 = vunpack.c.l.b16 %v1054
          %v1144 = vunpack.c.h.b16 %v1054
          %v1145 = vunpack.c.l.b16 %v1055
          %v1146 = vunpack.c.l.b16 %v1056
          %v1147 = vunpack.c.h.b16 %v1056
          %v1148 = vunpack.c.l.b16 %v1057
          %v1149 = vunpack.c.l.b16 %v1058
          %v1150 = vunpack.c.h.b16 %v1058
          %v1151 = vunpack.c.l.b16 %v1059
          %v1152 = vunpack.c.l.b16 %v1060
          %v1153 = vunpack.c.h.b16 %v1060
          %v1154 = vunpack.c.l.b16 %v1061
          %v1155 = vunpack.c.l.b16 %v1062
          %v1156 = vunpack.c.h.b16 %v1062
          %v1157 = vunpack.c.l.b16 %v1063
          %v1158 = vunpack.c.l.b16 %v1064
          %v1159 = vunpack.c.h.b16 %v1064
          %v1160 = vunpack.c.l.b16 %v1065
          %v1161 = vunpack.c.l.b16 %v1066
          %v1162 = vunpack.c.h.b16 %v1066
          %v1163 = vunpack.c.l.b16 %v1067
          %v1164 = vunpack.c.l.b16 %v1068
          %v1165 = vunpack.c.h.b16 %v1068
          %v1166 = vunpack.c.l.b16 %v1069
          %v1167 = vpack.c.b16 %v1122, %v1119
          %v1168 = vpack.c.b16 %v1123, %v1120
          %v1169 = vpack.c.b16 %v1124, %v1121
          %v1170 = vpack.c.b16 %v1128, %v1125
          %v1171 = vpack.c.b16 %v1129, %v1126
          %v1172 = vpack.c.b16 %v1130, %v1127
          %v1173 = vpack.c.b16 %v1134, %v1131
          %v1174 = vpack.c.b16 %v1135, %v1132
          %v1175 = vpack.c.b16 %v1136, %v1133
          %v1176 = vpack.c.b16 %v1140, %v1137
          %v1177 = vpack.c.b16 %v1141, %v1138
          %v1178 = vpack.c.b16 %v1142, %v1139
          %v1179 = vpack.c.b16 %v1146, %v1143
          %v1180 = vpack.c.b16 %v1147, %v1144
          %v1181 = vpack.c.b16 %v1148, %v1145
          %v1182 = vpack.c.b16 %v1152, %v1149
          %v1183 = vpack.c.b16 %v1153, %v1150
          %v1184 = vpack.c.b16 %v1154, %v1151
          %v1185 = vpack.c.b16 %v1158, %v1155
          %v1186 = vpack.c.b16 %v1159, %v1156
          %v1187 = vpack.c.b16 %v1160, %v1157
          %v1188 = vpack.c.b16 %v1164, %v1161
          %v1189 = vpack.c.b16 %v1165, %v1162
          %v1190 = vpack.c.b16 %v1166, %v1163
          %1215 = vmatprep.subr.bf16.mxu0 %v1168
          %1216 = vmatpush1.bf16.msra.mxu0 %v1167
          %1217 = vmatprep.subr.bf16.mxu0 %v1171
          %1218 = vmatpush1.bf16.msra.mxu0 %v1170
          %1219 = vmatprep.subr.bf16.mxu0 %v1174
          %1220 = vmatpush1.bf16.msra.mxu0 %v1173
          %1221 = vmatprep.subr.bf16.mxu0 %v1177
          %1222 = vmatpush1.bf16.msra.mxu0 %v1176
          %1223 = vmatprep.subr.bf16.mxu0 %v1180
          %1224 = vmatpush1.bf16.msra.mxu0 %v1179
          %1225 = vmatprep.subr.bf16.mxu0 %v1183
          %1226 = vmatpush1.bf16.msra.mxu0 %v1182
          %1227 = vmatprep.subr.bf16.mxu0 %v1186
          %1228 = vmatpush1.bf16.msra.mxu0 %v1185
          %1229 = vmatprep.subr.bf16.mxu0 %v1189
          %1230 = vmatpush1.bf16.msra.mxu0 %v1188
          %1231 = vmatprep.subr.bf16.mxu0 0
          %1232 = vmatpush1.bf16.msra.mxu0 0
          %1233 = vmatprep.subr.bf16.mxu0 0
          %1234 = vmatpush1.bf16.msra.mxu0 0
          %1235 = vmatprep.subr.bf16.mxu0 0
          %1236 = vmatpush1.bf16.msra.mxu0 0
          %1237 = vmatprep.subr.bf16.mxu0 0
          %1238 = vmatpush1.bf16.msra.mxu0 0
          %1239 = vmatprep.subr.bf16.mxu0 0
          %1240 = vmatpush1.bf16.msra.mxu0 0
          %1241 = vmatprep.subr.bf16.mxu0 0
          %1242 = vmatpush1.bf16.msra.mxu0 0
          %1243 = vmatprep.subr.bf16.mxu0 0
          %1244 = vmatpush1.bf16.msra.mxu0 0
          %1245 = vmatprep.subr.bf16.mxu0 0
          %1246 = vmatpush1.bf16.msra.mxu0 0
          %1247 = vmatprep.mubr.bf16.mxu0 0
          %1248 = vmatmul.mubr.bf16.gmra.mrb[0].mxu0 %v1036
          %v1249 = vpop.f32.mrb[0].mxu0
          %v1250 = vadd.f32 %v1075, %v1249
          %v1251 = vpop.f32.mrb[0].mxu0
          %v1252 = vadd.f32 %v1079, %v1251
          %v1253 = vpop.f32.mrb[0].mxu0
          %v1254 = vpop.f32.mrb[0].mxu0
          %1255 = vdwg.mxu0
          %1256 = vmatprep.subr.bf16.mxu0 0
          %1257 = vmatpush1.bf16.msra.mxu0 %v1169
          %1258 = vmatprep.subr.bf16.mxu0 0
          %1259 = vmatpush1.bf16.msra.mxu0 %v1172
          %1260 = vmatprep.subr.bf16.mxu0 0
          %1261 = vmatpush1.bf16.msra.mxu0 %v1175
          %1262 = vmatprep.subr.bf16.mxu0 0
          %1263 = vmatpush1.bf16.msra.mxu0 %v1178
          %1264 = vmatprep.subr.bf16.mxu0 0
          %1265 = vmatpush1.bf16.msra.mxu0 %v1181
          %1266 = vmatprep.subr.bf16.mxu0 0
          %1267 = vmatpush1.bf16.msra.mxu0 %v1184
          %1268 = vmatprep.subr.bf16.mxu0 0
          %1269 = vmatpush1.bf16.msra.mxu0 %v1187
          %1270 = vmatprep.subr.bf16.mxu0 0
          %1271 = vmatpush1.bf16.msra.mxu0 %v1190
          %1272 = vmatprep.subr.bf16.mxu0 0
          %1273 = vmatpush1.bf16.msra.mxu0 0
          %1274 = vmatprep.subr.bf16.mxu0 0
          %1275 = vmatpush1.bf16.msra.mxu0 0
          %1276 = vmatprep.subr.bf16.mxu0 0
          %1277 = vmatpush1.bf16.msra.mxu0 0
          %1278 = vmatprep.subr.bf16.mxu0 0
          %1279 = vmatpush1.bf16.msra.mxu0 0
          %1280 = vmatprep.subr.bf16.mxu0 0
          %1281 = vmatpush1.bf16.msra.mxu0 0
          %1282 = vmatprep.subr.bf16.mxu0 0
          %1283 = vmatpush1.bf16.msra.mxu0 0
          %1284 = vmatprep.subr.bf16.mxu0 0
          %1285 = vmatpush1.bf16.msra.mxu0 0
          %1286 = vmatprep.subr.bf16.mxu0 0
          %1287 = vmatpush1.bf16.msra.mxu0 0
          %1288 = vmatprep.mubr.bf16.mxu0 0
          %1289 = vmatmul.mubr.bf16.gmra.mrb[0].mxu0 %v1036
          %v1290 = vpop.f32.mrb[0].mxu0
          %v1291 = vadd.f32 %v1083, %v1290
          %v1292 = vpop.f32.mrb[0].mxu0
          %v1293 = vpop.f32.mrb[0].mxu0
          %v1294 = vpop.f32.mrb[0].mxu0
          %1295 = vdwg.mxu0
          %v1296 = vpack.c.bf16 %v1037, %v1037
          %v1297 = vld [vmem:[%s4] sm:$0xff]
          %v1298 = vld [vmem:[%s4 + $0x8] sm:$0xf]
          %v1299 = vld [vmem:[%s4 + $0xc] sm:$0xff]
          %v1300 = vld [vmem:[%s4 + $0x14] sm:$0xf]
          %v1301 = vld [vmem:[%s4 + $0x18] sm:$0xff]
          %v1302 = vld [vmem:[%s4 + $0x20] sm:$0xf]
          %v1303 = vld [vmem:[%s4 + $0x24] sm:$0xff]
          %v1304 = vld [vmem:[%s4 + $0x2c] sm:$0xf]
          %v1305 = vld [vmem:[%s4 + $0x30] sm:$0xff]
          %v1306 = vld [vmem:[%s4 + $0x38] sm:$0xf]
          %v1307 = vld [vmem:[%s4 + $0x3c] sm:$0xff]
          %v1308 = vld [vmem:[%s4 + $0x44] sm:$0xf]
          %v1309 = vld [vmem:[%s4 + $0x48] sm:$0xff]
          %v1310 = vld [vmem:[%s4 + $0x50] sm:$0xf]
          %v1311 = vld [vmem:[%s4 + $0x54] sm:$0xff]
          %v1312 = vld [vmem:[%s4 + $0x5c] sm:$0xf]
          %v1313 = vld [vmem:[%s4 + $0x60] sm:$0xff]
          %v1314 = vld [vmem:[%s4 + $0x68] sm:$0xf]
          %v1315 = vld [vmem:[%s4 + $0x6c] sm:$0xff]
          %v1316 = vld [vmem:[%s4 + $0x74] sm:$0xf]
          %v1317 = vld [vmem:[%s4 + $0x78] sm:$0xff]
          %v1318 = vld [vmem:[%s4 + $0x80] sm:$0xf]
          %v1319 = vld [vmem:[%s4 + $0x84] sm:$0xff]
          %v1320 = vld [vmem:[%s4 + $0x8c] sm:$0xf]
          %v1321 = vld [vmem:[%s4 + $0x90] sm:$0xff]
          %v1322 = vld [vmem:[%s4 + $0x98] sm:$0xf]
          %v1323 = vld [vmem:[%s4 + $0x9c] sm:$0xff]
          %v1324 = vld [vmem:[%s4 + $0xa4] sm:$0xf]
          %v1325 = vld [vmem:[%s4 + $0xa8] sm:$0xff]
          %v1326 = vld [vmem:[%s4 + $0xb0] sm:$0xf]
          %v1327 = vld [vmem:[%s4 + $0xb4] sm:$0xff]
          %v1328 = vld [vmem:[%s4 + $0xbc] sm:$0xf]
          %v1329 = vld [vmem:[%s6] sm:$0x7]
          %v1331 = vlaneseq
          %v1332 = vshrl.u32 %v1331, 7
          %v1333 = vsub.s32 0, %v1332
          %v1334 = vrot.slane %v1329, %v1333
          %v1335 = vlaneseq
          %v1336 = vshrl.u32 %v1335, 7
          %v1337 = vsub.s32 1, %v1336
          %v1338 = vrot.slane %v1329, %v1337
          %v1339 = vlaneseq
          %v1340 = vshrl.u32 %v1339, 7
          %v1341 = vsub.s32 2, %v1340
          %v1342 = vrot.slane %v1329, %v1341
          %v1378 = vunpack.c.l.b16 %v1297
          %v1379 = vunpack.c.h.b16 %v1297
          %v1380 = vunpack.c.l.b16 %v1298
          %v1381 = vunpack.c.l.b16 %v1299
          %v1382 = vunpack.c.h.b16 %v1299
          %v1383 = vunpack.c.l.b16 %v1300
          %v1384 = vunpack.c.l.b16 %v1301
          %v1385 = vunpack.c.h.b16 %v1301
          %v1386 = vunpack.c.l.b16 %v1302
          %v1387 = vunpack.c.l.b16 %v1303
          %v1388 = vunpack.c.h.b16 %v1303
          %v1389 = vunpack.c.l.b16 %v1304
          %v1390 = vunpack.c.l.b16 %v1305
          %v1391 = vunpack.c.h.b16 %v1305
          %v1392 = vunpack.c.l.b16 %v1306
          %v1393 = vunpack.c.l.b16 %v1307
          %v1394 = vunpack.c.h.b16 %v1307
          %v1395 = vunpack.c.l.b16 %v1308
          %v1396 = vunpack.c.l.b16 %v1309
          %v1397 = vunpack.c.h.b16 %v1309
          %v1398 = vunpack.c.l.b16 %v1310
          %v1399 = vunpack.c.l.b16 %v1311
          %v1400 = vunpack.c.h.b16 %v1311
          %v1401 = vunpack.c.l.b16 %v1312
          %v1402 = vunpack.c.l.b16 %v1313
          %v1403 = vunpack.c.h.b16 %v1313
          %v1404 = vunpack.c.l.b16 %v1314
          %v1405 = vunpack.c.l.b16 %v1315
          %v1406 = vunpack.c.h.b16 %v1315
          %v1407 = vunpack.c.l.b16 %v1316
          %v1408 = vunpack.c.l.b16 %v1317
          %v1409 = vunpack.c.h.b16 %v1317
          %v1410 = vunpack.c.l.b16 %v1318
          %v1411 = vunpack.c.l.b16 %v1319
          %v1412 = vunpack.c.h.b16 %v1319
          %v1413 = vunpack.c.l.b16 %v1320
          %v1414 = vunpack.c.l.b16 %v1321
          %v1415 = vunpack.c.h.b16 %v1321
          %v1416 = vunpack.c.l.b16 %v1322
          %v1417 = vunpack.c.l.b16 %v1323
          %v1418 = vunpack.c.h.b16 %v1323
          %v1419 = vunpack.c.l.b16 %v1324
          %v1420 = vunpack.c.l.b16 %v1325
          %v1421 = vunpack.c.h.b16 %v1325
          %v1422 = vunpack.c.l.b16 %v1326
          %v1423 = vunpack.c.l.b16 %v1327
          %v1424 = vunpack.c.h.b16 %v1327
          %v1425 = vunpack.c.l.b16 %v1328
          %v1426 = vpack.c.b16 %v1381, %v1378
          %v1427 = vpack.c.b16 %v1382, %v1379
          %v1428 = vpack.c.b16 %v1383, %v1380
          %v1429 = vpack.c.b16 %v1387, %v1384
          %v1430 = vpack.c.b16 %v1388, %v1385
          %v1431 = vpack.c.b16 %v1389, %v1386
          %v1432 = vpack.c.b16 %v1393, %v1390
          %v1433 = vpack.c.b16 %v1394, %v1391
          %v1434 = vpack.c.b16 %v1395, %v1392
          %v1435 = vpack.c.b16 %v1399, %v1396
          %v1436 = vpack.c.b16 %v1400, %v1397
          %v1437 = vpack.c.b16 %v1401, %v1398
          %v1438 = vpack.c.b16 %v1405, %v1402
          %v1439 = vpack.c.b16 %v1406, %v1403
          %v1440 = vpack.c.b16 %v1407, %v1404
          %v1441 = vpack.c.b16 %v1411, %v1408
          %v1442 = vpack.c.b16 %v1412, %v1409
          %v1443 = vpack.c.b16 %v1413, %v1410
          %v1444 = vpack.c.b16 %v1417, %v1414
          %v1445 = vpack.c.b16 %v1418, %v1415
          %v1446 = vpack.c.b16 %v1419, %v1416
          %v1447 = vpack.c.b16 %v1423, %v1420
          %v1448 = vpack.c.b16 %v1424, %v1421
          %v1449 = vpack.c.b16 %v1425, %v1422
          %1474 = vmatprep.subr.bf16.mxu0 %v1427
          %1475 = vmatpush1.bf16.msra.mxu0 %v1426
          %1476 = vmatprep.subr.bf16.mxu0 %v1430
          %1477 = vmatpush1.bf16.msra.mxu0 %v1429
          %1478 = vmatprep.subr.bf16.mxu0 %v1433
          %1479 = vmatpush1.bf16.msra.mxu0 %v1432
          %1480 = vmatprep.subr.bf16.mxu0 %v1436
          %1481 = vmatpush1.bf16.msra.mxu0 %v1435
          %1482 = vmatprep.subr.bf16.mxu0 %v1439
          %1483 = vmatpush1.bf16.msra.mxu0 %v1438
          %1484 = vmatprep.subr.bf16.mxu0 %v1442
          %1485 = vmatpush1.bf16.msra.mxu0 %v1441
          %1486 = vmatprep.subr.bf16.mxu0 %v1445
          %1487 = vmatpush1.bf16.msra.mxu0 %v1444
          %1488 = vmatprep.subr.bf16.mxu0 %v1448
          %1489 = vmatpush1.bf16.msra.mxu0 %v1447
          %1490 = vmatprep.subr.bf16.mxu0 0
          %1491 = vmatpush1.bf16.msra.mxu0 0
          %1492 = vmatprep.subr.bf16.mxu0 0
          %1493 = vmatpush1.bf16.msra.mxu0 0
          %1494 = vmatprep.subr.bf16.mxu0 0
          %1495 = vmatpush1.bf16.msra.mxu0 0
          %1496 = vmatprep.subr.bf16.mxu0 0
          %1497 = vmatpush1.bf16.msra.mxu0 0
          %1498 = vmatprep.subr.bf16.mxu0 0
          %1499 = vmatpush1.bf16.msra.mxu0 0
          %1500 = vmatprep.subr.bf16.mxu0 0
          %1501 = vmatpush1.bf16.msra.mxu0 0
          %1502 = vmatprep.subr.bf16.mxu0 0
          %1503 = vmatpush1.bf16.msra.mxu0 0
          %1504 = vmatprep.subr.bf16.mxu0 0
          %1505 = vmatpush1.bf16.msra.mxu0 0
          %1506 = vmatprep.mubr.bf16.mxu0 0
          %1507 = vmatmul.mubr.bf16.gmra.mrb[0].mxu0 %v1296
          %v1508 = vpop.f32.mrb[0].mxu0
          %v1509 = vadd.f32 %v1334, %v1508
          %v1510 = vpop.f32.mrb[0].mxu0
          %v1511 = vadd.f32 %v1338, %v1510
          %v1512 = vpop.f32.mrb[0].mxu0
          %v1513 = vpop.f32.mrb[0].mxu0
          %1514 = vdwg.mxu0
          %1515 = vmatprep.subr.bf16.mxu0 0
          %1516 = vmatpush1.bf16.msra.mxu0 %v1428
          %1517 = vmatprep.subr.bf16.mxu0 0
          %1518 = vmatpush1.bf16.msra.mxu0 %v1431
          %1519 = vmatprep.subr.bf16.mxu0 0
          %1520 = vmatpush1.bf16.msra.mxu0 %v1434
          %1521 = vmatprep.subr.bf16.mxu0 0
          %1522 = vmatpush1.bf16.msra.mxu0 %v1437
          %1523 = vmatprep.subr.bf16.mxu0 0
          %1524 = vmatpush1.bf16.msra.mxu0 %v1440
          %1525 = vmatprep.subr.bf16.mxu0 0
          %1526 = vmatpush1.bf16.msra.mxu0 %v1443
          %1527 = vmatprep.subr.bf16.mxu0 0
          %1528 = vmatpush1.bf16.msra.mxu0 %v1446
          %1529 = vmatprep.subr.bf16.mxu0 0
          %1530 = vmatpush1.bf16.msra.mxu0 %v1449
          %1531 = vmatprep.subr.bf16.mxu0 0
          %1532 = vmatpush1.bf16.msra.mxu0 0
          %1533 = vmatprep.subr.bf16.mxu0 0
          %1534 = vmatpush1.bf16.msra.mxu0 0
          %1535 = vmatprep.subr.bf16.mxu0 0
          %1536 = vmatpush1.bf16.msra.mxu0 0
          %1537 = vmatprep.subr.bf16.mxu0 0
          %1538 = vmatpush1.bf16.msra.mxu0 0
          %1539 = vmatprep.subr.bf16.mxu0 0
          %1540 = vmatpush1.bf16.msra.mxu0 0
          %1541 = vmatprep.subr.bf16.mxu0 0
          %1542 = vmatpush1.bf16.msra.mxu0 0
          %1543 = vmatprep.subr.bf16.mxu0 0
          %1544 = vmatpush1.bf16.msra.mxu0 0
          %1545 = vmatprep.subr.bf16.mxu0 0
          %1546 = vmatpush1.bf16.msra.mxu0 0
          %1547 = vmatprep.mubr.bf16.mxu0 0
          %1548 = vmatmul.mubr.bf16.gmra.mrb[0].mxu0 %v1296
          %v1549 = vpop.f32.mrb[0].mxu0
          %v1550 = vadd.f32 %v1342, %v1549
          %v1551 = vpop.f32.mrb[0].mxu0
          %v1552 = vpop.f32.mrb[0].mxu0
          %v1553 = vpop.f32.mrb[0].mxu0
          %1554 = vdwg.mxu0
          %v1555 = vadd.f32 %v1250, %v1509
          %v1556 = vxor.u32 %v1555, 2147483648
          %v1557 = vmul.f32 %v1556, 1.442695
          %v1558 = vpow.pop %v1557
          %v1559 = vadd.f32 %v1558, 1.0
          %v1560 = vrcp.pop %v1559
          %v1561 = vmul.f32 1.0, %v1560
          %v1562 = vadd.f32 %v1252, %v1511
          %v1563 = vxor.u32 %v1562, 2147483648
          %v1564 = vmul.f32 %v1563, 1.442695
          %v1565 = vpow.pop %v1564
          %v1566 = vadd.f32 %v1565, 1.0
          %v1567 = vrcp.pop %v1566
          %v1568 = vmul.f32 1.0, %v1567
          %v1569 = vmul.f32 %v1561, %v1550
          %v1570 = vadd.f32 %v1291, %v1569
          %v1571 = vtanh.pop %v1570
          %v1572 = vsub.f32 1.0, %v1568
          %v1573 = vmul.f32 %v1572, %v1571
          %v1574 = vmul.f32 %v1568, %v1037
          %v1575 = vadd.f32 %v1573, %v1574
          %1576 = vst [vmem:[%s11] sm:$0xff] %v1575
          %v1577 = vpack.c.bf16 %v1575, %v1575
          %1578 = vst [vmem:[#allocation3] sm:$0xf] %v1577
          %vm1579 = vcmask 7168
          %1580 = vst.msk [vmem:[#allocation4] sm:$0xff] %vm1579, -1e+30
          %1581 = vst.msk [vmem:[#allocation5] sm:$0xff] %vm1579, 0.0
        $region75: #{decode_step.1} parent=66 // pred_fallthru
          _
        %v1582 = vld [vmem:[#allocation3] sm:$0xf]
        %v1583 = vld [vmem:[%s582] sm:$0xff]
        %v1584 = vld [vmem:[%s582 + $0x8] sm:$0xff]
        %v1585 = vld [vmem:[%s582 + $0x10] sm:$0xff]
        %v1586 = vld [vmem:[%s582 + $0x18] sm:$0xff]
        %v1587 = vld [vmem:[%s582 + $0x20] sm:$0xff]
        %v1588 = vld [vmem:[%s582 + $0x28] sm:$0xff]
        %v1589 = vld [vmem:[%s582 + $0x30] sm:$0xff]
        %v1590 = vld [vmem:[%s582 + $0x38] sm:$0xff]
        %v1591 = vld [vmem:[%s582 + $0x40] sm:$0xff]
        %v1592 = vld [vmem:[%s582 + $0x48] sm:$0xff]
        %v1593 = vld [vmem:[%s582 + $0x50] sm:$0xff]
        %v1594 = vld [vmem:[%s582 + $0x58] sm:$0xff]
        %v1595 = vld [vmem:[%s582 + $0x60] sm:$0xff]
        %v1596 = vld [vmem:[%s582 + $0x68] sm:$0xff]
        %v1597 = vld [vmem:[%s582 + $0x70] sm:$0xff]
        %v1598 = vld [vmem:[%s582 + $0x78] sm:$0xff]
        %v1599 = vld [vmem:[%s582 + $0x80] sm:$0xff]
        %v1600 = vld [vmem:[%s582 + $0x88] sm:$0xff]
        %v1601 = vld [vmem:[%s582 + $0x90] sm:$0xff]
        %v1602 = vld [vmem:[%s582 + $0x98] sm:$0xff]
        %v1603 = vld [vmem:[%s582 + $0xa0] sm:$0xff]
        %v1604 = vld [vmem:[%s582 + $0xa8] sm:$0xff]
        %v1605 = vld [vmem:[%s582 + $0xb0] sm:$0xff]
        %v1606 = vld [vmem:[%s582 + $0xb8] sm:$0xff]
        %v1607 = vld [vmem:[%s582 + $0xc0] sm:$0xff]
        %v1608 = vld [vmem:[%s582 + $0xc8] sm:$0xff]
        %v1609 = vld [vmem:[%s582 + $0xd0] sm:$0xff]
        %v1610 = vld [vmem:[%s582 + $0xd8] sm:$0xff]
        %v1611 = vld [vmem:[%s582 + $0xe0] sm:$0xff]
        %v1612 = vld [vmem:[%s582 + $0xe8] sm:$0xff]
        %v1613 = vld [vmem:[%s582 + $0xf0] sm:$0xff]
        %v1614 = vld [vmem:[%s582 + $0xf8] sm:$0xff]
        %v1615 = vld [vmem:[%s582 + $0x100] sm:$0xff]
        %v1616 = vld [vmem:[%s582 + $0x108] sm:$0xff]
        %v1617 = vld [vmem:[%s582 + $0x110] sm:$0xff]
        %v1618 = vld [vmem:[%s582 + $0x118] sm:$0xff]
        %v1619 = vld [vmem:[%s582 + $0x120] sm:$0xff]
        %v1620 = vld [vmem:[%s582 + $0x128] sm:$0xff]
        %v1621 = vld [vmem:[%s582 + $0x130] sm:$0xff]
        %v1622 = vld [vmem:[%s582 + $0x138] sm:$0xff]
        %v1623 = vld [vmem:[%s582 + $0x140] sm:$0xff]
        %v1624 = vld [vmem:[%s582 + $0x148] sm:$0xff]
        %v1625 = vld [vmem:[%s582 + $0x150] sm:$0xff]
        %v1626 = vld [vmem:[%s582 + $0x158] sm:$0xff]
        %v1627 = vld [vmem:[%s582 + $0x160] sm:$0xff]
        %v1628 = vld [vmem:[%s582 + $0x168] sm:$0xff]
        %v1629 = vld [vmem:[%s582 + $0x170] sm:$0xff]
        %v1630 = vld [vmem:[%s582 + $0x178] sm:$0xff]
        %v1631 = vld [vmem:[%s582 + $0x180] sm:$0xff]
        %v1632 = vld [vmem:[%s582 + $0x188] sm:$0xff]
        %v1633 = vld [vmem:[%s582 + $0x190] sm:$0xff]
        %v1634 = vld [vmem:[%s582 + $0x198] sm:$0xff]
        %v1635 = vld [vmem:[%s582 + $0x1a0] sm:$0xff]
        %v1636 = vld [vmem:[%s582 + $0x1a8] sm:$0xff]
        %v1637 = vld [vmem:[%s582 + $0x1b0] sm:$0xff]
        %v1638 = vld [vmem:[%s582 + $0x1b8] sm:$0xff]
        %v1639 = vld [vmem:[%s582 + $0x1c0] sm:$0xff]
        %v1640 = vld [vmem:[%s582 + $0x1c8] sm:$0xff]
        %v1641 = vld [vmem:[%s582 + $0x1d0] sm:$0xff]
        %v1642 = vld [vmem:[%s582 + $0x1d8] sm:$0xff]
        %v1643 = vld [vmem:[%s582 + $0x1e0] sm:$0xff]
        %v1644 = vld [vmem:[%s582 + $0x1e8] sm:$0xff]
        %v1645 = vld [vmem:[%s582 + $0x1f0] sm:$0xff]
        %v1646 = vld [vmem:[%s582 + $0x1f8] sm:$0xff]
        %v1647 = vld [vmem:[%s582 + $0x200] sm:$0xff]
        %v1648 = vld [vmem:[%s582 + $0x208] sm:$0xff]
        %v1649 = vld [vmem:[%s582 + $0x210] sm:$0xff]
        %v1650 = vld [vmem:[%s582 + $0x218] sm:$0xff]
        %v1651 = vld [vmem:[%s582 + $0x220] sm:$0xff]
        %v1652 = vld [vmem:[%s582 + $0x228] sm:$0xff]
        %v1653 = vld [vmem:[%s582 + $0x230] sm:$0xff]
        %v1654 = vld [vmem:[%s582 + $0x238] sm:$0xff]
        %v1655 = vld [vmem:[%s582 + $0x240] sm:$0xff]
        %v1656 = vld [vmem:[%s582 + $0x248] sm:$0xff]
        %v1657 = vld [vmem:[%s582 + $0x250] sm:$0xff]
        %v1658 = vld [vmem:[%s582 + $0x258] sm:$0xff]
        %v1659 = vld [vmem:[%s582 + $0x260] sm:$0xff]
        %v1660 = vld [vmem:[%s582 + $0x268] sm:$0xff]
        %v1661 = vld [vmem:[%s582 + $0x270] sm:$0xff]
        %v1662 = vld [vmem:[%s582 + $0x278] sm:$0xff]
        %v1663 = vld [vmem:[%s582 + $0x280] sm:$0xff]
        %v1664 = vld [vmem:[%s582 + $0x288] sm:$0xff]
        %v1665 = vld [vmem:[%s582 + $0x290] sm:$0xff]
        %v1666 = vld [vmem:[%s582 + $0x298] sm:$0xff]
        %v1667 = vld [vmem:[%s582 + $0x2a0] sm:$0xff]
        %v1668 = vld [vmem:[%s582 + $0x2a8] sm:$0xff]
        %v1669 = vld [vmem:[%s582 + $0x2b0] sm:$0xff]
        %v1670 = vld [vmem:[%s582 + $0x2b8] sm:$0xff]
        %v1671 = vld [vmem:[%s582 + $0x2c0] sm:$0xff]
        %v1672 = vld [vmem:[%s582 + $0x2c8] sm:$0xff]
        %v1673 = vld [vmem:[%s582 + $0x2d0] sm:$0xff]
        %v1674 = vld [vmem:[%s582 + $0x2d8] sm:$0xff]
        %v1675 = vld [vmem:[%s582 + $0x2e0] sm:$0xff]
        %v1676 = vld [vmem:[%s582 + $0x2e8] sm:$0xff]
        %v1677 = vld [vmem:[%s582 + $0x2f0] sm:$0xff]
        %v1678 = vld [vmem:[%s582 + $0x2f8] sm:$0xff]
        %v1679 = vld [vmem:[%s582 + $0x300] sm:$0xff]
        %v1680 = vld [vmem:[%s582 + $0x308] sm:$0xff]
        %v1681 = vld [vmem:[%s582 + $0x310] sm:$0xff]
        %v1682 = vld [vmem:[%s582 + $0x318] sm:$0xff]
        %v1683 = vld [vmem:[%s582 + $0x320] sm:$0xff]
        %v1684 = vld [vmem:[%s582 + $0x328] sm:$0xff]
        %v1685 = vld [vmem:[%s582 + $0x330] sm:$0xff]
        %v1686 = vld [vmem:[%s582 + $0x338] sm:$0xff]
        %v1687 = vld [vmem:[%s582 + $0x340] sm:$0xff]
        %v1688 = vld [vmem:[%s582 + $0x348] sm:$0xff]
        %v1689 = vld [vmem:[%s582 + $0x350] sm:$0xff]
        %v1690 = vld [vmem:[%s582 + $0x358] sm:$0xff]
        %v1691 = vld [vmem:[%s582 + $0x360] sm:$0xff]
        %v1692 = vld [vmem:[%s582 + $0x368] sm:$0xff]
        %v1693 = vld [vmem:[%s582 + $0x370] sm:$0xff]
        %v1694 = vld [vmem:[%s582 + $0x378] sm:$0xff]
        %v1695 = vld [vmem:[%s582 + $0x380] sm:$0xff]
        %v1696 = vld [vmem:[%s582 + $0x388] sm:$0xff]
        %v1697 = vld [vmem:[%s582 + $0x390] sm:$0xff]
        %v1698 = vld [vmem:[%s582 + $0x398] sm:$0xff]
        %v1699 = vld [vmem:[%s582 + $0x3a0] sm:$0xff]
        %v1700 = vld [vmem:[%s582 + $0x3a8] sm:$0xff]
        %v1701 = vld [vmem:[%s582 + $0x3b0] sm:$0xff]
        %v1702 = vld [vmem:[%s582 + $0x3b8] sm:$0xff]
        %v1703 = vld [vmem:[%s582 + $0x3c0] sm:$0xff]
        %v1704 = vld [vmem:[%s582 + $0x3c8] sm:$0xff]
        %v1705 = vld [vmem:[%s582 + $0x3d0] sm:$0xff]
        %v1706 = vld [vmem:[%s582 + $0x3d8] sm:$0xff]
        %v1707 = vld [vmem:[%s582 + $0x3e0] sm:$0xff]
        %v1708 = vld [vmem:[%s582 + $0x3e8] sm:$0xff]
        %v1709 = vld [vmem:[%s582 + $0x3f0] sm:$0xff]
        %v1710 = vld [vmem:[%s582 + $0x3f8] sm:$0xff]
        %v1711 = vld [vmem:[%s623] sm:$0xff]
        %v1712 = vld [vmem:[%s623 + $0x8] sm:$0xff]
        %v1715 = vlaneseq
        %v1716 = vshrl.u32 %v1715, 7
        %v1717 = vsub.s32 0, %v1716
        %v1718 = vrot.slane %v1711, %v1717
        %v1719 = vlaneseq
        %v1720 = vshrl.u32 %v1719, 7
        %v1721 = vsub.s32 1, %v1720
        %v1722 = vrot.slane %v1711, %v1721
        %v1723 = vlaneseq
        %v1724 = vshrl.u32 %v1723, 7
        %v1725 = vsub.s32 2, %v1724
        %v1726 = vrot.slane %v1711, %v1725
        %v1727 = vlaneseq
        %v1728 = vshrl.u32 %v1727, 7
        %v1729 = vsub.s32 3, %v1728
        %v1730 = vrot.slane %v1711, %v1729
        %v1731 = vlaneseq
        %v1732 = vshrl.u32 %v1731, 7
        %v1733 = vsub.s32 4, %v1732
        %v1734 = vrot.slane %v1711, %v1733
        %v1735 = vlaneseq
        %v1736 = vshrl.u32 %v1735, 7
        %v1737 = vsub.s32 5, %v1736
        %v1738 = vrot.slane %v1711, %v1737
        %v1739 = vlaneseq
        %v1740 = vshrl.u32 %v1739, 7
        %v1741 = vsub.s32 6, %v1740
        %v1742 = vrot.slane %v1711, %v1741
        %v1743 = vlaneseq
        %v1744 = vshrl.u32 %v1743, 7
        %v1745 = vsub.s32 7, %v1744
        %v1746 = vrot.slane %v1711, %v1745
        %v1747 = vlaneseq
        %v1748 = vshrl.u32 %v1747, 7
        %v1749 = vsub.s32 0, %v1748
        %v1750 = vrot.slane %v1712, %v1749
        %v1751 = vlaneseq
        %v1752 = vshrl.u32 %v1751, 7
        %v1753 = vsub.s32 1, %v1752
        %v1754 = vrot.slane %v1712, %v1753
        %v1755 = vlaneseq
        %v1756 = vshrl.u32 %v1755, 7
        %v1757 = vsub.s32 2, %v1756
        %v1758 = vrot.slane %v1712, %v1757
        %v1759 = vlaneseq
        %v1760 = vshrl.u32 %v1759, 7
        %v1761 = vsub.s32 3, %v1760
        %v1762 = vrot.slane %v1712, %v1761
        %v1763 = vlaneseq
        %v1764 = vshrl.u32 %v1763, 7
        %v1765 = vsub.s32 4, %v1764
        %v1766 = vrot.slane %v1712, %v1765
        %v1767 = vlaneseq
        %v1768 = vshrl.u32 %v1767, 7
        %v1769 = vsub.s32 5, %v1768
        %v1770 = vrot.slane %v1712, %v1769
        %v1771 = vlaneseq
        %v1772 = vshrl.u32 %v1771, 7
        %v1773 = vsub.s32 6, %v1772
        %v1774 = vrot.slane %v1712, %v1773
        %v1775 = vlaneseq
        %v1776 = vshrl.u32 %v1775, 7
        %v1777 = vsub.s32 7, %v1776
        %v1778 = vrot.slane %v1712, %v1777
        %v1923 = vunpack.c.l.b16 %v1583
        %v1924 = vunpack.c.h.b16 %v1583
        %v1925 = vunpack.c.l.b16 %v1584
        %v1926 = vunpack.c.h.b16 %v1584
        %v1927 = vunpack.c.l.b16 %v1585
        %v1928 = vunpack.c.h.b16 %v1585
        %v1929 = vunpack.c.l.b16 %v1586
        %v1930 = vunpack.c.h.b16 %v1586
        %v1931 = vunpack.c.l.b16 %v1587
        %v1932 = vunpack.c.h.b16 %v1587
        %v1933 = vunpack.c.l.b16 %v1588
        %v1934 = vunpack.c.h.b16 %v1588
        %v1935 = vunpack.c.l.b16 %v1589
        %v1936 = vunpack.c.h.b16 %v1589
        %v1937 = vunpack.c.l.b16 %v1590
        %v1938 = vunpack.c.h.b16 %v1590
        %v1939 = vunpack.c.l.b16 %v1591
        %v1940 = vunpack.c.h.b16 %v1591
        %v1941 = vunpack.c.l.b16 %v1592
        %v1942 = vunpack.c.h.b16 %v1592
        %v1943 = vunpack.c.l.b16 %v1593
        %v1944 = vunpack.c.h.b16 %v1593
        %v1945 = vunpack.c.l.b16 %v1594
        %v1946 = vunpack.c.h.b16 %v1594
        %v1947 = vunpack.c.l.b16 %v1595
        %v1948 = vunpack.c.h.b16 %v1595
        %v1949 = vunpack.c.l.b16 %v1596
        %v1950 = vunpack.c.h.b16 %v1596
        %v1951 = vunpack.c.l.b16 %v1597
        %v1952 = vunpack.c.h.b16 %v1597
        %v1953 = vunpack.c.l.b16 %v1598
        %v1954 = vunpack.c.h.b16 %v1598
        %v1955 = vunpack.c.l.b16 %v1599
        %v1956 = vunpack.c.h.b16 %v1599
        %v1957 = vunpack.c.l.b16 %v1600
        %v1958 = vunpack.c.h.b16 %v1600
        %v1959 = vunpack.c.l.b16 %v1601
        %v1960 = vunpack.c.h.b16 %v1601
        %v1961 = vunpack.c.l.b16 %v1602
        %v1962 = vunpack.c.h.b16 %v1602
        %v1963 = vunpack.c.l.b16 %v1603
        %v1964 = vunpack.c.h.b16 %v1603
        %v1965 = vunpack.c.l.b16 %v1604
        %v1966 = vunpack.c.h.b16 %v1604
        %v1967 = vunpack.c.l.b16 %v1605
        %v1968 = vunpack.c.h.b16 %v1605
        %v1969 = vunpack.c.l.b16 %v1606
        %v1970 = vunpack.c.h.b16 %v1606
        %v1971 = vunpack.c.l.b16 %v1607
        %v1972 = vunpack.c.h.b16 %v1607
        %v1973 = vunpack.c.l.b16 %v1608
        %v1974 = vunpack.c.h.b16 %v1608
        %v1975 = vunpack.c.l.b16 %v1609
        %v1976 = vunpack.c.h.b16 %v1609
        %v1977 = vunpack.c.l.b16 %v1610
        %v1978 = vunpack.c.h.b16 %v1610
        %v1979 = vunpack.c.l.b16 %v1611
        %v1980 = vunpack.c.h.b16 %v1611
        %v1981 = vunpack.c.l.b16 %v1612
        %v1982 = vunpack.c.h.b16 %v1612
        %v1983 = vunpack.c.l.b16 %v1613
        %v1984 = vunpack.c.h.b16 %v1613
        %v1985 = vunpack.c.l.b16 %v1614
        %v1986 = vunpack.c.h.b16 %v1614
        %v1987 = vunpack.c.l.b16 %v1615
        %v1988 = vunpack.c.h.b16 %v1615
        %v1989 = vunpack.c.l.b16 %v1616
        %v1990 = vunpack.c.h.b16 %v1616
        %v1991 = vunpack.c.l.b16 %v1617
        %v1992 = vunpack.c.h.b16 %v1617
        %v1993 = vunpack.c.l.b16 %v1618
        %v1994 = vunpack.c.h.b16 %v1618
        %v1995 = vunpack.c.l.b16 %v1619
        %v1996 = vunpack.c.h.b16 %v1619
        %v1997 = vunpack.c.l.b16 %v1620
        %v1998 = vunpack.c.h.b16 %v1620
        %v1999 = vunpack.c.l.b16 %v1621
        %v2000 = vunpack.c.h.b16 %v1621
        %v2001 = vunpack.c.l.b16 %v1622
        %v2002 = vunpack.c.h.b16 %v1622
        %v2003 = vunpack.c.l.b16 %v1623
        %v2004 = vunpack.c.h.b16 %v1623
        %v2005 = vunpack.c.l.b16 %v1624
        %v2006 = vunpack.c.h.b16 %v1624
        %v2007 = vunpack.c.l.b16 %v1625
        %v2008 = vunpack.c.h.b16 %v1625
        %v2009 = vunpack.c.l.b16 %v1626
        %v2010 = vunpack.c.h.b16 %v1626
        %v2011 = vunpack.c.l.b16 %v1627
        %v2012 = vunpack.c.h.b16 %v1627
        %v2013 = vunpack.c.l.b16 %v1628
        %v2014 = vunpack.c.h.b16 %v1628
        %v2015 = vunpack.c.l.b16 %v1629
        %v2016 = vunpack.c.h.b16 %v1629
        %v2017 = vunpack.c.l.b16 %v1630
        %v2018 = vunpack.c.h.b16 %v1630
        %v2019 = vunpack.c.l.b16 %v1631
        %v2020 = vunpack.c.h.b16 %v1631
        %v2021 = vunpack.c.l.b16 %v1632
        %v2022 = vunpack.c.h.b16 %v1632
        %v2023 = vunpack.c.l.b16 %v1633
        %v2024 = vunpack.c.h.b16 %v1633
        %v2025 = vunpack.c.l.b16 %v1634
        %v2026 = vunpack.c.h.b16 %v1634
        %v2027 = vunpack.c.l.b16 %v1635
        %v2028 = vunpack.c.h.b16 %v1635
        %v2029 = vunpack.c.l.b16 %v1636
        %v2030 = vunpack.c.h.b16 %v1636
        %v2031 = vunpack.c.l.b16 %v1637
        %v2032 = vunpack.c.h.b16 %v1637
        %v2033 = vunpack.c.l.b16 %v1638
        %v2034 = vunpack.c.h.b16 %v1638
        %v2035 = vunpack.c.l.b16 %v1639
        %v2036 = vunpack.c.h.b16 %v1639
        %v2037 = vunpack.c.l.b16 %v1640
        %v2038 = vunpack.c.h.b16 %v1640
        %v2039 = vunpack.c.l.b16 %v1641
        %v2040 = vunpack.c.h.b16 %v1641
        %v2041 = vunpack.c.l.b16 %v1642
        %v2042 = vunpack.c.h.b16 %v1642
        %v2043 = vunpack.c.l.b16 %v1643
        %v2044 = vunpack.c.h.b16 %v1643
        %v2045 = vunpack.c.l.b16 %v1644
        %v2046 = vunpack.c.h.b16 %v1644
        %v2047 = vunpack.c.l.b16 %v1645
        %v2048 = vunpack.c.h.b16 %v1645
        %v2049 = vunpack.c.l.b16 %v1646
        %v2050 = vunpack.c.h.b16 %v1646
        %v2051 = vunpack.c.l.b16 %v1647
        %v2052 = vunpack.c.h.b16 %v1647
        %v2053 = vunpack.c.l.b16 %v1648
        %v2054 = vunpack.c.h.b16 %v1648
        %v2055 = vunpack.c.l.b16 %v1649
        %v2056 = vunpack.c.h.b16 %v1649
        %v2057 = vunpack.c.l.b16 %v1650
        %v2058 = vunpack.c.h.b16 %v1650
        %v2059 = vunpack.c.l.b16 %v1651
        %v2060 = vunpack.c.h.b16 %v1651
        %v2061 = vunpack.c.l.b16 %v1652
        %v2062 = vunpack.c.h.b16 %v1652
        %v2063 = vunpack.c.l.b16 %v1653
        %v2064 = vunpack.c.h.b16 %v1653
        %v2065 = vunpack.c.l.b16 %v1654
        %v2066 = vunpack.c.h.b16 %v1654
        %v2067 = vunpack.c.l.b16 %v1655
        %v2068 = vunpack.c.h.b16 %v1655
        %v2069 = vunpack.c.l.b16 %v1656
        %v2070 = vunpack.c.h.b16 %v1656
        %v2071 = vunpack.c.l.b16 %v1657
        %v2072 = vunpack.c.h.b16 %v1657
        %v2073 = vunpack.c.l.b16 %v1658
        %v2074 = vunpack.c.h.b16 %v1658
        %v2075 = vunpack.c.l.b16 %v1659
        %v2076 = vunpack.c.h.b16 %v1659
        %v2077 = vunpack.c.l.b16 %v1660
        %v2078 = vunpack.c.h.b16 %v1660
        %v2079 = vunpack.c.l.b16 %v1661
        %v2080 = vunpack.c.h.b16 %v1661
        %v2081 = vunpack.c.l.b16 %v1662
        %v2082 = vunpack.c.h.b16 %v1662
        %v2083 = vunpack.c.l.b16 %v1663
        %v2084 = vunpack.c.h.b16 %v1663
        %v2085 = vunpack.c.l.b16 %v1664
        %v2086 = vunpack.c.h.b16 %v1664
        %v2087 = vunpack.c.l.b16 %v1665
        %v2088 = vunpack.c.h.b16 %v1665
        %v2089 = vunpack.c.l.b16 %v1666
        %v2090 = vunpack.c.h.b16 %v1666
        %v2091 = vunpack.c.l.b16 %v1667
        %v2092 = vunpack.c.h.b16 %v1667
        %v2093 = vunpack.c.l.b16 %v1668
        %v2094 = vunpack.c.h.b16 %v1668
        %v2095 = vunpack.c.l.b16 %v1669
        %v2096 = vunpack.c.h.b16 %v1669
        %v2097 = vunpack.c.l.b16 %v1670
        %v2098 = vunpack.c.h.b16 %v1670
        %v2099 = vunpack.c.l.b16 %v1671
        %v2100 = vunpack.c.h.b16 %v1671
        %v2101 = vunpack.c.l.b16 %v1672
        %v2102 = vunpack.c.h.b16 %v1672
        %v2103 = vunpack.c.l.b16 %v1673
        %v2104 = vunpack.c.h.b16 %v1673
        %v2105 = vunpack.c.l.b16 %v1674
        %v2106 = vunpack.c.h.b16 %v1674
        %v2107 = vunpack.c.l.b16 %v1675
        %v2108 = vunpack.c.h.b16 %v1675
        %v2109 = vunpack.c.l.b16 %v1676
        %v2110 = vunpack.c.h.b16 %v1676
        %v2111 = vunpack.c.l.b16 %v1677
        %v2112 = vunpack.c.h.b16 %v1677
        %v2113 = vunpack.c.l.b16 %v1678
        %v2114 = vunpack.c.h.b16 %v1678
        %v2115 = vunpack.c.l.b16 %v1679
        %v2116 = vunpack.c.h.b16 %v1679
        %v2117 = vunpack.c.l.b16 %v1680
        %v2118 = vunpack.c.h.b16 %v1680
        %v2119 = vunpack.c.l.b16 %v1681
        %v2120 = vunpack.c.h.b16 %v1681
        %v2121 = vunpack.c.l.b16 %v1682
        %v2122 = vunpack.c.h.b16 %v1682
        %v2123 = vunpack.c.l.b16 %v1683
        %v2124 = vunpack.c.h.b16 %v1683
        %v2125 = vunpack.c.l.b16 %v1684
        %v2126 = vunpack.c.h.b16 %v1684
        %v2127 = vunpack.c.l.b16 %v1685
        %v2128 = vunpack.c.h.b16 %v1685
        %v2129 = vunpack.c.l.b16 %v1686
        %v2130 = vunpack.c.h.b16 %v1686
        %v2131 = vunpack.c.l.b16 %v1687
        %v2132 = vunpack.c.h.b16 %v1687
        %v2133 = vunpack.c.l.b16 %v1688
        %v2134 = vunpack.c.h.b16 %v1688
        %v2135 = vunpack.c.l.b16 %v1689
        %v2136 = vunpack.c.h.b16 %v1689
        %v2137 = vunpack.c.l.b16 %v1690
        %v2138 = vunpack.c.h.b16 %v1690
        %v2139 = vunpack.c.l.b16 %v1691
        %v2140 = vunpack.c.h.b16 %v1691
        %v2141 = vunpack.c.l.b16 %v1692
        %v2142 = vunpack.c.h.b16 %v1692
        %v2143 = vunpack.c.l.b16 %v1693
        %v2144 = vunpack.c.h.b16 %v1693
        %v2145 = vunpack.c.l.b16 %v1694
        %v2146 = vunpack.c.h.b16 %v1694
        %v2147 = vunpack.c.l.b16 %v1695
        %v2148 = vunpack.c.h.b16 %v1695
        %v2149 = vunpack.c.l.b16 %v1696
        %v2150 = vunpack.c.h.b16 %v1696
        %v2151 = vunpack.c.l.b16 %v1697
        %v2152 = vunpack.c.h.b16 %v1697
        %v2153 = vunpack.c.l.b16 %v1698
        %v2154 = vunpack.c.h.b16 %v1698
        %v2155 = vunpack.c.l.b16 %v1699
        %v2156 = vunpack.c.h.b16 %v1699
        %v2157 = vunpack.c.l.b16 %v1700
        %v2158 = vunpack.c.h.b16 %v1700
        %v2159 = vunpack.c.l.b16 %v1701
        %v2160 = vunpack.c.h.b16 %v1701
        %v2161 = vunpack.c.l.b16 %v1702
        %v2162 = vunpack.c.h.b16 %v1702
        %v2163 = vunpack.c.l.b16 %v1703
        %v2164 = vunpack.c.h.b16 %v1703
        %v2165 = vunpack.c.l.b16 %v1704
        %v2166 = vunpack.c.h.b16 %v1704
        %v2167 = vunpack.c.l.b16 %v1705
        %v2168 = vunpack.c.h.b16 %v1705
        %v2169 = vunpack.c.l.b16 %v1706
        %v2170 = vunpack.c.h.b16 %v1706
        %v2171 = vunpack.c.l.b16 %v1707
        %v2172 = vunpack.c.h.b16 %v1707
        %v2173 = vunpack.c.l.b16 %v1708
        %v2174 = vunpack.c.h.b16 %v1708
        %v2175 = vunpack.c.l.b16 %v1709
        %v2176 = vunpack.c.h.b16 %v1709
        %v2177 = vunpack.c.l.b16 %v1710
        %v2178 = vunpack.c.h.b16 %v1710
        %v2179 = vpack.c.b16 %v1939, %v1923
        %v2180 = vpack.c.b16 %v1940, %v1924
        %v2181 = vpack.c.b16 %v1941, %v1925
        %v2182 = vpack.c.b16 %v1942, %v1926
        %v2183 = vpack.c.b16 %v1943, %v1927
        %v2184 = vpack.c.b16 %v1944, %v1928
        %v2185 = vpack.c.b16 %v1945, %v1929
        %v2186 = vpack.c.b16 %v1946, %v1930
        %v2187 = vpack.c.b16 %v1947, %v1931
        %v2188 = vpack.c.b16 %v1948, %v1932
        %v2189 = vpack.c.b16 %v1949, %v1933
        %v2190 = vpack.c.b16 %v1950, %v1934
        %v2191 = vpack.c.b16 %v1951, %v1935
        %v2192 = vpack.c.b16 %v1952, %v1936
        %v2193 = vpack.c.b16 %v1953, %v1937
        %v2194 = vpack.c.b16 %v1954, %v1938
        %v2195 = vpack.c.b16 %v1971, %v1955
        %v2196 = vpack.c.b16 %v1972, %v1956
        %v2197 = vpack.c.b16 %v1973, %v1957
        %v2198 = vpack.c.b16 %v1974, %v1958
        %v2199 = vpack.c.b16 %v1975, %v1959
        %v2200 = vpack.c.b16 %v1976, %v1960
        %v2201 = vpack.c.b16 %v1977, %v1961
        %v2202 = vpack.c.b16 %v1978, %v1962
        %v2203 = vpack.c.b16 %v1979, %v1963
        %v2204 = vpack.c.b16 %v1980, %v1964
        %v2205 = vpack.c.b16 %v1981, %v1965
        %v2206 = vpack.c.b16 %v1982, %v1966
        %v2207 = vpack.c.b16 %v1983, %v1967
        %v2208 = vpack.c.b16 %v1984, %v1968
        %v2209 = vpack.c.b16 %v1985, %v1969
        %v2210 = vpack.c.b16 %v1986, %v1970
        %v2211 = vpack.c.b16 %v2003, %v1987
        %v2212 = vpack.c.b16 %v2004, %v1988
        %v2213 = vpack.c.b16 %v2005, %v1989
        %v2214 = vpack.c.b16 %v2006, %v1990
        %v2215 = vpack.c.b16 %v2007, %v1991
        %v2216 = vpack.c.b16 %v2008, %v1992
        %v2217 = vpack.c.b16 %v2009, %v1993
        %v2218 = vpack.c.b16 %v2010, %v1994
        %v2219 = vpack.c.b16 %v2011, %v1995
        %v2220 = vpack.c.b16 %v2012, %v1996
        %v2221 = vpack.c.b16 %v2013, %v1997
        %v2222 = vpack.c.b16 %v2014, %v1998
        %v2223 = vpack.c.b16 %v2015, %v1999
        %v2224 = vpack.c.b16 %v2016, %v2000
        %v2225 = vpack.c.b16 %v2017, %v2001
        %v2226 = vpack.c.b16 %v2018, %v2002
        %v2227 = vpack.c.b16 %v2035, %v2019
        %v2228 = vpack.c.b16 %v2036, %v2020
        %v2229 = vpack.c.b16 %v2037, %v2021
        %v2230 = vpack.c.b16 %v2038, %v2022
        %v2231 = vpack.c.b16 %v2039, %v2023
        %v2232 = vpack.c.b16 %v2040, %v2024
        %v2233 = vpack.c.b16 %v2041, %v2025
        %v2234 = vpack.c.b16 %v2042, %v2026
        %v2235 = vpack.c.b16 %v2043, %v2027
        %v2236 = vpack.c.b16 %v2044, %v2028
        %v2237 = vpack.c.b16 %v2045, %v2029
        %v2238 = vpack.c.b16 %v2046, %v2030
        %v2239 = vpack.c.b16 %v2047, %v2031
        %v2240 = vpack.c.b16 %v2048, %v2032
        %v2241 = vpack.c.b16 %v2049, %v2033
        %v2242 = vpack.c.b16 %v2050, %v2034
        %v2243 = vpack.c.b16 %v2067, %v2051
        %v2244 = vpack.c.b16 %v2068, %v2052
        %v2245 = vpack.c.b16 %v2069, %v2053
        %v2246 = vpack.c.b16 %v2070, %v2054
        %v2247 = vpack.c.b16 %v2071, %v2055
        %v2248 = vpack.c.b16 %v2072, %v2056
        %v2249 = vpack.c.b16 %v2073, %v2057
        %v2250 = vpack.c.b16 %v2074, %v2058
        %v2251 = vpack.c.b16 %v2075, %v2059
        %v2252 = vpack.c.b16 %v2076, %v2060
        %v2253 = vpack.c.b16 %v2077, %v2061
        %v2254 = vpack.c.b16 %v2078, %v2062
        %v2255 = vpack.c.b16 %v2079, %v2063
        %v2256 = vpack.c.b16 %v2080, %v2064
        %v2257 = vpack.c.b16 %v2081, %v2065
        %v2258 = vpack.c.b16 %v2082, %v2066
        %v2259 = vpack.c.b16 %v2099, %v2083
        %v2260 = vpack.c.b16 %v2100, %v2084
        %v2261 = vpack.c.b16 %v2101, %v2085
        %v2262 = vpack.c.b16 %v2102, %v2086
        %v2263 = vpack.c.b16 %v2103, %v2087
        %v2264 = vpack.c.b16 %v2104, %v2088
        %v2265 = vpack.c.b16 %v2105, %v2089
        %v2266 = vpack.c.b16 %v2106, %v2090
        %v2267 = vpack.c.b16 %v2107, %v2091
        %v2268 = vpack.c.b16 %v2108, %v2092
        %v2269 = vpack.c.b16 %v2109, %v2093
        %v2270 = vpack.c.b16 %v2110, %v2094
        %v2271 = vpack.c.b16 %v2111, %v2095
        %v2272 = vpack.c.b16 %v2112, %v2096
        %v2273 = vpack.c.b16 %v2113, %v2097
        %v2274 = vpack.c.b16 %v2114, %v2098
        %v2275 = vpack.c.b16 %v2131, %v2115
        %v2276 = vpack.c.b16 %v2132, %v2116
        %v2277 = vpack.c.b16 %v2133, %v2117
        %v2278 = vpack.c.b16 %v2134, %v2118
        %v2279 = vpack.c.b16 %v2135, %v2119
        %v2280 = vpack.c.b16 %v2136, %v2120
        %v2281 = vpack.c.b16 %v2137, %v2121
        %v2282 = vpack.c.b16 %v2138, %v2122
        %v2283 = vpack.c.b16 %v2139, %v2123
        %v2284 = vpack.c.b16 %v2140, %v2124
        %v2285 = vpack.c.b16 %v2141, %v2125
        %v2286 = vpack.c.b16 %v2142, %v2126
        %v2287 = vpack.c.b16 %v2143, %v2127
        %v2288 = vpack.c.b16 %v2144, %v2128
        %v2289 = vpack.c.b16 %v2145, %v2129
        %v2290 = vpack.c.b16 %v2146, %v2130
        %v2291 = vpack.c.b16 %v2163, %v2147
        %v2292 = vpack.c.b16 %v2164, %v2148
        %v2293 = vpack.c.b16 %v2165, %v2149
        %v2294 = vpack.c.b16 %v2166, %v2150
        %v2295 = vpack.c.b16 %v2167, %v2151
        %v2296 = vpack.c.b16 %v2168, %v2152
        %v2297 = vpack.c.b16 %v2169, %v2153
        %v2298 = vpack.c.b16 %v2170, %v2154
        %v2299 = vpack.c.b16 %v2171, %v2155
        %v2300 = vpack.c.b16 %v2172, %v2156
        %v2301 = vpack.c.b16 %v2173, %v2157
        %v2302 = vpack.c.b16 %v2174, %v2158
        %v2303 = vpack.c.b16 %v2175, %v2159
        %v2304 = vpack.c.b16 %v2176, %v2160
        %v2305 = vpack.c.b16 %v2177, %v2161
        %v2306 = vpack.c.b16 %v2178, %v2162
        %2435 = vmatprep.subr.bf16.mxu0 %v2180
        %2436 = vmatpush1.bf16.msra.mxu0 %v2179
        %2437 = vmatprep.subr.bf16.mxu0 %v2196
        %2438 = vmatpush1.bf16.msra.mxu0 %v2195
        %2439 = vmatprep.subr.bf16.mxu0 %v2212
        %2440 = vmatpush1.bf16.msra.mxu0 %v2211
        %2441 = vmatprep.subr.bf16.mxu0 %v2228
        %2442 = vmatpush1.bf16.msra.mxu0 %v2227
        %2443 = vmatprep.subr.bf16.mxu0 %v2244
        %2444 = vmatpush1.bf16.msra.mxu0 %v2243
        %2445 = vmatprep.subr.bf16.mxu0 %v2260
        %2446 = vmatpush1.bf16.msra.mxu0 %v2259
        %2447 = vmatprep.subr.bf16.mxu0 %v2276
        %2448 = vmatpush1.bf16.msra.mxu0 %v2275
        %2449 = vmatprep.subr.bf16.mxu0 %v2292
        %2450 = vmatpush1.bf16.msra.mxu0 %v2291
        %2451 = vmatprep.subr.bf16.mxu0 0
        %2452 = vmatpush1.bf16.msra.mxu0 0
        %2453 = vmatprep.subr.bf16.mxu0 0
        %2454 = vmatpush1.bf16.msra.mxu0 0
        %2455 = vmatprep.subr.bf16.mxu0 0
        %2456 = vmatpush1.bf16.msra.mxu0 0
        %2457 = vmatprep.subr.bf16.mxu0 0
        %2458 = vmatpush1.bf16.msra.mxu0 0
        %2459 = vmatprep.subr.bf16.mxu0 0
        %2460 = vmatpush1.bf16.msra.mxu0 0
        %2461 = vmatprep.subr.bf16.mxu0 0
        %2462 = vmatpush1.bf16.msra.mxu0 0
        %2463 = vmatprep.subr.bf16.mxu0 0
        %2464 = vmatpush1.bf16.msra.mxu0 0
        %2465 = vmatprep.subr.bf16.mxu0 0
        %2466 = vmatpush1.bf16.msra.mxu0 0
        %2467 = vmatprep.mubr.bf16.mxu0 0
        %2468 = vmatmul.mubr.bf16.gmra.mrb[0].mxu0 %v1582
        %v2469 = vpop.f32.mrb[0].mxu0
        %v2470 = vadd.f32 %v1718, %v2469
        %v2471 = vpop.f32.mrb[0].mxu0
        %v2472 = vadd.f32 %v1722, %v2471
        %v2473 = vpop.f32.mrb[0].mxu0
        %v2474 = vpop.f32.mrb[0].mxu0
        %2475 = vdwg.mxu0
        %2476 = vmatprep.subr.bf16.mxu0 %v2182
        %2477 = vmatpush1.bf16.msra.mxu0 %v2181
        %2478 = vmatprep.subr.bf16.mxu0 %v2198
        %2479 = vmatpush1.bf16.msra.mxu0 %v2197
        %2480 = vmatprep.subr.bf16.mxu0 %v2214
        %2481 = vmatpush1.bf16.msra.mxu0 %v2213
        %2482 = vmatprep.subr.bf16.mxu0 %v2230
        %2483 = vmatpush1.bf16.msra.mxu0 %v2229
        %2484 = vmatprep.subr.bf16.mxu0 %v2246
        %2485 = vmatpush1.bf16.msra.mxu0 %v2245
        %2486 = vmatprep.subr.bf16.mxu0 %v2262
        %2487 = vmatpush1.bf16.msra.mxu0 %v2261
        %2488 = vmatprep.subr.bf16.mxu0 %v2278
        %2489 = vmatpush1.bf16.msra.mxu0 %v2277
        %2490 = vmatprep.subr.bf16.mxu0 %v2294
        %2491 = vmatpush1.bf16.msra.mxu0 %v2293
        %2492 = vmatprep.subr.bf16.mxu0 0
        %2493 = vmatpush1.bf16.msra.mxu0 0
        %2494 = vmatprep.subr.bf16.mxu0 0
        %2495 = vmatpush1.bf16.msra.mxu0 0
        %2496 = vmatprep.subr.bf16.mxu0 0
        %2497 = vmatpush1.bf16.msra.mxu0 0
        %2498 = vmatprep.subr.bf16.mxu0 0
        %2499 = vmatpush1.bf16.msra.mxu0 0
        %2500 = vmatprep.subr.bf16.mxu0 0
        %2501 = vmatpush1.bf16.msra.mxu0 0
        %2502 = vmatprep.subr.bf16.mxu0 0
        %2503 = vmatpush1.bf16.msra.mxu0 0
        %2504 = vmatprep.subr.bf16.mxu0 0
        %2505 = vmatpush1.bf16.msra.mxu0 0
        %2506 = vmatprep.subr.bf16.mxu0 0
        %2507 = vmatpush1.bf16.msra.mxu0 0
        %2508 = vmatprep.mubr.bf16.mxu0 0
        %2509 = vmatmul.mubr.bf16.gmra.mrb[0].mxu0 %v1582
        %v2510 = vpop.f32.mrb[0].mxu0
        %v2511 = vadd.f32 %v1726, %v2510
        %v2512 = vpop.f32.mrb[0].mxu0
        %v2513 = vadd.f32 %v1730, %v2512
        %v2514 = vpop.f32.mrb[0].mxu0
        %v2515 = vpop.f32.mrb[0].mxu0
        %2516 = vdwg.mxu0
        %2517 = vmatprep.subr.bf16.mxu0 %v2184
        %2518 = vmatpush1.bf16.msra.mxu0 %v2183
        %2519 = vmatprep.subr.bf16.mxu0 %v2200
        %2520 = vmatpush1.bf16.msra.mxu0 %v2199
        %2521 = vmatprep.subr.bf16.mxu0 %v2216
        %2522 = vmatpush1.bf16.msra.mxu0 %v2215
        %2523 = vmatprep.subr.bf16.mxu0 %v2232
        %2524 = vmatpush1.bf16.msra.mxu0 %v2231
        %2525 = vmatprep.subr.bf16.mxu0 %v2248
        %2526 = vmatpush1.bf16.msra.mxu0 %v2247
        %2527 = vmatprep.subr.bf16.mxu0 %v2264
        %2528 = vmatpush1.bf16.msra.mxu0 %v2263
        %2529 = vmatprep.subr.bf16.mxu0 %v2280
        %2530 = vmatpush1.bf16.msra.mxu0 %v2279
        %2531 = vmatprep.subr.bf16.mxu0 %v2296
        %2532 = vmatpush1.bf16.msra.mxu0 %v2295
        %2533 = vmatprep.subr.bf16.mxu0 0
        %2534 = vmatpush1.bf16.msra.mxu0 0
        %2535 = vmatprep.subr.bf16.mxu0 0
        %2536 = vmatpush1.bf16.msra.mxu0 0
        %2537 = vmatprep.subr.bf16.mxu0 0
        %2538 = vmatpush1.bf16.msra.mxu0 0
        %2539 = vmatprep.subr.bf16.mxu0 0
        %2540 = vmatpush1.bf16.msra.mxu0 0
        %2541 = vmatprep.subr.bf16.mxu0 0
        %2542 = vmatpush1.bf16.msra.mxu0 0
        %2543 = vmatprep.subr.bf16.mxu0 0
        %2544 = vmatpush1.bf16.msra.mxu0 0
        %2545 = vmatprep.subr.bf16.mxu0 0
        %2546 = vmatpush1.bf16.msra.mxu0 0
        %2547 = vmatprep.subr.bf16.mxu0 0
        %2548 = vmatpush1.bf16.msra.mxu0 0
        %2549 = vmatprep.mubr.bf16.mxu0 0
        %2550 = vmatmul.mubr.bf16.gmra.mrb[0].mxu0 %v1582
        %v2551 = vpop.f32.mrb[0].mxu0
        %v2552 = vadd.f32 %v1734, %v2551
        %v2553 = vpop.f32.mrb[0].mxu0
        %v2554 = vadd.f32 %v1738, %v2553
        %v2555 = vpop.f32.mrb[0].mxu0
        %v2556 = vpop.f32.mrb[0].mxu0
        %2557 = vdwg.mxu0
        %2558 = vmatprep.subr.bf16.mxu0 %v2186
        %2559 = vmatpush1.bf16.msra.mxu0 %v2185
        %2560 = vmatprep.subr.bf16.mxu0 %v2202
        %2561 = vmatpush1.bf16.msra.mxu0 %v2201
        %2562 = vmatprep.subr.bf16.mxu0 %v2218
        %2563 = vmatpush1.bf16.msra.mxu0 %v2217
        %2564 = vmatprep.subr.bf16.mxu0 %v2234
        %2565 = vmatpush1.bf16.msra.mxu0 %v2233
        %2566 = vmatprep.subr.bf16.mxu0 %v2250
        %2567 = vmatpush1.bf16.msra.mxu0 %v2249
        %2568 = vmatprep.subr.bf16.mxu0 %v2266
        %2569 = vmatpush1.bf16.msra.mxu0 %v2265
        %2570 = vmatprep.subr.bf16.mxu0 %v2282
        %2571 = vmatpush1.bf16.msra.mxu0 %v2281
        %2572 = vmatprep.subr.bf16.mxu0 %v2298
        %2573 = vmatpush1.bf16.msra.mxu0 %v2297
        %2574 = vmatprep.subr.bf16.mxu0 0
        %2575 = vmatpush1.bf16.msra.mxu0 0
        %2576 = vmatprep.subr.bf16.mxu0 0
        %2577 = vmatpush1.bf16.msra.mxu0 0
        %2578 = vmatprep.subr.bf16.mxu0 0
        %2579 = vmatpush1.bf16.msra.mxu0 0
        %2580 = vmatprep.subr.bf16.mxu0 0
        %2581 = vmatpush1.bf16.msra.mxu0 0
        %2582 = vmatprep.subr.bf16.mxu0 0
        %2583 = vmatpush1.bf16.msra.mxu0 0
        %2584 = vmatprep.subr.bf16.mxu0 0
        %2585 = vmatpush1.bf16.msra.mxu0 0
        %2586 = vmatprep.subr.bf16.mxu0 0
        %2587 = vmatpush1.bf16.msra.mxu0 0
        %2588 = vmatprep.subr.bf16.mxu0 0
        %2589 = vmatpush1.bf16.msra.mxu0 0
        %2590 = vmatprep.mubr.bf16.mxu0 0
        %2591 = vmatmul.mubr.bf16.gmra.mrb[0].mxu0 %v1582
        %v2592 = vpop.f32.mrb[0].mxu0
        %v2593 = vadd.f32 %v1742, %v2592
        %v2594 = vpop.f32.mrb[0].mxu0
        %v2595 = vadd.f32 %v1746, %v2594
        %v2596 = vpop.f32.mrb[0].mxu0
        %v2597 = vpop.f32.mrb[0].mxu0
        %2598 = vdwg.mxu0
        %2599 = vmatprep.subr.bf16.mxu0 %v2188
        %2600 = vmatpush1.bf16.msra.mxu0 %v2187
        %2601 = vmatprep.subr.bf16.mxu0 %v2204
        %2602 = vmatpush1.bf16.msra.mxu0 %v2203
        %2603 = vmatprep.subr.bf16.mxu0 %v2220
        %2604 = vmatpush1.bf16.msra.mxu0 %v2219
        %2605 = vmatprep.subr.bf16.mxu0 %v2236
        %2606 = vmatpush1.bf16.msra.mxu0 %v2235
        %2607 = vmatprep.subr.bf16.mxu0 %v2252
        %2608 = vmatpush1.bf16.msra.mxu0 %v2251
        %2609 = vmatprep.subr.bf16.mxu0 %v2268
        %2610 = vmatpush1.bf16.msra.mxu0 %v2267
        %2611 = vmatprep.subr.bf16.mxu0 %v2284
        %2612 = vmatpush1.bf16.msra.mxu0 %v2283
        %2613 = vmatprep.subr.bf16.mxu0 %v2300
        %2614 = vmatpush1.bf16.msra.mxu0 %v2299
        %2615 = vmatprep.subr.bf16.mxu0 0
        %2616 = vmatpush1.bf16.msra.mxu0 0
        %2617 = vmatprep.subr.bf16.mxu0 0
        %2618 = vmatpush1.bf16.msra.mxu0 0
        %2619 = vmatprep.subr.bf16.mxu0 0
        %2620 = vmatpush1.bf16.msra.mxu0 0
        %2621 = vmatprep.subr.bf16.mxu0 0
        %2622 = vmatpush1.bf16.msra.mxu0 0
        %2623 = vmatprep.subr.bf16.mxu0 0
        %2624 = vmatpush1.bf16.msra.mxu0 0
        %2625 = vmatprep.subr.bf16.mxu0 0
        %2626 = vmatpush1.bf16.msra.mxu0 0
        %2627 = vmatprep.subr.bf16.mxu0 0
        %2628 = vmatpush1.bf16.msra.mxu0 0
        %2629 = vmatprep.subr.bf16.mxu0 0
        %2630 = vmatpush1.bf16.msra.mxu0 0
        %2631 = vmatprep.mubr.bf16.mxu0 0
        %2632 = vmatmul.mubr.bf16.gmra.mrb[0].mxu0 %v1582
        %v2633 = vpop.f32.mrb[0].mxu0
        %v2634 = vadd.f32 %v1750, %v2633
        %v2635 = vpop.f32.mrb[0].mxu0
        %v2636 = vadd.f32 %v1754, %v2635
        %v2637 = vpop.f32.mrb[0].mxu0
        %v2638 = vpop.f32.mrb[0].mxu0
        %2639 = vdwg.mxu0
        %2640 = vmatprep.subr.bf16.mxu0 %v2190
        %2641 = vmatpush1.bf16.msra.mxu0 %v2189
        %2642 = vmatprep.subr.bf16.mxu0 %v2206
        %2643 = vmatpush1.bf16.msra.mxu0 %v2205
        %2644 = vmatprep.subr.bf16.mxu0 %v2222
        %2645 = vmatpush1.bf16.msra.mxu0 %v2221
        %2646 = vmatprep.subr.bf16.mxu0 %v2238
        %2647 = vmatpush1.bf16.msra.mxu0 %v2237
        %2648 = vmatprep.subr.bf16.mxu0 %v2254
        %2649 = vmatpush1.bf16.msra.mxu0 %v2253
        %2650 = vmatprep.subr.bf16.mxu0 %v2270
        %2651 = vmatpush1.bf16.msra.mxu0 %v2269
        %2652 = vmatprep.subr.bf16.mxu0 %v2286
        %2653 = vmatpush1.bf16.msra.mxu0 %v2285
        %2654 = vmatprep.subr.bf16.mxu0 %v2302
        %2655 = vmatpush1.bf16.msra.mxu0 %v2301
        %2656 = vmatprep.subr.bf16.mxu0 0
        %2657 = vmatpush1.bf16.msra.mxu0 0
        %2658 = vmatprep.subr.bf16.mxu0 0
        %2659 = vmatpush1.bf16.msra.mxu0 0
        %2660 = vmatprep.subr.bf16.mxu0 0
        %2661 = vmatpush1.bf16.msra.mxu0 0
        %2662 = vmatprep.subr.bf16.mxu0 0
        %2663 = vmatpush1.bf16.msra.mxu0 0
        %2664 = vmatprep.subr.bf16.mxu0 0
        %2665 = vmatpush1.bf16.msra.mxu0 0
        %2666 = vmatprep.subr.bf16.mxu0 0
        %2667 = vmatpush1.bf16.msra.mxu0 0
        %2668 = vmatprep.subr.bf16.mxu0 0
        %2669 = vmatpush1.bf16.msra.mxu0 0
        %2670 = vmatprep.subr.bf16.mxu0 0
        %2671 = vmatpush1.bf16.msra.mxu0 0
        %2672 = vmatprep.mubr.bf16.mxu0 0
        %2673 = vmatmul.mubr.bf16.gmra.mrb[0].mxu0 %v1582
        %v2674 = vpop.f32.mrb[0].mxu0
        %v2675 = vadd.f32 %v1758, %v2674
        %v2676 = vpop.f32.mrb[0].mxu0
        %v2677 = vadd.f32 %v1762, %v2676
        %v2678 = vpop.f32.mrb[0].mxu0
        %v2679 = vpop.f32.mrb[0].mxu0
        %2680 = vdwg.mxu0
        %2681 = vmatprep.subr.bf16.mxu0 %v2192
        %2682 = vmatpush1.bf16.msra.mxu0 %v2191
        %2683 = vmatprep.subr.bf16.mxu0 %v2208
        %2684 = vmatpush1.bf16.msra.mxu0 %v2207
        %2685 = vmatprep.subr.bf16.mxu0 %v2224
        %2686 = vmatpush1.bf16.msra.mxu0 %v2223
        %2687 = vmatprep.subr.bf16.mxu0 %v2240
        %2688 = vmatpush1.bf16.msra.mxu0 %v2239
        %2689 = vmatprep.subr.bf16.mxu0 %v2256
        %2690 = vmatpush1.bf16.msra.mxu0 %v2255
        %2691 = vmatprep.subr.bf16.mxu0 %v2272
        %2692 = vmatpush1.bf16.msra.mxu0 %v2271
        %2693 = vmatprep.subr.bf16.mxu0 %v2288
        %2694 = vmatpush1.bf16.msra.mxu0 %v2287
        %2695 = vmatprep.subr.bf16.mxu0 %v2304
        %2696 = vmatpush1.bf16.msra.mxu0 %v2303
        %2697 = vmatprep.subr.bf16.mxu0 0
        %2698 = vmatpush1.bf16.msra.mxu0 0
        %2699 = vmatprep.subr.bf16.mxu0 0
        %2700 = vmatpush1.bf16.msra.mxu0 0
        %2701 = vmatprep.subr.bf16.mxu0 0
        %2702 = vmatpush1.bf16.msra.mxu0 0
        %2703 = vmatprep.subr.bf16.mxu0 0
        %2704 = vmatpush1.bf16.msra.mxu0 0
        %2705 = vmatprep.subr.bf16.mxu0 0
        %2706 = vmatpush1.bf16.msra.mxu0 0
        %2707 = vmatprep.subr.bf16.mxu0 0
        %2708 = vmatpush1.bf16.msra.mxu0 0
        %2709 = vmatprep.subr.bf16.mxu0 0
        %2710 = vmatpush1.bf16.msra.mxu0 0
        %2711 = vmatprep.subr.bf16.mxu0 0
        %2712 = vmatpush1.bf16.msra.mxu0 0
        %2713 = vmatprep.mubr.bf16.mxu0 0
        %2714 = vmatmul.mubr.bf16.gmra.mrb[0].mxu0 %v1582
        %v2715 = vpop.f32.mrb[0].mxu0
        %v2716 = vadd.f32 %v1766, %v2715
        %v2717 = vpop.f32.mrb[0].mxu0
        %v2718 = vadd.f32 %v1770, %v2717
        %v2719 = vpop.f32.mrb[0].mxu0
        %v2720 = vpop.f32.mrb[0].mxu0
        %2721 = vdwg.mxu0
        %2722 = vmatprep.subr.bf16.mxu0 %v2194
        %2723 = vmatpush1.bf16.msra.mxu0 %v2193
        %2724 = vmatprep.subr.bf16.mxu0 %v2210
        %2725 = vmatpush1.bf16.msra.mxu0 %v2209
        %2726 = vmatprep.subr.bf16.mxu0 %v2226
        %2727 = vmatpush1.bf16.msra.mxu0 %v2225
        %2728 = vmatprep.subr.bf16.mxu0 %v2242
        %2729 = vmatpush1.bf16.msra.mxu0 %v2241
        %2730 = vmatprep.subr.bf16.mxu0 %v2258
        %2731 = vmatpush1.bf16.msra.mxu0 %v2257
        %2732 = vmatprep.subr.bf16.mxu0 %v2274
        %2733 = vmatpush1.bf16.msra.mxu0 %v2273
        %2734 = vmatprep.subr.bf16.mxu0 %v2290
        %2735 = vmatpush1.bf16.msra.mxu0 %v2289
        %2736 = vmatprep.subr.bf16.mxu0 %v2306
        %2737 = vmatpush1.bf16.msra.mxu0 %v2305
        %2738 = vmatprep.subr.bf16.mxu0 0
        %2739 = vmatpush1.bf16.msra.mxu0 0
        %2740 = vmatprep.subr.bf16.mxu0 0
        %2741 = vmatpush1.bf16.msra.mxu0 0
        %2742 = vmatprep.subr.bf16.mxu0 0
        %2743 = vmatpush1.bf16.msra.mxu0 0
        %2744 = vmatprep.subr.bf16.mxu0 0
        %2745 = vmatpush1.bf16.msra.mxu0 0
        %2746 = vmatprep.subr.bf16.mxu0 0
        %2747 = vmatpush1.bf16.msra.mxu0 0
        %2748 = vmatprep.subr.bf16.mxu0 0
        %2749 = vmatpush1.bf16.msra.mxu0 0
        %2750 = vmatprep.subr.bf16.mxu0 0
        %2751 = vmatpush1.bf16.msra.mxu0 0
        %2752 = vmatprep.subr.bf16.mxu0 0
        %2753 = vmatpush1.bf16.msra.mxu0 0
        %2754 = vmatprep.mubr.bf16.mxu0 0
        %2755 = vmatmul.mubr.bf16.gmra.mrb[0].mxu0 %v1582
        %v2756 = vpop.f32.mrb[0].mxu0
        %v2757 = vadd.f32 %v1774, %v2756
        %v2758 = vpop.f32.mrb[0].mxu0
        %v2759 = vadd.f32 %v1778, %v2758
        %v2760 = vpop.f32.mrb[0].mxu0
        %v2761 = vpop.f32.mrb[0].mxu0
        %2762 = vdwg.mxu0
        %2763 = vst [vmem:[%s629] sm:$0xff] %v2470
        %2764 = vst [vmem:[%s629 + $0x8] sm:$0xff] %v2472
        %2765 = vst [vmem:[%s629 + $0x10] sm:$0xff] %v2511
        %2766 = vst [vmem:[%s629 + $0x18] sm:$0xff] %v2513
        %2767 = vst [vmem:[%s629 + $0x20] sm:$0xff] %v2552
        %2768 = vst [vmem:[%s629 + $0x28] sm:$0xff] %v2554
        %2769 = vst [vmem:[%s629 + $0x30] sm:$0xff] %v2593
        %2770 = vst [vmem:[%s629 + $0x38] sm:$0xff] %v2595
        %2771 = vst [vmem:[%s629 + $0x40] sm:$0xff] %v2634
        %2772 = vst [vmem:[%s629 + $0x48] sm:$0xff] %v2636
        %2773 = vst [vmem:[%s629 + $0x50] sm:$0xff] %v2675
        %2774 = vst [vmem:[%s629 + $0x58] sm:$0xff] %v2677
        %2775 = vst [vmem:[%s629 + $0x60] sm:$0xff] %v2716
        %2776 = vst [vmem:[%s629 + $0x68] sm:$0xff] %v2718
        %2777 = vst [vmem:[%s629 + $0x70] sm:$0xff] %v2757
        %2778 = vst [vmem:[%s629 + $0x78] sm:$0xff] %v2759
        %v2779 = vld [vmem:[#allocation4] sm:$0xff]
        %v2780 = vmax.f32 %v2470, %v2552
        %v2781 = vmax.f32 %v2472, %v2554
        %v2782 = vmax.f32 %v2511, %v2593
        %v2783 = vmax.f32 %v2513, %v2595
        %v2784 = vmax.f32 %v2780, %v2634
        %v2785 = vmax.f32 %v2781, %v2636
        %v2786 = vmax.f32 %v2782, %v2675
        %v2787 = vmax.f32 %v2783, %v2677
        %v2788 = vmax.f32 %v2784, %v2716
        %v2789 = vmax.f32 %v2785, %v2718
        %v2790 = vmax.f32 %v2786, %v2757
        %v2791 = vmax.f32 %v2787, %v2759
        %v2792 = vmax.f32 %v2788, %v2789
        %v2793 = vmax.f32 %v2790, %v2791
        %v2794 = vmax.f32 %v2792, %v2793
        %2795 = vmax.xlane.f32.xlu0 %v2794
        %v2796 = vpop.xlane.xlu0 %2795
        %v2797 = vmax.f32 %v2779, %v2796
        %v2798 = vld [vmem:[#allocation5] sm:$0xff]
        %v2799 = vsub.f32 %v2779, %v2797
        %v2800 = vmul.f32 %v2799, 1.442695
        %v2801 = vpow.pop %v2800
        %v2802 = vmul.f32 %v2798, %v2801
        %2804 = vset.pattern.permute.xlu0 0
        %2805 = vperm.xlu0 %2804, %v2797
        %v2806 = vpop.permute.xlu0 %2805
        %v2808 = vsub.f32 %v2470, %v2806
        %v2809 = vsub.f32 %v2472, %v2806
        %v2810 = vsub.f32 %v2511, %v2806
        %v2811 = vsub.f32 %v2513, %v2806
        %v2812 = vsub.f32 %v2552, %v2806
        %v2813 = vsub.f32 %v2554, %v2806
        %v2814 = vsub.f32 %v2593, %v2806
        %v2815 = vsub.f32 %v2595, %v2806
        %v2816 = vsub.f32 %v2634, %v2806
        %v2817 = vsub.f32 %v2636, %v2806
        %v2818 = vsub.f32 %v2675, %v2806
        %v2819 = vsub.f32 %v2677, %v2806
        %v2820 = vsub.f32 %v2716, %v2806
        %v2821 = vsub.f32 %v2718, %v2806
        %v2822 = vsub.f32 %v2757, %v2806
        %v2823 = vsub.f32 %v2759, %v2806
        %v2824 = vmul.f32 %v2808, 1.442695
        %v2825 = vpow.pop %v2824
        %v2826 = vmul.f32 %v2809, 1.442695
        %v2827 = vpow.pop %v2826
        %v2828 = vmul.f32 %v2810, 1.442695
        %v2829 = vpow.pop %v2828
        %v2830 = vmul.f32 %v2811, 1.442695
        %v2831 = vpow.pop %v2830
        %v2832 = vmul.f32 %v2812, 1.442695
        %v2833 = vpow.pop %v2832
        %v2834 = vmul.f32 %v2813, 1.442695
        %v2835 = vpow.pop %v2834
        %v2836 = vmul.f32 %v2814, 1.442695
        %v2837 = vpow.pop %v2836
        %v2838 = vmul.f32 %v2815, 1.442695
        %v2839 = vpow.pop %v2838
        %v2840 = vmul.f32 %v2816, 1.442695
        %v2841 = vpow.pop %v2840
        %v2842 = vmul.f32 %v2817, 1.442695
        %v2843 = vpow.pop %v2842
        %v2844 = vmul.f32 %v2818, 1.442695
        %v2845 = vpow.pop %v2844
        %v2846 = vmul.f32 %v2819, 1.442695
        %v2847 = vpow.pop %v2846
        %v2848 = vmul.f32 %v2820, 1.442695
        %v2849 = vpow.pop %v2848
        %v2850 = vmul.f32 %v2821, 1.442695
        %v2851 = vpow.pop %v2850
        %v2852 = vmul.f32 %v2822, 1.442695
        %v2853 = vpow.pop %v2852
        %v2854 = vmul.f32 %v2823, 1.442695
        %v2855 = vpow.pop %v2854
        %v2856 = vadd.f32 %v2825, %v2827
        %v2857 = vadd.f32 %v2856, %v2829
        %v2858 = vadd.f32 %v2857, %v2831
        %v2859 = vadd.f32 %v2858, %v2833
        %v2860 = vadd.f32 %v2859, %v2835
        %v2861 = vadd.f32 %v2860, %v2837
        %v2862 = vadd.f32 %v2861, %v2839
        %v2863 = vadd.f32 %v2862, %v2841
        %v2864 = vadd.f32 %v2863, %v2843
        %v2865 = vadd.f32 %v2864, %v2845
        %v2866 = vadd.f32 %v2865, %v2847
        %v2867 = vadd.f32 %v2866, %v2849
        %v2868 = vadd.f32 %v2867, %v2851
        %v2869 = vadd.f32 %v2868, %v2853
        %v2870 = vadd.f32 %v2869, %v2855
        %2871 = vadd.xlane.f32.xlu0 %v2870
        %v2872 = vpop.xlane.xlu0 %2871
        %v2873 = vadd.f32 %v2802, %v2872
        %vm2874 = vcmask 7168
        %2875 = vst.msk [vmem:[#allocation5] sm:$0xff] %vm2874, %v2873
        %2876 = vst.msk [vmem:[#allocation4] sm:$0xff] %vm2874, %v2797
        %p2877 = scmp.eq.s32.totalorder %s29, 1
        // Predicated region
        $region316: #{decode_step.1} parent=66 // pred_check
          %p2878 = pneg %p2877
        $region317: #{decode_step.1} parent=66 // pred_check_branch
          %2880 = sbr.rel (%p2878) target = $region319
        $region318: #{decode_step.1} parent=66 // pred_region
          %v2881 = vld [vmem:[#allocation4] sm:$0xff]
          %v2882 = vld [vmem:[#allocation5] sm:$0xff]
          %v2883 = vlog2.pop %v2882
          %v2884 = vmul.f32 %v2883, 0.6931472
          %v2885 = vadd.f32 %v2881, %v2884
          %2886 = vst.msk [vmem:[%s10] sm:$0xff] %vm2874, %v2885
        $region319: #{decode_step.1} parent=66 // pred_fallthru
          _
        %s2887 = smul.u32 16, %s29
        %p2888 = scmp.lt.s32.totalorder %s2887, 31
        %s2889 = scalar_select %p2888, %s2887, 31
        %s2890 = smul.addr %s2889, 8
        %s2891 = scalar_lea.vmem %s9, %s2890
        // Predicated region
        $region320: #{decode_step.1} parent=66 // pred_check
          %p2892 = pneg %p204
        $region321: #{decode_step.1} parent=66 // pred_check_branch
          %2894 = sbr.rel (%p2892) target = $region323
        $region322: #{decode_step.1} parent=66 // pred_region
          %s2895 = smul.u32 16, %s29
        $region323: #{decode_step.1} parent=66 // pred_fallthru
          _
        // Predicated region
        $region324: #{decode_step.1} parent=66 // pred_check
          %p2896 = pneg %p225
        $region325: #{decode_step.1} parent=66 // pred_check_branch
          %2898 = sbr.rel (%p2896) target = $region327
        $region326: #{decode_step.1} parent=66 // pred_region
          _
        $region327: #{decode_step.1} parent=66 // pred_fallthru
          _
        // Predicated region
        $region328: #{decode_step.1} parent=66 // pred_check
          %p2899 = pneg %p246
        $region329: #{decode_step.1} parent=66 // pred_check_branch
          %2901 = sbr.rel (%p2899) target = $region331
        $region330: #{decode_step.1} parent=66 // pred_region
          _
        $region331: #{decode_step.1} parent=66 // pred_fallthru
          _
        // Predicated region
        $region332: #{decode_step.1} parent=66 // pred_check
          %p2902 = pneg %p225
        $region333: #{decode_step.1} parent=66 // pred_check_branch
          %2904 = sbr.rel (%p2902) target = $region335
        $region334: #{decode_step.1} parent=66 // pred_region
          _
        $region335: #{decode_step.1} parent=66 // pred_fallthru
          _
        // Predicated region
        $region336: #{decode_step.1} parent=66 // pred_check
          %p2905 = pneg %p246
        $region337: #{decode_step.1} parent=66 // pred_check_branch
          %2907 = sbr.rel (%p2905) target = $region339
        $region338: #{decode_step.1} parent=66 // pred_region
          _
        $region339: #{decode_step.1} parent=66 // pred_fallthru
          _
      $region67: #{decode_step.1} parent=5 // pred_fallthru
        _
      %p2908 = scmp.le.s32.totalorder 2, %s24
      // Predicated region
      $region340: #{decode_step.1} parent=5 // pred_check
        %p2909 = pneg %p2908
      $region341: #{decode_step.1} parent=5 // pred_check_branch
        %2911 = sbr.rel (%p2909) target = $region343
      $region342: #{decode_step.1} parent=5 // pred_region
        %s2912 = ssub.s32 %s24, 2
        // Predicated region
        $region344: #{decode_step.1} parent=342 // pred_check
          %p2913 = pneg %p210
        $region345: #{decode_step.1} parent=342 // pred_check_branch
          %2915 = sbr.rel (%p2913) target = $region347
        $region346: #{decode_step.1} parent=342 // pred_region
          %s2916 = smul.u32 16, %s30
          %p2917 = scmp.lt.s32.totalorder %s2916, 31
          %s2918 = scalar_select %p2917, %s2916, 31
          %s2919 = smul.addr %s2918, 8
          %s2920 = scalar_lea.vmem %s9, %s2919
        $region347: #{decode_step.1} parent=342 // pred_fallthru
          _
      $region343: #{decode_step.1} parent=5 // pred_fallthru
        _
    $region6: #{decode_step.1} parent=1 // loop_footer
      %s28 = sadd.s32 1, %s24
    $region7: #{decode_step.1} parent=1 // loop_footer_branch
      %23 = sbr.rel target = $region3
    $region8: #{decode_step.1} parent=1 // loop_exit
      _
  %2921 = vsyncmov [#allocation6]
  %s2922 = vpop.sfrf %2921
  %p2923 = scmp.eq.s32.totalorder %s2922, 0
  %p2924 = pneg %p2923
  %2926 = shalt.err (%p2924)
  %s2927 = scalar_lea.sflag [#allocation6], 1
  %2928 = vsyncmov %s2927
  %s2929 = vpop.sfrf %2928
  %p2930 = scmp.eq.s32.totalorder %s2929, 0
  %p2931 = pneg %p2930
  %2933 = shalt.err (%p2931)
  %s2934 = scalar_lea.sflag [#allocation6], 2
  %2935 = vsyncmov %s2934
  %s2936 = vpop.sfrf %2935
  %p2937 = scmp.eq.s32.totalorder %s2936, 0
  %p2938 = pneg %p2937
  %2940 = shalt.err (%p2938)
  %s2941 = scalar_lea.sflag [#allocation6], 3
  %2942 = vsyncmov %s2941
  %s2943 = vpop.sfrf %2942
  %p2944 = scmp.eq.s32.totalorder %s2943, 0
  %p2945 = pneg %p2944
  %2947 = shalt.err (%p2945)
  %s2948 = scalar_lea.sflag [#allocation6], 4
  %2949 = vsyncmov %s2948
  %s2950 = vpop.sfrf %2949
  %p2951 = scmp.eq.s32.totalorder %s2950, 0
  %p2952 = pneg %p2951
  %2954 = shalt.err (%p2952)
  %s2955 = scalar_lea.sflag [#allocation6], 5
  %2956 = vsyncmov %s2955
  %s2957 = vpop.sfrf %2956
  %p2958 = scmp.eq.s32.totalorder %s2957, 0
  %p2959 = pneg %p2958
  %2961 = shalt.err (%p2959)
  %s2962 = scalar_lea.sflag [#allocation6], 6
  %2963 = vsyncmov %s2962
  %s2964 = vpop.sfrf %2963
  %p2965 = scmp.eq.s32.totalorder %s2964, 0
  %p2966 = pneg %p2965
  %2968 = shalt.err (%p2966)
  %s2969 = scalar_lea.sflag [#allocation6], 7
  %2970 = vsyncmov %s2969
  %s2971 = vpop.sfrf %2970
  %p2972 = scmp.eq.s32.totalorder %s2971, 0
  %p2973 = pneg %p2972
  %2975 = shalt.err (%p2973)

</llo_original>
